<compile_context>
chip_gen: v7x
topology: tpu7x:2x2x1
jax: 0.10.0
libtpu: 0.0.40
codegen_flags: <defaults>
</compile_context>

<pallas_src>
import functools

import jax
import jax.numpy as jnp
import numpy as np
from jax import lax
from jax.experimental import pallas as pl
from jax.experimental.pallas import tpu as pltpu

EPS = 1e-6
GROUPS = 16


# ----------------------------- in-kernel helpers -----------------------------

def _swish(x):
    return x * jax.nn.sigmoid(x)


def _gn_per_channel(x, gamma, beta, eps):
    """GroupNorm with 1 channel per group.  x: (C, HW) f32; gamma/beta: (C, 1)."""
    mean = jnp.mean(x, axis=1, keepdims=True)
    xc = x - mean
    var = jnp.mean(xc * xc, axis=1, keepdims=True)
    return xc * lax.rsqrt(var + eps) * gamma + beta


def _gn_grouped(x, gamma, beta, eps, mem, cpg):
    """GroupNorm with cpg channels per group.  x: (C, HW); mem: (C, C) membership.

    Per-channel sums of [x, x*x] are lane reductions (XLU); the group pooling of
    BOTH statistics is one tiny (C,C)@(C,2) MXU matmul (fused stats matmul).
    """
    n = x.shape[1] * cpg
    s = jnp.concatenate([jnp.sum(x, axis=1, keepdims=True),
                         jnp.sum(x * x, axis=1, keepdims=True)], axis=1)   # (C, 2)
    g = jnp.dot(mem, s, preferred_element_type=jnp.float32) * (1.0 / n)
    mean = g[:, 0:1]
    var = g[:, 1:2] - mean * mean
    return (x - mean) * lax.rsqrt(var + eps) * gamma + beta


def _conv3x3(h, w_bf, bias, tap, hh, ww):
    """Conv2d(k=3, s=1, p=1) on a (Cin, HW) activation.

    im2col = 9 static lane rolls (XLU) x precomputed border masks; the taps are cast
    to bf16, stacked along sublanes, and consumed by ONE (Cout, 9*Cin) @ (9*Cin, HW)
    MXU matmul with f32 accumulation.  w_bf: (Cout, 9*Cin) bf16; bias: (Cout, 1) f32;
    tap: (9, HW) f32 border-validity masks (row t = offset (oy, ox)).
    """
    hw = hh * ww
    taps = []
    t = 0
    for oy in (-1, 0, 1):
        for ox in (-1, 0, 1):
            s = oy * ww + ox
            v = h if s == 0 else pltpu.roll(h, (-s) % hw, axis=1)
            if not (oy == 0 and ox == 0):          # centre tap needs no mask
                v = v * tap[t:t + 1, :]
            taps.append(v.astype(jnp.bfloat16))
            t += 1
    patch = jnp.concatenate(taps, axis=0)          # (9*Cin, HW) bf16
    return jnp.dot(w_bf, patch, preferred_element_type=jnp.float32) + bias


# ----------------------------- fused kernel -----------------------------

def _res_attn_down_kernel(x_ref, mem_ref, tap_ref, sel_ref,
                          g1_ref, b1_ref, w1_ref, c1_ref,
                          g2_ref, b2_ref, w2_ref, c2_ref,
                          ws_ref, bs_ref,
                          ga_ref, ba_ref,
                          wq_ref, bq_ref, wk_ref, bk_ref,
                          wv_ref, bv_ref, wp_ref, bp_ref,
                          o_ref,
                          *, hh, ww, cin, cout, groups, eps, q_blk):
    hw = hh * ww
    cpg = cout // groups
    x = x_ref[0].astype(jnp.float32)               # (Cin, HW)
    mem = mem_ref[...]
    tap = tap_ref[...]

    # ---------------- ResBlock2d ----------------
    h = _swish(_gn_per_channel(x, g1_ref[...], b1_ref[...], eps))   # 1 ch / group
    h = _conv3x3(h, w1_ref[...], c1_ref[...], tap, hh, ww)
    h = _swish(_gn_grouped(h, g2_ref[...], b2_ref[...], eps, mem, cpg))
    # dropout(p=False) is an exact no-op.
    h = _conv3x3(h, w2_ref[...], c2_ref[...], tap, hh, ww)
    shortcut = jnp.dot(ws_ref[...], x.astype(jnp.bfloat16),
                       preferred_element_type=jnp.float32) + bs_ref[...]
    r = h + shortcut                                                # (Cout, HW) f32

    # ---------------- AttnBlock2d ----------------
    xn = _gn_grouped(r, ga_ref[...], ba_ref[...], eps, mem, cpg)
    xn_bf = xn.astype(jnp.bfloat16)
    # C**-0.5 is folded into wq/bq on the host.
    q = jnp.dot(wq_ref[...], xn_bf, preferred_element_type=jnp.float32) + bq_ref[...]
    k = jnp.dot(wk_ref[...], xn_bf, preferred_element_type=jnp.float32) + bk_ref[...]
    v = jnp.dot(wv_ref[...], xn_bf, preferred_element_type=jnp.float32) + bv_ref[...]
    q_bf = q.astype(jnp.bfloat16)
    k_bf = k.astype(jnp.bfloat16)
    v_bf = v.astype(jnp.bfloat16)

    # Blocked softmax + p@v (q-row blocks of 128) keeps the (HW, HW) temporaries
    # at <=128 KB live; exp / reciprocal stay f32 (v5e-friendly).
    att_blocks = []
    for i0 in range(0, hw, q_blk):
        qb = q_bf[:, i0:i0 + q_blk]                                 # (Cout, q_blk)
        alpha = lax.dot_general(qb, k_bf, (((0,), (0,)), ((), ())),
                                preferred_element_type=jnp.float32)  # (q_blk, HW)
        m = jnp.max(alpha, axis=1, keepdims=True)
        e = jnp.exp(alpha - m)
        p = (e * pl.reciprocal(jnp.sum(e, axis=1, keepdims=True),
                               approx=True)).astype(jnp.bfloat16)
        att_blocks.append(
            lax.dot_general(v_bf, p, (((1,), (1,)), ((), ())),
                            preferred_element_type=jnp.float32))     # (Cout, q_blk)
    att = att_blocks[0] if len(att_blocks) == 1 else jnp.concatenate(att_blocks, axis=1)
    att = jnp.dot(wp_ref[...], att.astype(jnp.bfloat16),
                  preferred_element_type=jnp.float32) + bp_ref[...]
    a = r + att                                                     # (Cout, HW) f32

    # ---------------- MaxPool2d(2, 2) ----------------
    # 2x2 window max via two lane rolls + max, then ONE precomputed selection matmul
    # compacts the even-(h,w) lanes to HW/4.  Kept f32 (tiny, preserves final accuracy).
    h1 = jnp.maximum(a, pltpu.roll(a, hw - 1, axis=1))      # pair over w
    h2 = jnp.maximum(h1, pltpu.roll(h1, hw - ww, axis=1))   # pair over h
    o_ref[0] = jnp.dot(h2, sel_ref[...],
                       preferred_element_type=jnp.float32).astype(o_ref.dtype)


# ----------------------------- wrapper -----------------------------

def res_attn_down_block2d_pallas(x_nchw, params):
    blocks = params['blocks']
    assert len(blocks) == 1 and len(blocks[0]['res']) == 1 and len(blocks[0]['attn']) == 1
    rp = blocks[0]['res'][0]
    ap = blocks[0]['attn'][0]

    B, cin, H, W = x_nchw.shape
    cout = rp['w1'].shape[0]
    assert cin != cout and 'wsc' in rp              # 1x1 shortcut path
    assert cin == GROUPS and cout % GROUPS == 0
    assert H % 2 == 0 and W % 2 == 0
    hw = H * W
    hwp = (H // 2) * (W // 2)
    q_blk = 128 if (hw % 128 == 0 and hw > 128) else hw

    # NCHW -> (B, C, H*W): pure reshape (no transpose -> no extra HBM round trip).
    x_flat = x_nchw.reshape(B, cin, hw).astype(jnp.float32)

    # ---- host-side weight layout glue (tiny, done once per call) ----
    def conv_mat(w):    # (O, I, 3, 3) -> (O, 9*I) bf16, tap-major / in-channel-minor
        o, i = w.shape[0], w.shape[1]
        return jnp.transpose(w, (0, 2, 3, 1)).reshape(o, 9 * i).astype(jnp.bfloat16)

    def mat1x1(w, scale=1.0):   # (O, I, 1, 1) -> (O, I) bf16
        return (w.reshape(w.shape[0], w.shape[1]) * scale).astype(jnp.bfloat16)

    def col(b, scale=1.0):      # (C,) -> (C, 1) f32 column
        return (b * scale).reshape(-1, 1).astype(jnp.float32)

    # GroupNorm group-membership matrix for the cout-channel norms (constant input).
    cpg = cout // GROUPS
    ch = np.arange(cout)
    mem = jnp.asarray((ch[:, None] // cpg == ch[None, :] // cpg).astype(np.float32))

    # Conv border-validity masks for the 9 taps (constant input, hoisted from kernel).
    hy = np.arange(H).reshape(H, 1)
    wx = np.arange(W).reshape(1, W)
    masks = []
    for oy in (-1, 0, 1):
        for ox in (-1, 0, 1):
            valid = ((hy + oy >= 0) & (hy + oy < H) & (wx + ox >= 0) & (wx + ox < W))
            masks.append(valid.reshape(-1))
    tapmask = jnp.asarray(np.stack(masks, 0).astype(np.float32))      # (9, HW)

    # MaxPool compaction matrix: select lanes with even (h, w)  (HW, HW/4) constant.
    sel_np = np.zeros((hw, hwp), np.float32)
    for oh in range(H // 2):
        for ow in range(W // 2):
            sel_np[(2 * oh) * W + 2 * ow, oh * (W // 2) + ow] = 1.0
    pool_sel = jnp.asarray(sel_np)

    q_scale = float(cout) ** -0.5

    kern = functools.partial(_res_attn_down_kernel, hh=H, ww=W, cin=cin, cout=cout,
                             groups=GROUPS, eps=EPS, q_blk=q_blk)

    def fixed(shape):   # whole-array block, same block for every grid step
        nd = len(shape)
        return pl.BlockSpec(shape, lambda b, _nd=nd: (0,) * _nd)

    out = pl.pallas_call(
        kern,
        out_shape=jax.ShapeDtypeStruct((B, cout, hwp), jnp.float32),
        grid=(B,),
        in_specs=[
            pl.BlockSpec((1, cin, hw), lambda b: (b, 0, 0)),   # x
            fixed((cout, cout)),                               # GN membership
            fixed((9, hw)),                                    # conv tap masks
            fixed((hw, hwp)),                                  # pool selection
            fixed((cin, 1)), fixed((cin, 1)),                  # g1, b1
            fixed((cout, 9 * cin)), fixed((cout, 1)),          # w1, bc1
            fixed((cout, 1)), fixed((cout, 1)),                # g2, b2
            fixed((cout, 9 * cout)), fixed((cout, 1)),         # w2, bc2
            fixed((cout, cin)), fixed((cout, 1)),              # wsc, bsc
            fixed((cout, 1)), fixed((cout, 1)),                # ga, ba
            fixed((cout, cout)), fixed((cout, 1)),             # wq, bq
            fixed((cout, cout)), fixed((cout, 1)),             # wk, bk
            fixed((cout, cout)), fixed((cout, 1)),             # wv, bv
            fixed((cout, cout)), fixed((cout, 1)),             # wp, bp
        ],
        out_specs=pl.BlockSpec((1, cout, hwp), lambda b: (b, 0, 0)),
        compiler_params=pltpu.CompilerParams(
            dimension_semantics=("parallel",)),   # v7x: shard B over both TensorCores
    )(
        x_flat, mem, tapmask, pool_sel,
        col(rp['g1']), col(rp['b1']), conv_mat(rp['w1']), col(rp['bc1']),
        col(rp['g2']), col(rp['b2']), conv_mat(rp['w2']), col(rp['bc2']),
        mat1x1(rp['wsc']), col(rp['bsc']),
        col(ap['g']), col(ap['b']),
        mat1x1(ap['wq'], q_scale), col(ap['bq'], q_scale),
        mat1x1(ap['wk']), col(ap['bk']),
        mat1x1(ap['wv']), col(ap['bv']),
        mat1x1(ap['wp']), col(ap['bp']),
    )

    # (B, Cout, HW/4) -> NCHW, pure reshape.
    return out.reshape(B, cout, H // 2, W // 2)


# ----------------------------- parameters -----------------------------

def _normal(key, shape, scale):
    return scale * jax.random.normal(key, shape, dtype=jnp.float32)


def init_params(key, in_channels, out_channels, repeat, res_repeat, attn_repeat):
    blocks = []
    for r in range(repeat):
        block_in = in_channels if r == 0 else out_channels
        res_params, attn_params = [], []
        for i in range(res_repeat):
            ic = block_in if i == 0 else out_channels
            oc = out_channels
            key, *ks = jax.random.split(key, 11)
            p = {
                'g1': 1.0 + _normal(ks[0], (ic,), 0.1),
                'b1': _normal(ks[1], (ic,), 0.1),
                'w1': _normal(ks[2], (oc, ic, 3, 3), 1.0 / (3.0 * np.sqrt(ic))),
                'bc1': _normal(ks[3], (oc,), 0.05),
                'g2': 1.0 + _normal(ks[4], (oc,), 0.1),
                'b2': _normal(ks[5], (oc,), 0.1),
                'w2': _normal(ks[6], (oc, oc, 3, 3), 1.0 / (3.0 * np.sqrt(oc))),
                'bc2': _normal(ks[7], (oc,), 0.05),
            }
            if ic != oc:
                p['wsc'] = _normal(ks[8], (oc, ic, 1, 1), 1.0 / np.sqrt(ic))
                p['bsc'] = _normal(ks[9], (oc,), 0.05)
            res_params.append(p)
        for _ in range(attn_repeat):
            c = out_channels
            key, *ks = jax.random.split(key, 11)
            attn_params.append({
                'g': 1.0 + _normal(ks[0], (c,), 0.1),
                'b': _normal(ks[1], (c,), 0.1),
                'wq': _normal(ks[2], (c, c, 1, 1), 1.0 / np.sqrt(c)),
                'bq': _normal(ks[3], (c,), 0.05),
                'wk': _normal(ks[4], (c, c, 1, 1), 1.0 / np.sqrt(c)),
                'bk': _normal(ks[5], (c,), 0.05),
                'wv': _normal(ks[6], (c, c, 1, 1), 1.0 / np.sqrt(c)),
                'bv': _normal(ks[7], (c,), 0.05),
                'wp': _normal(ks[8], (c, c, 1, 1), 1.0 / np.sqrt(c)),
                'bp': _normal(ks[9], (c,), 0.05),
            })
        blocks.append({'res': res_params, 'attn': attn_params})
    return {'blocks': blocks}


# ----------------------------- pure-JAX reference -----------------------------

def _ref_group_norm(x, g, b, num_groups, eps):
    B, C, H, W = x.shape
    xr = x.reshape(B, num_groups, (C // num_groups) * H * W)
    m = jnp.mean(xr, axis=-1, keepdims=True)
    v = jnp.mean((xr - m) ** 2, axis=-1, keepdims=True)
    xn = ((xr - m) / jnp.sqrt(v + eps)).reshape(B, C, H, W)
    return xn * g[None, :, None, None] + b[None, :, None, None]


def _ref_conv(x, w, b, pad):
    y = jax.lax.conv_general_dilated(
        x, w, (1, 1), [(pad, pad), (pad, pad)],
        dimension_numbers=('NCHW', 'OIHW', 'NCHW'))
    return y + b[None, :, None, None]


def _ref_swish(x):
    return x * jax.nn.sigmoid(x)


def res_attn_down_block2d_ref(x, params):
    for block in params['blocks']:
        for rp in block['res']:
            cin, cout = x.shape[1], rp['w1'].shape[0]
            identity = x
            h = _ref_swish(_ref_group_norm(x, rp['g1'], rp['b1'], GROUPS, EPS))
            h = _ref_conv(h, rp['w1'], rp['bc1'], 1)
            h = _ref_swish(_ref_group_norm(h, rp['g2'], rp['b2'], GROUPS, EPS))
            h = _ref_conv(h, rp['w2'], rp['bc2'], 1)
            if cin != cout:
                identity = _ref_conv(identity, rp['wsc'], rp['bsc'], 0)
            x = h + identity
        for ap in block['attn']:
            B, C, H, W = x.shape
            identity = x
            h = _ref_group_norm(x, ap['g'], ap['b'], GROUPS, EPS)
            q = _ref_conv(h, ap['wq'], ap['bq'], 0).reshape(B, C, H * W)
            k = _ref_conv(h, ap['wk'], ap['bk'], 0).reshape(B, C, H * W)
            v = _ref_conv(h, ap['wv'], ap['bv'], 0).reshape(B, C, H * W)
            q = jnp.transpose(q, (0, 2, 1))
            alpha = jnp.einsum('bic,bcj->bij', q, k) * (C ** (-0.5))
            alpha = jax.nn.softmax(alpha, axis=-1)
            out = jnp.einsum('bcj,bij->bci', v, alpha).reshape(B, C, H, W)
            out = _ref_conv(out, ap['wp'], ap['bp'], 0)
            x = identity + out
    B, C, H, W = x.shape
    return x.reshape(B, C, H // 2, 2, W // 2, 2).max(axis=(3, 5))


# ----------------------------- main -----------------------------

if __name__ == "__main__":
    B, IN_C, OUT_C, H, W = 2, 16, 32, 16, 16
    REPEAT, RES_REPEAT, ATTN_REPEAT = 1, 1, 1

    key = jax.random.PRNGKey(0)
    kx, kp = jax.random.split(key)
    x = jax.random.normal(kx, (B, IN_C, H, W), dtype=jnp.float32)   # NCHW input
    params = init_params(kp, IN_C, OUT_C, REPEAT, RES_REPEAT, ATTN_REPEAT)

    out = jax.jit(res_attn_down_block2d_pallas)(x, params)
    out = jax.block_until_ready(out)

    ref = res_attn_down_block2d_ref(x, params)
    assert out.shape == (B, OUT_C, H // 2, W // 2), out.shape
    assert bool(jnp.all(jnp.isfinite(out)))
    max_err = float(jnp.max(jnp.abs(out - ref)))
    # bf16 MXU operands (f32 accumulation) per perf review; re-verified error budget:
    # typical max abs err ~1e-2..4e-2 at these shapes, so 1e-1 gives >2x headroom.
    assert max_err < 1e-1, f"max abs err {max_err}"
    print("KERNEL_OK")
</pallas_src>

<mosaic_0001>
module attributes {stable_mosaic.version = 11 : i64} {
  func.func @_res_attn_down_kernel(%arg0: i32, %arg1: memref<1x16x256xf32, #tpu.memory_space<vmem>>, %arg2: memref<32x32xf32, #tpu.memory_space<vmem>>, %arg3: memref<9x256xf32, #tpu.memory_space<vmem>>, %arg4: memref<256x64xf32, #tpu.memory_space<vmem>>, %arg5: memref<16x1xf32, #tpu.memory_space<vmem>>, %arg6: memref<16x1xf32, #tpu.memory_space<vmem>>, %arg7: memref<32x144xbf16, #tpu.memory_space<vmem>>, %arg8: memref<32x1xf32, #tpu.memory_space<vmem>>, %arg9: memref<32x1xf32, #tpu.memory_space<vmem>>, %arg10: memref<32x1xf32, #tpu.memory_space<vmem>>, %arg11: memref<32x288xbf16, #tpu.memory_space<vmem>>, %arg12: memref<32x1xf32, #tpu.memory_space<vmem>>, %arg13: memref<32x16xbf16, #tpu.memory_space<vmem>>, %arg14: memref<32x1xf32, #tpu.memory_space<vmem>>, %arg15: memref<32x1xf32, #tpu.memory_space<vmem>>, %arg16: memref<32x1xf32, #tpu.memory_space<vmem>>, %arg17: memref<32x32xbf16, #tpu.memory_space<vmem>>, %arg18: memref<32x1xf32, #tpu.memory_space<vmem>>, %arg19: memref<32x32xbf16, #tpu.memory_space<vmem>>, %arg20: memref<32x1xf32, #tpu.memory_space<vmem>>, %arg21: memref<32x32xbf16, #tpu.memory_space<vmem>>, %arg22: memref<32x1xf32, #tpu.memory_space<vmem>>, %arg23: memref<32x32xbf16, #tpu.memory_space<vmem>>, %arg24: memref<32x1xf32, #tpu.memory_space<vmem>>, %arg25: memref<1x32x64xf32, #tpu.memory_space<vmem>>) attributes {dimension_semantics = [#tpu.dimension_semantics<parallel>], iteration_bounds = array<i64: 2>, scalar_prefetch = 0 : i64, scratch_operands = 0 : i64, tpu.core_type = #tpu.core_type<tc>, window_params = [{transform_indices = @transform_0, window_bounds = array<i64: 1, 16, 256>}, {pipeline_mode = #tpu.pipeline_mode<synchronous>, transform_indices = @transform_1, window_bounds = array<i64: 32, 32>}, {pipeline_mode = #tpu.pipeline_mode<synchronous>, transform_indices = @transform_2, window_bounds = array<i64: 9, 256>}, {pipeline_mode = #tpu.pipeline_mode<synchronous>, transform_indices = @transform_3, window_bounds = array<i64: 256, 64>}, {pipeline_mode = #tpu.pipeline_mode<synchronous>, transform_indices = @transform_4, window_bounds = array<i64: 16, 1>}, {pipeline_mode = #tpu.pipeline_mode<synchronous>, transform_indices = @transform_5, window_bounds = array<i64: 16, 1>}, {pipeline_mode = #tpu.pipeline_mode<synchronous>, transform_indices = @transform_6, window_bounds = array<i64: 32, 144>}, {pipeline_mode = #tpu.pipeline_mode<synchronous>, transform_indices = @transform_7, window_bounds = array<i64: 32, 1>}, {pipeline_mode = #tpu.pipeline_mode<synchronous>, transform_indices = @transform_8, window_bounds = array<i64: 32, 1>}, {pipeline_mode = #tpu.pipeline_mode<synchronous>, transform_indices = @transform_9, window_bounds = array<i64: 32, 1>}, {pipeline_mode = #tpu.pipeline_mode<synchronous>, transform_indices = @transform_10, window_bounds = array<i64: 32, 288>}, {pipeline_mode = #tpu.pipeline_mode<synchronous>, transform_indices = @transform_11, window_bounds = array<i64: 32, 1>}, {pipeline_mode = #tpu.pipeline_mode<synchronous>, transform_indices = @transform_12, window_bounds = array<i64: 32, 16>}, {pipeline_mode = #tpu.pipeline_mode<synchronous>, transform_indices = @transform_13, window_bounds = array<i64: 32, 1>}, {pipeline_mode = #tpu.pipeline_mode<synchronous>, transform_indices = @transform_14, window_bounds = array<i64: 32, 1>}, {pipeline_mode = #tpu.pipeline_mode<synchronous>, transform_indices = @transform_15, window_bounds = array<i64: 32, 1>}, {pipeline_mode = #tpu.pipeline_mode<synchronous>, transform_indices = @transform_16, window_bounds = array<i64: 32, 32>}, {pipeline_mode = #tpu.pipeline_mode<synchronous>, transform_indices = @transform_17, window_bounds = array<i64: 32, 1>}, {pipeline_mode = #tpu.pipeline_mode<synchronous>, transform_indices = @transform_18, window_bounds = array<i64: 32, 32>}, {pipeline_mode = #tpu.pipeline_mode<synchronous>, transform_indices = @transform_19, window_bounds = array<i64: 32, 1>}, {pipeline_mode = #tpu.pipeline_mode<synchronous>, transform_indices = @transform_20, window_bounds = array<i64: 32, 32>}, {pipeline_mode = #tpu.pipeline_mode<synchronous>, transform_indices = @transform_21, window_bounds = array<i64: 32, 1>}, {pipeline_mode = #tpu.pipeline_mode<synchronous>, transform_indices = @transform_22, window_bounds = array<i64: 32, 32>}, {pipeline_mode = #tpu.pipeline_mode<synchronous>, transform_indices = @transform_23, window_bounds = array<i64: 32, 1>}, {transform_indices = @transform_24, window_bounds = array<i64: 1, 32, 64>}]} {
    %c0 = arith.constant 0 : index
    %c0_0 = arith.constant 0 : index
    %c0_1 = arith.constant 0 : index
    %0 = vector.load %arg1[%c0, %c0_0, %c0_1] : memref<1x16x256xf32, #tpu.memory_space<vmem>>, vector<1x16x256xf32>
    %1 = vector.shape_cast %0 : vector<1x16x256xf32> to vector<16x256xf32>
    %c0_2 = arith.constant 0 : index
    %c0_3 = arith.constant 0 : index
    %2 = vector.load %arg2[%c0_2, %c0_3] : memref<32x32xf32, #tpu.memory_space<vmem>>, vector<32x32xf32>
    %c0_4 = arith.constant 0 : index
    %c0_5 = arith.constant 0 : index
    %3 = vector.load %arg3[%c0_4, %c0_5] : memref<9x256xf32, #tpu.memory_space<vmem>>, vector<9x256xf32>
    %c0_6 = arith.constant 0 : index
    %c0_7 = arith.constant 0 : index
    %4 = vector.load %arg5[%c0_6, %c0_7] : memref<16x1xf32, #tpu.memory_space<vmem>>, vector<16x1xf32>
    %c0_8 = arith.constant 0 : index
    %c0_9 = arith.constant 0 : index
    %5 = vector.load %arg6[%c0_8, %c0_9] : memref<16x1xf32, #tpu.memory_space<vmem>>, vector<16x1xf32>
    %cst = arith.constant dense<0.000000e+00> : vector<16xf32>
    %6 = vector.multi_reduction <add>, %1, %cst [1] : vector<16x256xf32> to vector<16xf32>
    %7 = vector.shape_cast %6 : vector<16xf32> to vector<16x1xf32>
    %cst_10 = arith.constant 2.560000e+02 : f32
    %8 = vector.broadcast %cst_10 : f32 to vector<16x1xf32>
    %9 = arith.divf %7, %8 : vector<16x1xf32>
    %10 = vector.broadcast %9 : vector<16x1xf32> to vector<16x256xf32>
    %11 = arith.subf %1, %10 : vector<16x256xf32>
    %12 = arith.mulf %11, %11 : vector<16x256xf32>
    %cst_11 = arith.constant dense<0.000000e+00> : vector<16xf32>
    %13 = vector.multi_reduction <add>, %12, %cst_11 [1] : vector<16x256xf32> to vector<16xf32>
    %14 = vector.shape_cast %13 : vector<16xf32> to vector<16x1xf32>
    %cst_12 = arith.constant 2.560000e+02 : f32
    %15 = vector.broadcast %cst_12 : f32 to vector<16x1xf32>
    %16 = arith.divf %14, %15 : vector<16x1xf32>
    %cst_13 = arith.constant 9.99999997E-7 : f32
    %17 = vector.broadcast %cst_13 : f32 to vector<16x1xf32>
    %18 = arith.addf %16, %17 : vector<16x1xf32>
    %19 = math.rsqrt %18 : vector<16x1xf32>
    %20 = vector.broadcast %19 : vector<16x1xf32> to vector<16x256xf32>
    %21 = arith.mulf %11, %20 : vector<16x256xf32>
    %22 = vector.broadcast %4 : vector<16x1xf32> to vector<16x256xf32>
    %23 = arith.mulf %21, %22 : vector<16x256xf32>
    %24 = vector.broadcast %5 : vector<16x1xf32> to vector<16x256xf32>
    %25 = arith.addf %23, %24 : vector<16x256xf32>
    %26 = arith.negf %25 : vector<16x256xf32>
    %27 = math.exp %26 : vector<16x256xf32>
    %cst_14 = arith.constant 1.000000e+00 : f32
    %28 = vector.broadcast %cst_14 : f32 to vector<16x256xf32>
    %29 = arith.addf %28, %27 : vector<16x256xf32>
    %30 = arith.divf %28, %29 : vector<16x256xf32>
    %31 = arith.mulf %25, %30 : vector<16x256xf32>
    %c0_15 = arith.constant 0 : index
    %c0_16 = arith.constant 0 : index
    %32 = vector.load %arg7[%c0_15, %c0_16] : memref<32x144xbf16, #tpu.memory_space<vmem>>, vector<32x144xbf16>
    %c0_17 = arith.constant 0 : index
    %c0_18 = arith.constant 0 : index
    %33 = vector.load %arg8[%c0_17, %c0_18] : memref<32x1xf32, #tpu.memory_space<vmem>>, vector<32x1xf32>
    %c17_i32 = arith.constant 17 : i32
    %34 = tpu.dynamic_rotate %31 by %c17_i32 dim 1 : vector<16x256xf32>, i32 -> vector<16x256xf32>
    %35 = vector.extract_strided_slice %3 {offsets = [0, 0], sizes = [1, 256], strides = [1, 1]} : vector<9x256xf32> to vector<1x256xf32>
    %36 = vector.broadcast %35 : vector<1x256xf32> to vector<16x256xf32>
    %37 = arith.mulf %34, %36 : vector<16x256xf32>
    %38 = arith.truncf %37 : vector<16x256xf32> to vector<16x256xbf16>
    %c16_i32 = arith.constant 16 : i32
    %39 = tpu.dynamic_rotate %31 by %c16_i32 dim 1 : vector<16x256xf32>, i32 -> vector<16x256xf32>
    %40 = vector.extract_strided_slice %3 {offsets = [1, 0], sizes = [1, 256], strides = [1, 1]} : vector<9x256xf32> to vector<1x256xf32>
    %41 = vector.broadcast %40 : vector<1x256xf32> to vector<16x256xf32>
    %42 = arith.mulf %39, %41 : vector<16x256xf32>
    %43 = arith.truncf %42 : vector<16x256xf32> to vector<16x256xbf16>
    %c15_i32 = arith.constant 15 : i32
    %44 = tpu.dynamic_rotate %31 by %c15_i32 dim 1 : vector<16x256xf32>, i32 -> vector<16x256xf32>
    %45 = vector.extract_strided_slice %3 {offsets = [2, 0], sizes = [1, 256], strides = [1, 1]} : vector<9x256xf32> to vector<1x256xf32>
    %46 = vector.broadcast %45 : vector<1x256xf32> to vector<16x256xf32>
    %47 = arith.mulf %44, %46 : vector<16x256xf32>
    %48 = arith.truncf %47 : vector<16x256xf32> to vector<16x256xbf16>
    %c1_i32 = arith.constant 1 : i32
    %49 = tpu.dynamic_rotate %31 by %c1_i32 dim 1 : vector<16x256xf32>, i32 -> vector<16x256xf32>
    %50 = vector.extract_strided_slice %3 {offsets = [3, 0], sizes = [1, 256], strides = [1, 1]} : vector<9x256xf32> to vector<1x256xf32>
    %51 = vector.broadcast %50 : vector<1x256xf32> to vector<16x256xf32>
    %52 = arith.mulf %49, %51 : vector<16x256xf32>
    %53 = arith.truncf %52 : vector<16x256xf32> to vector<16x256xbf16>
    %54 = arith.truncf %31 : vector<16x256xf32> to vector<16x256xbf16>
    %c255_i32 = arith.constant 255 : i32
    %55 = tpu.dynamic_rotate %31 by %c255_i32 dim 1 : vector<16x256xf32>, i32 -> vector<16x256xf32>
    %56 = vector.extract_strided_slice %3 {offsets = [5, 0], sizes = [1, 256], strides = [1, 1]} : vector<9x256xf32> to vector<1x256xf32>
    %57 = vector.broadcast %56 : vector<1x256xf32> to vector<16x256xf32>
    %58 = arith.mulf %55, %57 : vector<16x256xf32>
    %59 = arith.truncf %58 : vector<16x256xf32> to vector<16x256xbf16>
    %c241_i32 = arith.constant 241 : i32
    %60 = tpu.dynamic_rotate %31 by %c241_i32 dim 1 : vector<16x256xf32>, i32 -> vector<16x256xf32>
    %61 = vector.extract_strided_slice %3 {offsets = [6, 0], sizes = [1, 256], strides = [1, 1]} : vector<9x256xf32> to vector<1x256xf32>
    %62 = vector.broadcast %61 : vector<1x256xf32> to vector<16x256xf32>
    %63 = arith.mulf %60, %62 : vector<16x256xf32>
    %64 = arith.truncf %63 : vector<16x256xf32> to vector<16x256xbf16>
    %c240_i32 = arith.constant 240 : i32
    %65 = tpu.dynamic_rotate %31 by %c240_i32 dim 1 : vector<16x256xf32>, i32 -> vector<16x256xf32>
    %66 = vector.extract_strided_slice %3 {offsets = [7, 0], sizes = [1, 256], strides = [1, 1]} : vector<9x256xf32> to vector<1x256xf32>
    %67 = vector.broadcast %66 : vector<1x256xf32> to vector<16x256xf32>
    %68 = arith.mulf %65, %67 : vector<16x256xf32>
    %69 = arith.truncf %68 : vector<16x256xf32> to vector<16x256xbf16>
    %c239_i32 = arith.constant 239 : i32
    %70 = tpu.dynamic_rotate %31 by %c239_i32 dim 1 : vector<16x256xf32>, i32 -> vector<16x256xf32>
    %71 = vector.extract_strided_slice %3 {offsets = [8, 0], sizes = [1, 256], strides = [1, 1]} : vector<9x256xf32> to vector<1x256xf32>
    %72 = vector.broadcast %71 : vector<1x256xf32> to vector<16x256xf32>
    %73 = arith.mulf %70, %72 : vector<16x256xf32>
    %74 = arith.truncf %73 : vector<16x256xf32> to vector<16x256xbf16>
    %75 = tpu.concatenate %38, %43, %48, %53, %54, %59, %64, %69, %74 in 0 : vector<16x256xbf16>, vector<16x256xbf16>, vector<16x256xbf16>, vector<16x256xbf16>, vector<16x256xbf16>, vector<16x256xbf16>, vector<16x256xbf16>, vector<16x256xbf16>, vector<16x256xbf16> -> vector<144x256xbf16>
    %cst_19 = arith.constant dense<0.000000e+00> : vector<32x256xf32>
    %76 = tpu.matmul %32, %75, %cst_19 {dimension_numbers = #tpu.dot_dimension_numbers<[1], [0], [0], [1], [0, 0, 1, 1], [], []>} : vector<32x144xbf16>, vector<144x256xbf16>, vector<32x256xf32> -> vector<32x256xf32>
    %77 = vector.broadcast %33 : vector<32x1xf32> to vector<32x256xf32>
    %78 = arith.addf %76, %77 : vector<32x256xf32>
    %c0_20 = arith.constant 0 : index
    %c0_21 = arith.constant 0 : index
    %79 = vector.load %arg9[%c0_20, %c0_21] : memref<32x1xf32, #tpu.memory_space<vmem>>, vector<32x1xf32>
    %c0_22 = arith.constant 0 : index
    %c0_23 = arith.constant 0 : index
    %80 = vector.load %arg10[%c0_22, %c0_23] : memref<32x1xf32, #tpu.memory_space<vmem>>, vector<32x1xf32>
    %cst_24 = arith.constant dense<0.000000e+00> : vector<32xf32>
    %81 = vector.multi_reduction <add>, %78, %cst_24 [1] : vector<32x256xf32> to vector<32xf32>
    %82 = vector.shape_cast %81 : vector<32xf32> to vector<32x1xf32>
    %83 = arith.mulf %78, %78 : vector<32x256xf32>
    %cst_25 = arith.constant dense<0.000000e+00> : vector<32xf32>
    %84 = vector.multi_reduction <add>, %83, %cst_25 [1] : vector<32x256xf32> to vector<32xf32>
    %85 = vector.shape_cast %84 : vector<32xf32> to vector<32x1xf32>
    %86 = tpu.concatenate %82, %85 in 1 : vector<32x1xf32>, vector<32x1xf32> -> vector<32x2xf32>
    %cst_26 = arith.constant dense<0.000000e+00> : vector<32x2xf32>
    %87 = tpu.matmul %2, %86, %cst_26 {dimension_numbers = #tpu.dot_dimension_numbers<[1], [0], [0], [1], [0, 0, 1, 1], [], []>} : vector<32x32xf32>, vector<32x2xf32>, vector<32x2xf32> -> vector<32x2xf32>
    %cst_27 = arith.constant 0.001953125 : f32
    %88 = vector.broadcast %cst_27 : f32 to vector<32x2xf32>
    %89 = arith.mulf %87, %88 : vector<32x2xf32>
    %90 = vector.extract_strided_slice %89 {offsets = [0, 0], sizes = [32, 1], strides = [1, 1]} : vector<32x2xf32> to vector<32x1xf32>
    %91 = vector.extract_strided_slice %89 {offsets = [0, 1], sizes = [32, 1], strides = [1, 1]} : vector<32x2xf32> to vector<32x1xf32>
    %92 = arith.mulf %90, %90 : vector<32x1xf32>
    %93 = arith.subf %91, %92 : vector<32x1xf32>
    %94 = vector.broadcast %90 : vector<32x1xf32> to vector<32x256xf32>
    %95 = arith.subf %78, %94 : vector<32x256xf32>
    %cst_28 = arith.constant 9.99999997E-7 : f32
    %96 = vector.broadcast %cst_28 : f32 to vector<32x1xf32>
    %97 = arith.addf %93, %96 : vector<32x1xf32>
    %98 = math.rsqrt %97 : vector<32x1xf32>
    %99 = vector.broadcast %98 : vector<32x1xf32> to vector<32x256xf32>
    %100 = arith.mulf %95, %99 : vector<32x256xf32>
    %101 = vector.broadcast %79 : vector<32x1xf32> to vector<32x256xf32>
    %102 = arith.mulf %100, %101 : vector<32x256xf32>
    %103 = vector.broadcast %80 : vector<32x1xf32> to vector<32x256xf32>
    %104 = arith.addf %102, %103 : vector<32x256xf32>
    %105 = arith.negf %104 : vector<32x256xf32>
    %106 = math.exp %105 : vector<32x256xf32>
    %cst_29 = arith.constant 1.000000e+00 : f32
    %107 = vector.broadcast %cst_29 : f32 to vector<32x256xf32>
    %108 = arith.addf %107, %106 : vector<32x256xf32>
    %109 = arith.divf %107, %108 : vector<32x256xf32>
    %110 = arith.mulf %104, %109 : vector<32x256xf32>
    %c0_30 = arith.constant 0 : index
    %c0_31 = arith.constant 0 : index
    %111 = vector.load %arg11[%c0_30, %c0_31] : memref<32x288xbf16, #tpu.memory_space<vmem>>, vector<32x288xbf16>
    %c0_32 = arith.constant 0 : index
    %c0_33 = arith.constant 0 : index
    %112 = vector.load %arg12[%c0_32, %c0_33] : memref<32x1xf32, #tpu.memory_space<vmem>>, vector<32x1xf32>
    %c17_i32_34 = arith.constant 17 : i32
    %113 = tpu.dynamic_rotate %110 by %c17_i32_34 dim 1 : vector<32x256xf32>, i32 -> vector<32x256xf32>
    %114 = vector.extract_strided_slice %3 {offsets = [0, 0], sizes = [1, 256], strides = [1, 1]} : vector<9x256xf32> to vector<1x256xf32>
    %115 = vector.broadcast %114 : vector<1x256xf32> to vector<32x256xf32>
    %116 = arith.mulf %113, %115 : vector<32x256xf32>
    %117 = arith.truncf %116 : vector<32x256xf32> to vector<32x256xbf16>
    %c16_i32_35 = arith.constant 16 : i32
    %118 = tpu.dynamic_rotate %110 by %c16_i32_35 dim 1 : vector<32x256xf32>, i32 -> vector<32x256xf32>
    %119 = vector.extract_strided_slice %3 {offsets = [1, 0], sizes = [1, 256], strides = [1, 1]} : vector<9x256xf32> to vector<1x256xf32>
    %120 = vector.broadcast %119 : vector<1x256xf32> to vector<32x256xf32>
    %121 = arith.mulf %118, %120 : vector<32x256xf32>
    %122 = arith.truncf %121 : vector<32x256xf32> to vector<32x256xbf16>
    %c15_i32_36 = arith.constant 15 : i32
    %123 = tpu.dynamic_rotate %110 by %c15_i32_36 dim 1 : vector<32x256xf32>, i32 -> vector<32x256xf32>
    %124 = vector.extract_strided_slice %3 {offsets = [2, 0], sizes = [1, 256], strides = [1, 1]} : vector<9x256xf32> to vector<1x256xf32>
    %125 = vector.broadcast %124 : vector<1x256xf32> to vector<32x256xf32>
    %126 = arith.mulf %123, %125 : vector<32x256xf32>
    %127 = arith.truncf %126 : vector<32x256xf32> to vector<32x256xbf16>
    %c1_i32_37 = arith.constant 1 : i32
    %128 = tpu.dynamic_rotate %110 by %c1_i32_37 dim 1 : vector<32x256xf32>, i32 -> vector<32x256xf32>
    %129 = vector.extract_strided_slice %3 {offsets = [3, 0], sizes = [1, 256], strides = [1, 1]} : vector<9x256xf32> to vector<1x256xf32>
    %130 = vector.broadcast %129 : vector<1x256xf32> to vector<32x256xf32>
    %131 = arith.mulf %128, %130 : vector<32x256xf32>
    %132 = arith.truncf %131 : vector<32x256xf32> to vector<32x256xbf16>
    %133 = arith.truncf %110 : vector<32x256xf32> to vector<32x256xbf16>
    %c255_i32_38 = arith.constant 255 : i32
    %134 = tpu.dynamic_rotate %110 by %c255_i32_38 dim 1 : vector<32x256xf32>, i32 -> vector<32x256xf32>
    %135 = vector.extract_strided_slice %3 {offsets = [5, 0], sizes = [1, 256], strides = [1, 1]} : vector<9x256xf32> to vector<1x256xf32>
    %136 = vector.broadcast %135 : vector<1x256xf32> to vector<32x256xf32>
    %137 = arith.mulf %134, %136 : vector<32x256xf32>
    %138 = arith.truncf %137 : vector<32x256xf32> to vector<32x256xbf16>
    %c241_i32_39 = arith.constant 241 : i32
    %139 = tpu.dynamic_rotate %110 by %c241_i32_39 dim 1 : vector<32x256xf32>, i32 -> vector<32x256xf32>
    %140 = vector.extract_strided_slice %3 {offsets = [6, 0], sizes = [1, 256], strides = [1, 1]} : vector<9x256xf32> to vector<1x256xf32>
    %141 = vector.broadcast %140 : vector<1x256xf32> to vector<32x256xf32>
    %142 = arith.mulf %139, %141 : vector<32x256xf32>
    %143 = arith.truncf %142 : vector<32x256xf32> to vector<32x256xbf16>
    %c240_i32_40 = arith.constant 240 : i32
    %144 = tpu.dynamic_rotate %110 by %c240_i32_40 dim 1 : vector<32x256xf32>, i32 -> vector<32x256xf32>
    %145 = vector.extract_strided_slice %3 {offsets = [7, 0], sizes = [1, 256], strides = [1, 1]} : vector<9x256xf32> to vector<1x256xf32>
    %146 = vector.broadcast %145 : vector<1x256xf32> to vector<32x256xf32>
    %147 = arith.mulf %144, %146 : vector<32x256xf32>
    %148 = arith.truncf %147 : vector<32x256xf32> to vector<32x256xbf16>
    %c239_i32_41 = arith.constant 239 : i32
    %149 = tpu.dynamic_rotate %110 by %c239_i32_41 dim 1 : vector<32x256xf32>, i32 -> vector<32x256xf32>
    %150 = vector.extract_strided_slice %3 {offsets = [8, 0], sizes = [1, 256], strides = [1, 1]} : vector<9x256xf32> to vector<1x256xf32>
    %151 = vector.broadcast %150 : vector<1x256xf32> to vector<32x256xf32>
    %152 = arith.mulf %149, %151 : vector<32x256xf32>
    %153 = arith.truncf %152 : vector<32x256xf32> to vector<32x256xbf16>
    %154 = tpu.concatenate %117, %122, %127, %132, %133, %138, %143, %148, %153 in 0 : vector<32x256xbf16>, vector<32x256xbf16>, vector<32x256xbf16>, vector<32x256xbf16>, vector<32x256xbf16>, vector<32x256xbf16>, vector<32x256xbf16>, vector<32x256xbf16>, vector<32x256xbf16> -> vector<288x256xbf16>
    %cst_42 = arith.constant dense<0.000000e+00> : vector<32x256xf32>
    %155 = tpu.matmul %111, %154, %cst_42 {dimension_numbers = #tpu.dot_dimension_numbers<[1], [0], [0], [1], [0, 0, 1, 1], [], []>} : vector<32x288xbf16>, vector<288x256xbf16>, vector<32x256xf32> -> vector<32x256xf32>
    %156 = vector.broadcast %112 : vector<32x1xf32> to vector<32x256xf32>
    %157 = arith.addf %155, %156 : vector<32x256xf32>
    %c0_43 = arith.constant 0 : index
    %c0_44 = arith.constant 0 : index
    %158 = vector.load %arg13[%c0_43, %c0_44] : memref<32x16xbf16, #tpu.memory_space<vmem>>, vector<32x16xbf16>
    %159 = arith.truncf %1 : vector<16x256xf32> to vector<16x256xbf16>
    %cst_45 = arith.constant dense<0.000000e+00> : vector<32x256xf32>
    %160 = tpu.matmul %158, %159, %cst_45 {dimension_numbers = #tpu.dot_dimension_numbers<[1], [0], [0], [1], [0, 0, 1, 1], [], []>} : vector<32x16xbf16>, vector<16x256xbf16>, vector<32x256xf32> -> vector<32x256xf32>
    %c0_46 = arith.constant 0 : index
    %c0_47 = arith.constant 0 : index
    %161 = vector.load %arg14[%c0_46, %c0_47] : memref<32x1xf32, #tpu.memory_space<vmem>>, vector<32x1xf32>
    %162 = vector.broadcast %161 : vector<32x1xf32> to vector<32x256xf32>
    %163 = arith.addf %160, %162 : vector<32x256xf32>
    %164 = arith.addf %157, %163 : vector<32x256xf32>
    %c0_48 = arith.constant 0 : index
    %c0_49 = arith.constant 0 : index
    %165 = vector.load %arg15[%c0_48, %c0_49] : memref<32x1xf32, #tpu.memory_space<vmem>>, vector<32x1xf32>
    %c0_50 = arith.constant 0 : index
    %c0_51 = arith.constant 0 : index
    %166 = vector.load %arg16[%c0_50, %c0_51] : memref<32x1xf32, #tpu.memory_space<vmem>>, vector<32x1xf32>
    %cst_52 = arith.constant dense<0.000000e+00> : vector<32xf32>
    %167 = vector.multi_reduction <add>, %164, %cst_52 [1] : vector<32x256xf32> to vector<32xf32>
    %168 = vector.shape_cast %167 : vector<32xf32> to vector<32x1xf32>
    %169 = arith.mulf %164, %164 : vector<32x256xf32>
    %cst_53 = arith.constant dense<0.000000e+00> : vector<32xf32>
    %170 = vector.multi_reduction <add>, %169, %cst_53 [1] : vector<32x256xf32> to vector<32xf32>
    %171 = vector.shape_cast %170 : vector<32xf32> to vector<32x1xf32>
    %172 = tpu.concatenate %168, %171 in 1 : vector<32x1xf32>, vector<32x1xf32> -> vector<32x2xf32>
    %cst_54 = arith.constant dense<0.000000e+00> : vector<32x2xf32>
    %173 = tpu.matmul %2, %172, %cst_54 {dimension_numbers = #tpu.dot_dimension_numbers<[1], [0], [0], [1], [0, 0, 1, 1], [], []>} : vector<32x32xf32>, vector<32x2xf32>, vector<32x2xf32> -> vector<32x2xf32>
    %cst_55 = arith.constant 0.001953125 : f32
    %174 = vector.broadcast %cst_55 : f32 to vector<32x2xf32>
    %175 = arith.mulf %173, %174 : vector<32x2xf32>
    %176 = vector.extract_strided_slice %175 {offsets = [0, 0], sizes = [32, 1], strides = [1, 1]} : vector<32x2xf32> to vector<32x1xf32>
    %177 = vector.extract_strided_slice %175 {offsets = [0, 1], sizes = [32, 1], strides = [1, 1]} : vector<32x2xf32> to vector<32x1xf32>
    %178 = arith.mulf %176, %176 : vector<32x1xf32>
    %179 = arith.subf %177, %178 : vector<32x1xf32>
    %180 = vector.broadcast %176 : vector<32x1xf32> to vector<32x256xf32>
    %181 = arith.subf %164, %180 : vector<32x256xf32>
    %cst_56 = arith.constant 9.99999997E-7 : f32
    %182 = vector.broadcast %cst_56 : f32 to vector<32x1xf32>
    %183 = arith.addf %179, %182 : vector<32x1xf32>
    %184 = math.rsqrt %183 : vector<32x1xf32>
    %185 = vector.broadcast %184 : vector<32x1xf32> to vector<32x256xf32>
    %186 = arith.mulf %181, %185 : vector<32x256xf32>
    %187 = vector.broadcast %165 : vector<32x1xf32> to vector<32x256xf32>
    %188 = arith.mulf %186, %187 : vector<32x256xf32>
    %189 = vector.broadcast %166 : vector<32x1xf32> to vector<32x256xf32>
    %190 = arith.addf %188, %189 : vector<32x256xf32>
    %191 = arith.truncf %190 : vector<32x256xf32> to vector<32x256xbf16>
    %c0_57 = arith.constant 0 : index
    %c0_58 = arith.constant 0 : index
    %192 = vector.load %arg17[%c0_57, %c0_58] : memref<32x32xbf16, #tpu.memory_space<vmem>>, vector<32x32xbf16>
    %cst_59 = arith.constant dense<0.000000e+00> : vector<32x256xf32>
    %193 = tpu.matmul %192, %191, %cst_59 {dimension_numbers = #tpu.dot_dimension_numbers<[1], [0], [0], [1], [0, 0, 1, 1], [], []>} : vector<32x32xbf16>, vector<32x256xbf16>, vector<32x256xf32> -> vector<32x256xf32>
    %c0_60 = arith.constant 0 : index
    %c0_61 = arith.constant 0 : index
    %194 = vector.load %arg18[%c0_60, %c0_61] : memref<32x1xf32, #tpu.memory_space<vmem>>, vector<32x1xf32>
    %195 = vector.broadcast %194 : vector<32x1xf32> to vector<32x256xf32>
    %196 = arith.addf %193, %195 : vector<32x256xf32>
    %c0_62 = arith.constant 0 : index
    %c0_63 = arith.constant 0 : index
    %197 = vector.load %arg19[%c0_62, %c0_63] : memref<32x32xbf16, #tpu.memory_space<vmem>>, vector<32x32xbf16>
    %cst_64 = arith.constant dense<0.000000e+00> : vector<32x256xf32>
    %198 = tpu.matmul %197, %191, %cst_64 {dimension_numbers = #tpu.dot_dimension_numbers<[1], [0], [0], [1], [0, 0, 1, 1], [], []>} : vector<32x32xbf16>, vector<32x256xbf16>, vector<32x256xf32> -> vector<32x256xf32>
    %c0_65 = arith.constant 0 : index
    %c0_66 = arith.constant 0 : index
    %199 = vector.load %arg20[%c0_65, %c0_66] : memref<32x1xf32, #tpu.memory_space<vmem>>, vector<32x1xf32>
    %200 = vector.broadcast %199 : vector<32x1xf32> to vector<32x256xf32>
    %201 = arith.addf %198, %200 : vector<32x256xf32>
    %c0_67 = arith.constant 0 : index
    %c0_68 = arith.constant 0 : index
    %202 = vector.load %arg21[%c0_67, %c0_68] : memref<32x32xbf16, #tpu.memory_space<vmem>>, vector<32x32xbf16>
    %cst_69 = arith.constant dense<0.000000e+00> : vector<32x256xf32>
    %203 = tpu.matmul %202, %191, %cst_69 {dimension_numbers = #tpu.dot_dimension_numbers<[1], [0], [0], [1], [0, 0, 1, 1], [], []>} : vector<32x32xbf16>, vector<32x256xbf16>, vector<32x256xf32> -> vector<32x256xf32>
    %c0_70 = arith.constant 0 : index
    %c0_71 = arith.constant 0 : index
    %204 = vector.load %arg22[%c0_70, %c0_71] : memref<32x1xf32, #tpu.memory_space<vmem>>, vector<32x1xf32>
    %205 = vector.broadcast %204 : vector<32x1xf32> to vector<32x256xf32>
    %206 = arith.addf %203, %205 : vector<32x256xf32>
    %207 = arith.truncf %196 : vector<32x256xf32> to vector<32x256xbf16>
    %208 = arith.truncf %201 : vector<32x256xf32> to vector<32x256xbf16>
    %209 = arith.truncf %206 : vector<32x256xf32> to vector<32x256xbf16>
    %210 = vector.extract_strided_slice %207 {offsets = [0, 0], sizes = [32, 128], strides = [1, 1]} : vector<32x256xbf16> to vector<32x128xbf16>
    %cst_72 = arith.constant dense<0.000000e+00> : vector<128x256xf32>
    %211 = tpu.matmul %210, %208, %cst_72 {dimension_numbers = #tpu.dot_dimension_numbers<[0], [0], [1], [1], [0, 1, 1, 1], [], []>} : vector<32x128xbf16>, vector<32x256xbf16>, vector<128x256xf32> -> vector<128x256xf32>
    %cst_73 = arith.constant dense<0xFF800000> : vector<128xf32>
    %212 = vector.multi_reduction <maximumf>, %211, %cst_73 [1] : vector<128x256xf32> to vector<128xf32>
    %213 = vector.shape_cast %212 : vector<128xf32> to vector<128x1xf32>
    %214 = vector.broadcast %213 : vector<128x1xf32> to vector<128x256xf32>
    %215 = arith.subf %211, %214 : vector<128x256xf32>
    %216 = math.exp %215 : vector<128x256xf32>
    %cst_74 = arith.constant dense<0.000000e+00> : vector<128xf32>
    %217 = vector.multi_reduction <add>, %216, %cst_74 [1] : vector<128x256xf32> to vector<128xf32>
    %218 = vector.shape_cast %217 : vector<128xf32> to vector<128x1xf32>
    %219 = tpu.reciprocal %218 {approx = true} : vector<128x1xf32> -> vector<128x1xf32>
    %220 = vector.broadcast %219 : vector<128x1xf32> to vector<128x256xf32>
    %221 = arith.mulf %216, %220 : vector<128x256xf32>
    %222 = arith.truncf %221 : vector<128x256xf32> to vector<128x256xbf16>
    %cst_75 = arith.constant dense<0.000000e+00> : vector<32x128xf32>
    %223 = tpu.matmul %209, %222, %cst_75 {dimension_numbers = #tpu.dot_dimension_numbers<[1], [1], [0], [0], [0, 0, 1, 0], [], []>} : vector<32x256xbf16>, vector<128x256xbf16>, vector<32x128xf32> -> vector<32x128xf32>
    %224 = vector.extract_strided_slice %207 {offsets = [0, 128], sizes = [32, 128], strides = [1, 1]} : vector<32x256xbf16> to vector<32x128xbf16>
    %cst_76 = arith.constant dense<0.000000e+00> : vector<128x256xf32>
    %225 = tpu.matmul %224, %208, %cst_76 {dimension_numbers = #tpu.dot_dimension_numbers<[0], [0], [1], [1], [0, 1, 1, 1], [], []>} : vector<32x128xbf16>, vector<32x256xbf16>, vector<128x256xf32> -> vector<128x256xf32>
    %cst_77 = arith.constant dense<0xFF800000> : vector<128xf32>
    %226 = vector.multi_reduction <maximumf>, %225, %cst_77 [1] : vector<128x256xf32> to vector<128xf32>
    %227 = vector.shape_cast %226 : vector<128xf32> to vector<128x1xf32>
    %228 = vector.broadcast %227 : vector<128x1xf32> to vector<128x256xf32>
    %229 = arith.subf %225, %228 : vector<128x256xf32>
    %230 = math.exp %229 : vector<128x256xf32>
    %cst_78 = arith.constant dense<0.000000e+00> : vector<128xf32>
    %231 = vector.multi_reduction <add>, %230, %cst_78 [1] : vector<128x256xf32> to vector<128xf32>
    %232 = vector.shape_cast %231 : vector<128xf32> to vector<128x1xf32>
    %233 = tpu.reciprocal %232 {approx = true} : vector<128x1xf32> -> vector<128x1xf32>
    %234 = vector.broadcast %233 : vector<128x1xf32> to vector<128x256xf32>
    %235 = arith.mulf %230, %234 : vector<128x256xf32>
    %236 = arith.truncf %235 : vector<128x256xf32> to vector<128x256xbf16>
    %cst_79 = arith.constant dense<0.000000e+00> : vector<32x128xf32>
    %237 = tpu.matmul %209, %236, %cst_79 {dimension_numbers = #tpu.dot_dimension_numbers<[1], [1], [0], [0], [0, 0, 1, 0], [], []>} : vector<32x256xbf16>, vector<128x256xbf16>, vector<32x128xf32> -> vector<32x128xf32>
    %238 = tpu.concatenate %223, %237 in 1 : vector<32x128xf32>, vector<32x128xf32> -> vector<32x256xf32>
    %c0_80 = arith.constant 0 : index
    %c0_81 = arith.constant 0 : index
    %239 = vector.load %arg23[%c0_80, %c0_81] : memref<32x32xbf16, #tpu.memory_space<vmem>>, vector<32x32xbf16>
    %240 = arith.truncf %238 : vector<32x256xf32> to vector<32x256xbf16>
    %cst_82 = arith.constant dense<0.000000e+00> : vector<32x256xf32>
    %241 = tpu.matmul %239, %240, %cst_82 {dimension_numbers = #tpu.dot_dimension_numbers<[1], [0], [0], [1], [0, 0, 1, 1], [], []>} : vector<32x32xbf16>, vector<32x256xbf16>, vector<32x256xf32> -> vector<32x256xf32>
    %c0_83 = arith.constant 0 : index
    %c0_84 = arith.constant 0 : index
    %242 = vector.load %arg24[%c0_83, %c0_84] : memref<32x1xf32, #tpu.memory_space<vmem>>, vector<32x1xf32>
    %243 = vector.broadcast %242 : vector<32x1xf32> to vector<32x256xf32>
    %244 = arith.addf %241, %243 : vector<32x256xf32>
    %245 = arith.addf %164, %244 : vector<32x256xf32>
    %c255_i32_85 = arith.constant 255 : i32
    %246 = tpu.dynamic_rotate %245 by %c255_i32_85 dim 1 : vector<32x256xf32>, i32 -> vector<32x256xf32>
    %247 = arith.maximumf %245, %246 : vector<32x256xf32>
    %c240_i32_86 = arith.constant 240 : i32
    %248 = tpu.dynamic_rotate %247 by %c240_i32_86 dim 1 : vector<32x256xf32>, i32 -> vector<32x256xf32>
    %249 = arith.maximumf %247, %248 : vector<32x256xf32>
    %c0_87 = arith.constant 0 : index
    %c0_88 = arith.constant 0 : index
    %250 = vector.load %arg4[%c0_87, %c0_88] : memref<256x64xf32, #tpu.memory_space<vmem>>, vector<256x64xf32>
    %cst_89 = arith.constant dense<0.000000e+00> : vector<32x64xf32>
    %251 = tpu.matmul %249, %250, %cst_89 {dimension_numbers = #tpu.dot_dimension_numbers<[1], [0], [0], [1], [0, 0, 1, 1], [], []>} : vector<32x256xf32>, vector<256x64xf32>, vector<32x64xf32> -> vector<32x64xf32>
    %c0_90 = arith.constant 0 : index
    %c0_91 = arith.constant 0 : index
    %c0_92 = arith.constant 0 : index
    %252 = vector.load %arg25[%c0_90, %c0_91, %c0_92] : memref<1x32x64xf32, #tpu.memory_space<vmem>>, vector<1x32x64xf32>
    %253 = vector.shape_cast %252 : vector<1x32x64xf32> to vector<32x64xf32>
    %254 = vector.shape_cast %251 : vector<32x64xf32> to vector<1x32x64xf32>
    tpu.vector_store %arg25[%c0_90, %c0_91, %c0_92], %254 {strides = array<i32>} : memref<1x32x64xf32, #tpu.memory_space<vmem>>, vector<1x32x64xf32>,
    return
  }
  func.func @transform_0(%arg0: i32) -> (i32, i32, i32) {
    %c0_i32 = arith.constant 0 : i32
    %c0_i32_0 = arith.constant 0 : i32
    %c0_i32_1 = arith.constant 0 : i32
    return %arg0, %c0_i32, %c0_i32_0 : i32, i32, i32
  }
  func.func @transform_1(%arg0: i32) -> (i32, i32) {
    %c0_i32 = arith.constant 0 : i32
    %c0_i32_0 = arith.constant 0 : i32
    %c0_i32_1 = arith.constant 0 : i32
    return %c0_i32, %c0_i32_0 : i32, i32
  }
  func.func @transform_2(%arg0: i32) -> (i32, i32) {
    %c0_i32 = arith.constant 0 : i32
    %c0_i32_0 = arith.constant 0 : i32
    %c0_i32_1 = arith.constant 0 : i32
    return %c0_i32, %c0_i32_0 : i32, i32
  }
  func.func @transform_3(%arg0: i32) -> (i32, i32) {
    %c0_i32 = arith.constant 0 : i32
    %c0_i32_0 = arith.constant 0 : i32
    %c0_i32_1 = arith.constant 0 : i32
    return %c0_i32, %c0_i32_0 : i32, i32
  }
  func.func @transform_4(%arg0: i32) -> (i32, i32) {
    %c0_i32 = arith.constant 0 : i32
    %c0_i32_0 = arith.constant 0 : i32
    %c0_i32_1 = arith.constant 0 : i32
    return %c0_i32, %c0_i32_0 : i32, i32
  }
  func.func @transform_5(%arg0: i32) -> (i32, i32) {
    %c0_i32 = arith.constant 0 : i32
    %c0_i32_0 = arith.constant 0 : i32
    %c0_i32_1 = arith.constant 0 : i32
    return %c0_i32, %c0_i32_0 : i32, i32
  }
  func.func @transform_6(%arg0: i32) -> (i32, i32) {
    %c0_i32 = arith.constant 0 : i32
    %c0_i32_0 = arith.constant 0 : i32
    %c0_i32_1 = arith.constant 0 : i32
    return %c0_i32, %c0_i32_0 : i32, i32
  }
  func.func @transform_7(%arg0: i32) -> (i32, i32) {
    %c0_i32 = arith.constant 0 : i32
    %c0_i32_0 = arith.constant 0 : i32
    %c0_i32_1 = arith.constant 0 : i32
    return %c0_i32, %c0_i32_0 : i32, i32
  }
  func.func @transform_8(%arg0: i32) -> (i32, i32) {
    %c0_i32 = arith.constant 0 : i32
    %c0_i32_0 = arith.constant 0 : i32
    %c0_i32_1 = arith.constant 0 : i32
    return %c0_i32, %c0_i32_0 : i32, i32
  }
  func.func @transform_9(%arg0: i32) -> (i32, i32) {
    %c0_i32 = arith.constant 0 : i32
    %c0_i32_0 = arith.constant 0 : i32
    %c0_i32_1 = arith.constant 0 : i32
    return %c0_i32, %c0_i32_0 : i32, i32
  }
  func.func @transform_10(%arg0: i32) -> (i32, i32) {
    %c0_i32 = arith.constant 0 : i32
    %c0_i32_0 = arith.constant 0 : i32
    %c0_i32_1 = arith.constant 0 : i32
    return %c0_i32, %c0_i32_0 : i32, i32
  }
  func.func @transform_11(%arg0: i32) -> (i32, i32) {
    %c0_i32 = arith.constant 0 : i32
    %c0_i32_0 = arith.constant 0 : i32
    %c0_i32_1 = arith.constant 0 : i32
    return %c0_i32, %c0_i32_0 : i32, i32
  }
  func.func @transform_12(%arg0: i32) -> (i32, i32) {
    %c0_i32 = arith.constant 0 : i32
    %c0_i32_0 = arith.constant 0 : i32
    %c0_i32_1 = arith.constant 0 : i32
    return %c0_i32, %c0_i32_0 : i32, i32
  }
  func.func @transform_13(%arg0: i32) -> (i32, i32) {
    %c0_i32 = arith.constant 0 : i32
    %c0_i32_0 = arith.constant 0 : i32
    %c0_i32_1 = arith.constant 0 : i32
    return %c0_i32, %c0_i32_0 : i32, i32
  }
  func.func @transform_14(%arg0: i32) -> (i32, i32) {
    %c0_i32 = arith.constant 0 : i32
    %c0_i32_0 = arith.constant 0 : i32
    %c0_i32_1 = arith.constant 0 : i32
    return %c0_i32, %c0_i32_0 : i32, i32
  }
  func.func @transform_15(%arg0: i32) -> (i32, i32) {
    %c0_i32 = arith.constant 0 : i32
    %c0_i32_0 = arith.constant 0 : i32
    %c0_i32_1 = arith.constant 0 : i32
    return %c0_i32, %c0_i32_0 : i32, i32
  }
  func.func @transform_16(%arg0: i32) -> (i32, i32) {
    %c0_i32 = arith.constant 0 : i32
    %c0_i32_0 = arith.constant 0 : i32
    %c0_i32_1 = arith.constant 0 : i32
    return %c0_i32, %c0_i32_0 : i32, i32
  }
  func.func @transform_17(%arg0: i32) -> (i32, i32) {
    %c0_i32 = arith.constant 0 : i32
    %c0_i32_0 = arith.constant 0 : i32
    %c0_i32_1 = arith.constant 0 : i32
    return %c0_i32, %c0_i32_0 : i32, i32
  }
  func.func @transform_18(%arg0: i32) -> (i32, i32) {
    %c0_i32 = arith.constant 0 : i32
    %c0_i32_0 = arith.constant 0 : i32
    %c0_i32_1 = arith.constant 0 : i32
    return %c0_i32, %c0_i32_0 : i32, i32
  }
  func.func @transform_19(%arg0: i32) -> (i32, i32) {
    %c0_i32 = arith.constant 0 : i32
    %c0_i32_0 = arith.constant 0 : i32
    %c0_i32_1 = arith.constant 0 : i32
    return %c0_i32, %c0_i32_0 : i32, i32
  }
  func.func @transform_20(%arg0: i32) -> (i32, i32) {
    %c0_i32 = arith.constant 0 : i32
    %c0_i32_0 = arith.constant 0 : i32
    %c0_i32_1 = arith.constant 0 : i32
    return %c0_i32, %c0_i32_0 : i32, i32
  }
  func.func @transform_21(%arg0: i32) -> (i32, i32) {
    %c0_i32 = arith.constant 0 : i32
    %c0_i32_0 = arith.constant 0 : i32
    %c0_i32_1 = arith.constant 0 : i32
    return %c0_i32, %c0_i32_0 : i32, i32
  }
  func.func @transform_22(%arg0: i32) -> (i32, i32) {
    %c0_i32 = arith.constant 0 : i32
    %c0_i32_0 = arith.constant 0 : i32
    %c0_i32_1 = arith.constant 0 : i32
    return %c0_i32, %c0_i32_0 : i32, i32
  }
  func.func @transform_23(%arg0: i32) -> (i32, i32) {
    %c0_i32 = arith.constant 0 : i32
    %c0_i32_0 = arith.constant 0 : i32
    %c0_i32_1 = arith.constant 0 : i32
    return %c0_i32, %c0_i32_0 : i32, i32
  }
  func.func @transform_24(%arg0: i32) -> (i32, i32, i32) {
    %c0_i32 = arith.constant 0 : i32
    %c0_i32_0 = arith.constant 0 : i32
    %c0_i32_1 = arith.constant 0 : i32
    return %arg0, %c0_i32, %c0_i32_0 : i32, i32, i32
  }
}

</mosaic_0001>

<llo_original>
// kernel: res_attn_down_block2d_pallas.1
$region0: #{res_attn_down_block2d_pallas.1}
  #allocation0 [shape = 'u32[]', space=smem, size = 0x4, offset = 0x4, fixed_abs, tag = 'smem constant byte address 0x4 - core index']
  #allocation1 [shape = 'u32[144,128]{1,0:T(1,128)}', space=vmem, size = 0x12000, scoped, tag = 'internal scratch']
  %s0 = inlined_call_operand.vmem [shape: f32[2,16,256], index: 0, kind: input, shape index: {}]
  %s1 = inlined_call_operand.vmem [shape: f32[32,32], index: 1, kind: input, shape index: {}]
  %s2 = inlined_call_operand.vmem [shape: f32[9,256], index: 2, kind: input, shape index: {}]
  %s3 = inlined_call_operand.vmem [shape: f32[256,64], index: 3, kind: input, shape index: {}]
  %s4 = inlined_call_operand.vmem [shape: f32[16,1], index: 4, kind: input, shape index: {}]
  %s5 = inlined_call_operand.vmem [shape: f32[16,1], index: 5, kind: input, shape index: {}]
  %s6 = inlined_call_operand.vmem [shape: bf16[32,144], index: 6, kind: input, shape index: {}]
  %s7 = inlined_call_operand.vmem [shape: f32[32,1], index: 7, kind: input, shape index: {}]
  %s8 = inlined_call_operand.vmem [shape: f32[32,1], index: 8, kind: input, shape index: {}]
  %s9 = inlined_call_operand.vmem [shape: f32[32,1], index: 9, kind: input, shape index: {}]
  %s10 = inlined_call_operand.vmem [shape: bf16[32,288], index: 10, kind: input, shape index: {}]
  %s11 = inlined_call_operand.vmem [shape: f32[32,1], index: 11, kind: input, shape index: {}]
  %s12 = inlined_call_operand.vmem [shape: bf16[32,16], index: 12, kind: input, shape index: {}]
  %s13 = inlined_call_operand.vmem [shape: f32[32,1], index: 13, kind: input, shape index: {}]
  %s14 = inlined_call_operand.vmem [shape: f32[32,1], index: 14, kind: input, shape index: {}]
  %s15 = inlined_call_operand.vmem [shape: f32[32,1], index: 15, kind: input, shape index: {}]
  %s16 = inlined_call_operand.vmem [shape: bf16[32,32], index: 16, kind: input, shape index: {}]
  %s17 = inlined_call_operand.vmem [shape: f32[32,1], index: 17, kind: input, shape index: {}]
  %s18 = inlined_call_operand.vmem [shape: bf16[32,32], index: 18, kind: input, shape index: {}]
  %s19 = inlined_call_operand.vmem [shape: f32[32,1], index: 19, kind: input, shape index: {}]
  %s20 = inlined_call_operand.vmem [shape: bf16[32,32], index: 20, kind: input, shape index: {}]
  %s21 = inlined_call_operand.vmem [shape: f32[32,1], index: 21, kind: input, shape index: {}]
  %s22 = inlined_call_operand.vmem [shape: bf16[32,32], index: 22, kind: input, shape index: {}]
  %s23 = inlined_call_operand.vmem [shape: f32[32,1], index: 23, kind: input, shape index: {}]
  %s24 = inlined_call_operand.vmem [shape: f32[2,32,64], index: 24, kind: output, shape index: {}]
  %s25 = sld [smem:[#allocation0]]
  $region129: #{res_attn_down_block2d_pallas.1} parent=0
    _
  %s27 = ssub.s32 1, %s25
  %s28 = scalar_select 0, %s27, %s25
  loop: start=0, step=1, limit=4
  $region2: #{res_attn_down_block2d_pallas.1} parent=0 // loop_pre_header
    _
  $region3: #{res_attn_down_block2d_pallas.1} parent=0 // loop_header
    %s30 = sphi 0, %s34
    %p31 = scmp.ge.s32.totalorder %s30, 4
    %s40 = sphi 0, %s42
    %s43 = sphi 0, %s40
    %s44 = sphi 0, %s43
    %s60 = sphi 0, %s44
    %s64 = sphi 0, %s64
    %s66 = sphi 0, %s64
    %s67 = sphi 0, %s66
    %s81 = sphi 0, %s67
    %s85 = sphi 0, %s85
    %s87 = sphi 0, %s85
    %s88 = sphi 0, %s87
    %s102 = sphi 0, %s88
    %s106 = sphi 0, %s106
    %s108 = sphi 0, %s106
    %s109 = sphi 0, %s108
    %s123 = sphi 0, %s109
    %s127 = sphi 0, %s127
    %s129 = sphi 0, %s127
    %s130 = sphi 0, %s129
    %s144 = sphi 0, %s130
    %s148 = sphi 0, %s148
    %s150 = sphi 0, %s148
    %s151 = sphi 0, %s150
    %s165 = sphi 0, %s151
    %s169 = sphi 0, %s169
    %s171 = sphi 0, %s169
    %s172 = sphi 0, %s171
    %s186 = sphi 0, %s172
    %s190 = sphi 0, %s190
    %s192 = sphi 0, %s190
    %s193 = sphi 0, %s192
    %s207 = sphi 0, %s193
    %s211 = sphi 0, %s211
    %s213 = sphi 0, %s211
    %s214 = sphi 0, %s213
    %s228 = sphi 0, %s214
    %s232 = sphi 0, %s232
    %s234 = sphi 0, %s232
    %s235 = sphi 0, %s234
    %s249 = sphi 0, %s235
    %s253 = sphi 0, %s253
    %s255 = sphi 0, %s253
    %s256 = sphi 0, %s255
    %s270 = sphi 0, %s256
    %s274 = sphi 0, %s274
    %s276 = sphi 0, %s274
    %s277 = sphi 0, %s276
    %s291 = sphi 0, %s277
    %s295 = sphi 0, %s295
    %s297 = sphi 0, %s295
    %s298 = sphi 0, %s297
    %s312 = sphi 0, %s298
    %s316 = sphi 0, %s316
    %s318 = sphi 0, %s316
    %s319 = sphi 0, %s318
    %s333 = sphi 0, %s319
    %s337 = sphi 0, %s337
    %s339 = sphi 0, %s337
    %s340 = sphi 0, %s339
    %s354 = sphi 0, %s340
    %s358 = sphi 0, %s358
    %s360 = sphi 0, %s358
    %s361 = sphi 0, %s360
    %s375 = sphi 0, %s361
    %s379 = sphi 0, %s379
    %s381 = sphi 0, %s379
    %s382 = sphi 0, %s381
    %s396 = sphi 0, %s382
    %s400 = sphi 0, %s400
    %s402 = sphi 0, %s400
    %s403 = sphi 0, %s402
    %s417 = sphi 0, %s403
    %s421 = sphi 0, %s421
    %s423 = sphi 0, %s421
    %s424 = sphi 0, %s423
    %s438 = sphi 0, %s424
    %s442 = sphi 0, %s442
    %s444 = sphi 0, %s442
    %s445 = sphi 0, %s444
    %s459 = sphi 0, %s445
    %s463 = sphi 0, %s463
    %s465 = sphi 0, %s463
    %s466 = sphi 0, %s465
    %s480 = sphi 0, %s466
    %s484 = sphi 0, %s484
    %s486 = sphi 0, %s484
    %s487 = sphi 0, %s486
    %s501 = sphi 0, %s487
    %s505 = sphi 0, %s505
    %s507 = sphi 0, %s505
    %s508 = sphi 0, %s507
    %s522 = sphi 0, %s508
    %s526 = sphi 0, %s526
    %s528 = sphi 0, %s526
    %s529 = sphi 0, %s528
    %s543 = sphi 0, %s529
    %s549 = sphi 0, %s551
    %s552 = sphi 0, %s549
    %s553 = sphi 0, %s552
    %s569 = sphi 0, %s553
  $region4: #{res_attn_down_block2d_pallas.1} parent=0 // loop_header_branch
    %33 = sbr.rel (%p31) target = $region8
  $region5: #{res_attn_down_block2d_pallas.1} parent=0 // loop_body
    %s35 = ssub.s32 %s30, 1
    %s36 = ssub.s32 %s30, 2
    %s37 = sadd.s32 %s30, 1
    %s38 = ssub.s32 %s30, %s37
    %p39 = scmp.eq.s32.totalorder %s38, 0
    %s41 = sadd.s32 %s40, 1
    %s42 = scalar_select %p39, %s40, %s41
    %p45 = pneg %p39
    %p46 = scmp.eq.s32.totalorder %s30, 1
    %p47 = por %p45, %p46
    %p48 = scmp.ne.s32.totalorder %s40, %s43
    %p49 = scmp.eq.s32.totalorder %s30, 0
    %p50 = por %p48, %p49
    %p51 = scmp.ne.s32.totalorder %s40, %s43
    %p52 = scmp.eq.s32.totalorder %s35, 1
    %p53 = por %p51, %p52
    %p54 = scmp.ne.s32.totalorder %s43, %s44
    %p55 = scmp.eq.s32.totalorder %s35, 0
    %p56 = por %p54, %p55
    %p57 = scmp.ne.s32.totalorder %s43, %s44
    %p58 = scmp.eq.s32.totalorder %s36, 1
    %p59 = por %p57, %p58
    %p61 = scmp.ne.s32.totalorder %s44, %s60
    %p62 = scmp.eq.s32.totalorder %s36, 0
    %p63 = por %p61, %p62
    %s65 = sadd.s32 %s64, 1
    %p68 = scmp.eq.s32.totalorder %s30, 1
    %p69 = scmp.ne.s32.totalorder %s64, %s66
    %p70 = scmp.eq.s32.totalorder %s30, 0
    %p71 = por %p69, %p70
    %p72 = scmp.ne.s32.totalorder %s64, %s66
    %p73 = scmp.eq.s32.totalorder %s35, 1
    %p74 = por %p72, %p73
    %p75 = scmp.ne.s32.totalorder %s66, %s67
    %p76 = scmp.eq.s32.totalorder %s35, 0
    %p77 = por %p75, %p76
    %p78 = scmp.ne.s32.totalorder %s66, %s67
    %p79 = scmp.eq.s32.totalorder %s36, 1
    %p80 = por %p78, %p79
    %p82 = scmp.ne.s32.totalorder %s67, %s81
    %p83 = scmp.eq.s32.totalorder %s36, 0
    %p84 = por %p82, %p83
    %s86 = sadd.s32 %s85, 1
    %p89 = scmp.eq.s32.totalorder %s30, 1
    %p90 = scmp.ne.s32.totalorder %s85, %s87
    %p91 = scmp.eq.s32.totalorder %s30, 0
    %p92 = por %p90, %p91
    %p93 = scmp.ne.s32.totalorder %s85, %s87
    %p94 = scmp.eq.s32.totalorder %s35, 1
    %p95 = por %p93, %p94
    %p96 = scmp.ne.s32.totalorder %s87, %s88
    %p97 = scmp.eq.s32.totalorder %s35, 0
    %p98 = por %p96, %p97
    %p99 = scmp.ne.s32.totalorder %s87, %s88
    %p100 = scmp.eq.s32.totalorder %s36, 1
    %p101 = por %p99, %p100
    %p103 = scmp.ne.s32.totalorder %s88, %s102
    %p104 = scmp.eq.s32.totalorder %s36, 0
    %p105 = por %p103, %p104
    %s107 = sadd.s32 %s106, 1
    %p110 = scmp.eq.s32.totalorder %s30, 1
    %p111 = scmp.ne.s32.totalorder %s106, %s108
    %p112 = scmp.eq.s32.totalorder %s30, 0
    %p113 = por %p111, %p112
    %p114 = scmp.ne.s32.totalorder %s106, %s108
    %p115 = scmp.eq.s32.totalorder %s35, 1
    %p116 = por %p114, %p115
    %p117 = scmp.ne.s32.totalorder %s108, %s109
    %p118 = scmp.eq.s32.totalorder %s35, 0
    %p119 = por %p117, %p118
    %p120 = scmp.ne.s32.totalorder %s108, %s109
    %p121 = scmp.eq.s32.totalorder %s36, 1
    %p122 = por %p120, %p121
    %p124 = scmp.ne.s32.totalorder %s109, %s123
    %p125 = scmp.eq.s32.totalorder %s36, 0
    %p126 = por %p124, %p125
    %s128 = sadd.s32 %s127, 1
    %p131 = scmp.eq.s32.totalorder %s30, 1
    %p132 = scmp.ne.s32.totalorder %s127, %s129
    %p133 = scmp.eq.s32.totalorder %s30, 0
    %p134 = por %p132, %p133
    %p135 = scmp.ne.s32.totalorder %s127, %s129
    %p136 = scmp.eq.s32.totalorder %s35, 1
    %p137 = por %p135, %p136
    %p138 = scmp.ne.s32.totalorder %s129, %s130
    %p139 = scmp.eq.s32.totalorder %s35, 0
    %p140 = por %p138, %p139
    %p141 = scmp.ne.s32.totalorder %s129, %s130
    %p142 = scmp.eq.s32.totalorder %s36, 1
    %p143 = por %p141, %p142
    %p145 = scmp.ne.s32.totalorder %s130, %s144
    %p146 = scmp.eq.s32.totalorder %s36, 0
    %p147 = por %p145, %p146
    %s149 = sadd.s32 %s148, 1
    %p152 = scmp.eq.s32.totalorder %s30, 1
    %p153 = scmp.ne.s32.totalorder %s148, %s150
    %p154 = scmp.eq.s32.totalorder %s30, 0
    %p155 = por %p153, %p154
    %p156 = scmp.ne.s32.totalorder %s148, %s150
    %p157 = scmp.eq.s32.totalorder %s35, 1
    %p158 = por %p156, %p157
    %p159 = scmp.ne.s32.totalorder %s150, %s151
    %p160 = scmp.eq.s32.totalorder %s35, 0
    %p161 = por %p159, %p160
    %p162 = scmp.ne.s32.totalorder %s150, %s151
    %p163 = scmp.eq.s32.totalorder %s36, 1
    %p164 = por %p162, %p163
    %p166 = scmp.ne.s32.totalorder %s151, %s165
    %p167 = scmp.eq.s32.totalorder %s36, 0
    %p168 = por %p166, %p167
    %s170 = sadd.s32 %s169, 1
    %p173 = scmp.eq.s32.totalorder %s30, 1
    %p174 = scmp.ne.s32.totalorder %s169, %s171
    %p175 = scmp.eq.s32.totalorder %s30, 0
    %p176 = por %p174, %p175
    %p177 = scmp.ne.s32.totalorder %s169, %s171
    %p178 = scmp.eq.s32.totalorder %s35, 1
    %p179 = por %p177, %p178
    %p180 = scmp.ne.s32.totalorder %s171, %s172
    %p181 = scmp.eq.s32.totalorder %s35, 0
    %p182 = por %p180, %p181
    %p183 = scmp.ne.s32.totalorder %s171, %s172
    %p184 = scmp.eq.s32.totalorder %s36, 1
    %p185 = por %p183, %p184
    %p187 = scmp.ne.s32.totalorder %s172, %s186
    %p188 = scmp.eq.s32.totalorder %s36, 0
    %p189 = por %p187, %p188
    %s191 = sadd.s32 %s190, 1
    %p194 = scmp.eq.s32.totalorder %s30, 1
    %p195 = scmp.ne.s32.totalorder %s190, %s192
    %p196 = scmp.eq.s32.totalorder %s30, 0
    %p197 = por %p195, %p196
    %p198 = scmp.ne.s32.totalorder %s190, %s192
    %p199 = scmp.eq.s32.totalorder %s35, 1
    %p200 = por %p198, %p199
    %p201 = scmp.ne.s32.totalorder %s192, %s193
    %p202 = scmp.eq.s32.totalorder %s35, 0
    %p203 = por %p201, %p202
    %p204 = scmp.ne.s32.totalorder %s192, %s193
    %p205 = scmp.eq.s32.totalorder %s36, 1
    %p206 = por %p204, %p205
    %p208 = scmp.ne.s32.totalorder %s193, %s207
    %p209 = scmp.eq.s32.totalorder %s36, 0
    %p210 = por %p208, %p209
    %s212 = sadd.s32 %s211, 1
    %p215 = scmp.eq.s32.totalorder %s30, 1
    %p216 = scmp.ne.s32.totalorder %s211, %s213
    %p217 = scmp.eq.s32.totalorder %s30, 0
    %p218 = por %p216, %p217
    %p219 = scmp.ne.s32.totalorder %s211, %s213
    %p220 = scmp.eq.s32.totalorder %s35, 1
    %p221 = por %p219, %p220
    %p222 = scmp.ne.s32.totalorder %s213, %s214
    %p223 = scmp.eq.s32.totalorder %s35, 0
    %p224 = por %p222, %p223
    %p225 = scmp.ne.s32.totalorder %s213, %s214
    %p226 = scmp.eq.s32.totalorder %s36, 1
    %p227 = por %p225, %p226
    %p229 = scmp.ne.s32.totalorder %s214, %s228
    %p230 = scmp.eq.s32.totalorder %s36, 0
    %p231 = por %p229, %p230
    %s233 = sadd.s32 %s232, 1
    %p236 = scmp.eq.s32.totalorder %s30, 1
    %p237 = scmp.ne.s32.totalorder %s232, %s234
    %p238 = scmp.eq.s32.totalorder %s30, 0
    %p239 = por %p237, %p238
    %p240 = scmp.ne.s32.totalorder %s232, %s234
    %p241 = scmp.eq.s32.totalorder %s35, 1
    %p242 = por %p240, %p241
    %p243 = scmp.ne.s32.totalorder %s234, %s235
    %p244 = scmp.eq.s32.totalorder %s35, 0
    %p245 = por %p243, %p244
    %p246 = scmp.ne.s32.totalorder %s234, %s235
    %p247 = scmp.eq.s32.totalorder %s36, 1
    %p248 = por %p246, %p247
    %p250 = scmp.ne.s32.totalorder %s235, %s249
    %p251 = scmp.eq.s32.totalorder %s36, 0
    %p252 = por %p250, %p251
    %s254 = sadd.s32 %s253, 1
    %p257 = scmp.eq.s32.totalorder %s30, 1
    %p258 = scmp.ne.s32.totalorder %s253, %s255
    %p259 = scmp.eq.s32.totalorder %s30, 0
    %p260 = por %p258, %p259
    %p261 = scmp.ne.s32.totalorder %s253, %s255
    %p262 = scmp.eq.s32.totalorder %s35, 1
    %p263 = por %p261, %p262
    %p264 = scmp.ne.s32.totalorder %s255, %s256
    %p265 = scmp.eq.s32.totalorder %s35, 0
    %p266 = por %p264, %p265
    %p267 = scmp.ne.s32.totalorder %s255, %s256
    %p268 = scmp.eq.s32.totalorder %s36, 1
    %p269 = por %p267, %p268
    %p271 = scmp.ne.s32.totalorder %s256, %s270
    %p272 = scmp.eq.s32.totalorder %s36, 0
    %p273 = por %p271, %p272
    %s275 = sadd.s32 %s274, 1
    %p278 = scmp.eq.s32.totalorder %s30, 1
    %p279 = scmp.ne.s32.totalorder %s274, %s276
    %p280 = scmp.eq.s32.totalorder %s30, 0
    %p281 = por %p279, %p280
    %p282 = scmp.ne.s32.totalorder %s274, %s276
    %p283 = scmp.eq.s32.totalorder %s35, 1
    %p284 = por %p282, %p283
    %p285 = scmp.ne.s32.totalorder %s276, %s277
    %p286 = scmp.eq.s32.totalorder %s35, 0
    %p287 = por %p285, %p286
    %p288 = scmp.ne.s32.totalorder %s276, %s277
    %p289 = scmp.eq.s32.totalorder %s36, 1
    %p290 = por %p288, %p289
    %p292 = scmp.ne.s32.totalorder %s277, %s291
    %p293 = scmp.eq.s32.totalorder %s36, 0
    %p294 = por %p292, %p293
    %s296 = sadd.s32 %s295, 1
    %p299 = scmp.eq.s32.totalorder %s30, 1
    %p300 = scmp.ne.s32.totalorder %s295, %s297
    %p301 = scmp.eq.s32.totalorder %s30, 0
    %p302 = por %p300, %p301
    %p303 = scmp.ne.s32.totalorder %s295, %s297
    %p304 = scmp.eq.s32.totalorder %s35, 1
    %p305 = por %p303, %p304
    %p306 = scmp.ne.s32.totalorder %s297, %s298
    %p307 = scmp.eq.s32.totalorder %s35, 0
    %p308 = por %p306, %p307
    %p309 = scmp.ne.s32.totalorder %s297, %s298
    %p310 = scmp.eq.s32.totalorder %s36, 1
    %p311 = por %p309, %p310
    %p313 = scmp.ne.s32.totalorder %s298, %s312
    %p314 = scmp.eq.s32.totalorder %s36, 0
    %p315 = por %p313, %p314
    %s317 = sadd.s32 %s316, 1
    %p320 = scmp.eq.s32.totalorder %s30, 1
    %p321 = scmp.ne.s32.totalorder %s316, %s318
    %p322 = scmp.eq.s32.totalorder %s30, 0
    %p323 = por %p321, %p322
    %p324 = scmp.ne.s32.totalorder %s316, %s318
    %p325 = scmp.eq.s32.totalorder %s35, 1
    %p326 = por %p324, %p325
    %p327 = scmp.ne.s32.totalorder %s318, %s319
    %p328 = scmp.eq.s32.totalorder %s35, 0
    %p329 = por %p327, %p328
    %p330 = scmp.ne.s32.totalorder %s318, %s319
    %p331 = scmp.eq.s32.totalorder %s36, 1
    %p332 = por %p330, %p331
    %p334 = scmp.ne.s32.totalorder %s319, %s333
    %p335 = scmp.eq.s32.totalorder %s36, 0
    %p336 = por %p334, %p335
    %s338 = sadd.s32 %s337, 1
    %p341 = scmp.eq.s32.totalorder %s30, 1
    %p342 = scmp.ne.s32.totalorder %s337, %s339
    %p343 = scmp.eq.s32.totalorder %s30, 0
    %p344 = por %p342, %p343
    %p345 = scmp.ne.s32.totalorder %s337, %s339
    %p346 = scmp.eq.s32.totalorder %s35, 1
    %p347 = por %p345, %p346
    %p348 = scmp.ne.s32.totalorder %s339, %s340
    %p349 = scmp.eq.s32.totalorder %s35, 0
    %p350 = por %p348, %p349
    %p351 = scmp.ne.s32.totalorder %s339, %s340
    %p352 = scmp.eq.s32.totalorder %s36, 1
    %p353 = por %p351, %p352
    %p355 = scmp.ne.s32.totalorder %s340, %s354
    %p356 = scmp.eq.s32.totalorder %s36, 0
    %p357 = por %p355, %p356
    %s359 = sadd.s32 %s358, 1
    %p362 = scmp.eq.s32.totalorder %s30, 1
    %p363 = scmp.ne.s32.totalorder %s358, %s360
    %p364 = scmp.eq.s32.totalorder %s30, 0
    %p365 = por %p363, %p364
    %p366 = scmp.ne.s32.totalorder %s358, %s360
    %p367 = scmp.eq.s32.totalorder %s35, 1
    %p368 = por %p366, %p367
    %p369 = scmp.ne.s32.totalorder %s360, %s361
    %p370 = scmp.eq.s32.totalorder %s35, 0
    %p371 = por %p369, %p370
    %p372 = scmp.ne.s32.totalorder %s360, %s361
    %p373 = scmp.eq.s32.totalorder %s36, 1
    %p374 = por %p372, %p373
    %p376 = scmp.ne.s32.totalorder %s361, %s375
    %p377 = scmp.eq.s32.totalorder %s36, 0
    %p378 = por %p376, %p377
    %s380 = sadd.s32 %s379, 1
    %p383 = scmp.eq.s32.totalorder %s30, 1
    %p384 = scmp.ne.s32.totalorder %s379, %s381
    %p385 = scmp.eq.s32.totalorder %s30, 0
    %p386 = por %p384, %p385
    %p387 = scmp.ne.s32.totalorder %s379, %s381
    %p388 = scmp.eq.s32.totalorder %s35, 1
    %p389 = por %p387, %p388
    %p390 = scmp.ne.s32.totalorder %s381, %s382
    %p391 = scmp.eq.s32.totalorder %s35, 0
    %p392 = por %p390, %p391
    %p393 = scmp.ne.s32.totalorder %s381, %s382
    %p394 = scmp.eq.s32.totalorder %s36, 1
    %p395 = por %p393, %p394
    %p397 = scmp.ne.s32.totalorder %s382, %s396
    %p398 = scmp.eq.s32.totalorder %s36, 0
    %p399 = por %p397, %p398
    %s401 = sadd.s32 %s400, 1
    %p404 = scmp.eq.s32.totalorder %s30, 1
    %p405 = scmp.ne.s32.totalorder %s400, %s402
    %p406 = scmp.eq.s32.totalorder %s30, 0
    %p407 = por %p405, %p406
    %p408 = scmp.ne.s32.totalorder %s400, %s402
    %p409 = scmp.eq.s32.totalorder %s35, 1
    %p410 = por %p408, %p409
    %p411 = scmp.ne.s32.totalorder %s402, %s403
    %p412 = scmp.eq.s32.totalorder %s35, 0
    %p413 = por %p411, %p412
    %p414 = scmp.ne.s32.totalorder %s402, %s403
    %p415 = scmp.eq.s32.totalorder %s36, 1
    %p416 = por %p414, %p415
    %p418 = scmp.ne.s32.totalorder %s403, %s417
    %p419 = scmp.eq.s32.totalorder %s36, 0
    %p420 = por %p418, %p419
    %s422 = sadd.s32 %s421, 1
    %p425 = scmp.eq.s32.totalorder %s30, 1
    %p426 = scmp.ne.s32.totalorder %s421, %s423
    %p427 = scmp.eq.s32.totalorder %s30, 0
    %p428 = por %p426, %p427
    %p429 = scmp.ne.s32.totalorder %s421, %s423
    %p430 = scmp.eq.s32.totalorder %s35, 1
    %p431 = por %p429, %p430
    %p432 = scmp.ne.s32.totalorder %s423, %s424
    %p433 = scmp.eq.s32.totalorder %s35, 0
    %p434 = por %p432, %p433
    %p435 = scmp.ne.s32.totalorder %s423, %s424
    %p436 = scmp.eq.s32.totalorder %s36, 1
    %p437 = por %p435, %p436
    %p439 = scmp.ne.s32.totalorder %s424, %s438
    %p440 = scmp.eq.s32.totalorder %s36, 0
    %p441 = por %p439, %p440
    %s443 = sadd.s32 %s442, 1
    %p446 = scmp.eq.s32.totalorder %s30, 1
    %p447 = scmp.ne.s32.totalorder %s442, %s444
    %p448 = scmp.eq.s32.totalorder %s30, 0
    %p449 = por %p447, %p448
    %p450 = scmp.ne.s32.totalorder %s442, %s444
    %p451 = scmp.eq.s32.totalorder %s35, 1
    %p452 = por %p450, %p451
    %p453 = scmp.ne.s32.totalorder %s444, %s445
    %p454 = scmp.eq.s32.totalorder %s35, 0
    %p455 = por %p453, %p454
    %p456 = scmp.ne.s32.totalorder %s444, %s445
    %p457 = scmp.eq.s32.totalorder %s36, 1
    %p458 = por %p456, %p457
    %p460 = scmp.ne.s32.totalorder %s445, %s459
    %p461 = scmp.eq.s32.totalorder %s36, 0
    %p462 = por %p460, %p461
    %s464 = sadd.s32 %s463, 1
    %p467 = scmp.eq.s32.totalorder %s30, 1
    %p468 = scmp.ne.s32.totalorder %s463, %s465
    %p469 = scmp.eq.s32.totalorder %s30, 0
    %p470 = por %p468, %p469
    %p471 = scmp.ne.s32.totalorder %s463, %s465
    %p472 = scmp.eq.s32.totalorder %s35, 1
    %p473 = por %p471, %p472
    %p474 = scmp.ne.s32.totalorder %s465, %s466
    %p475 = scmp.eq.s32.totalorder %s35, 0
    %p476 = por %p474, %p475
    %p477 = scmp.ne.s32.totalorder %s465, %s466
    %p478 = scmp.eq.s32.totalorder %s36, 1
    %p479 = por %p477, %p478
    %p481 = scmp.ne.s32.totalorder %s466, %s480
    %p482 = scmp.eq.s32.totalorder %s36, 0
    %p483 = por %p481, %p482
    %s485 = sadd.s32 %s484, 1
    %p488 = scmp.eq.s32.totalorder %s30, 1
    %p489 = scmp.ne.s32.totalorder %s484, %s486
    %p490 = scmp.eq.s32.totalorder %s30, 0
    %p491 = por %p489, %p490
    %p492 = scmp.ne.s32.totalorder %s484, %s486
    %p493 = scmp.eq.s32.totalorder %s35, 1
    %p494 = por %p492, %p493
    %p495 = scmp.ne.s32.totalorder %s486, %s487
    %p496 = scmp.eq.s32.totalorder %s35, 0
    %p497 = por %p495, %p496
    %p498 = scmp.ne.s32.totalorder %s486, %s487
    %p499 = scmp.eq.s32.totalorder %s36, 1
    %p500 = por %p498, %p499
    %p502 = scmp.ne.s32.totalorder %s487, %s501
    %p503 = scmp.eq.s32.totalorder %s36, 0
    %p504 = por %p502, %p503
    %s506 = sadd.s32 %s505, 1
    %p509 = scmp.eq.s32.totalorder %s30, 1
    %p510 = scmp.ne.s32.totalorder %s505, %s507
    %p511 = scmp.eq.s32.totalorder %s30, 0
    %p512 = por %p510, %p511
    %p513 = scmp.ne.s32.totalorder %s505, %s507
    %p514 = scmp.eq.s32.totalorder %s35, 1
    %p515 = por %p513, %p514
    %p516 = scmp.ne.s32.totalorder %s507, %s508
    %p517 = scmp.eq.s32.totalorder %s35, 0
    %p518 = por %p516, %p517
    %p519 = scmp.ne.s32.totalorder %s507, %s508
    %p520 = scmp.eq.s32.totalorder %s36, 1
    %p521 = por %p519, %p520
    %p523 = scmp.ne.s32.totalorder %s508, %s522
    %p524 = scmp.eq.s32.totalorder %s36, 0
    %p525 = por %p523, %p524
    %s527 = sadd.s32 %s526, 1
    %p530 = scmp.eq.s32.totalorder %s30, 1
    %p531 = scmp.ne.s32.totalorder %s526, %s528
    %p532 = scmp.eq.s32.totalorder %s30, 0
    %p533 = por %p531, %p532
    %p534 = scmp.ne.s32.totalorder %s526, %s528
    %p535 = scmp.eq.s32.totalorder %s35, 1
    %p536 = por %p534, %p535
    %p537 = scmp.ne.s32.totalorder %s528, %s529
    %p538 = scmp.eq.s32.totalorder %s35, 0
    %p539 = por %p537, %p538
    %p540 = scmp.ne.s32.totalorder %s528, %s529
    %p541 = scmp.eq.s32.totalorder %s36, 1
    %p542 = por %p540, %p541
    %p544 = scmp.ne.s32.totalorder %s529, %s543
    %p545 = scmp.eq.s32.totalorder %s36, 0
    %p546 = por %p544, %p545
    %s547 = ssub.s32 %s30, %s37
    %p548 = scmp.eq.s32.totalorder %s547, 0
    %s550 = sadd.s32 %s549, 1
    %s551 = scalar_select %p548, %s549, %s550
    %p554 = pneg %p548
    %p555 = scmp.eq.s32.totalorder %s30, 1
    %p556 = por %p554, %p555
    %p557 = scmp.ne.s32.totalorder %s549, %s552
    %p558 = scmp.eq.s32.totalorder %s30, 0
    %p559 = por %p557, %p558
    %p560 = scmp.ne.s32.totalorder %s549, %s552
    %p561 = scmp.eq.s32.totalorder %s35, 1
    %p562 = por %p560, %p561
    %p563 = scmp.ne.s32.totalorder %s552, %s553
    %p564 = scmp.eq.s32.totalorder %s35, 0
    %p565 = por %p563, %p564
    %p566 = scmp.ne.s32.totalorder %s552, %s553
    %p567 = scmp.eq.s32.totalorder %s36, 1
    %p568 = por %p566, %p567
    %p570 = scmp.ne.s32.totalorder %s553, %s569
    %p571 = scmp.eq.s32.totalorder %s36, 0
    %p572 = por %p570, %p571
    %p573 = scmp.le.s32.totalorder 1, %s30
    %p574 = scmp.lt.s32.totalorder %s30, 3
    %p575 = pnand %p573, %p574
    %p576 = pneg %p575
    // Predicated region
    $region9: #{res_attn_down_block2d_pallas.1} parent=5 // pred_check
      _
    $region10: #{res_attn_down_block2d_pallas.1} parent=5 // pred_check_branch
      %578 = sbr.rel (%p575) target = $region12
    $region11: #{res_attn_down_block2d_pallas.1} parent=5 // pred_region
      %s579 = ssub.s32 %s30, 1
      // Predicated region
      $region13: #{res_attn_down_block2d_pallas.1} parent=11 // pred_check
        %p580 = pneg %p77
      $region14: #{res_attn_down_block2d_pallas.1} parent=11 // pred_check_branch
        %582 = sbr.rel (%p580) target = $region16
      $region15: #{res_attn_down_block2d_pallas.1} parent=11 // pred_region
        _
      $region16: #{res_attn_down_block2d_pallas.1} parent=11 // pred_fallthru
        _
      // Predicated region
      $region17: #{res_attn_down_block2d_pallas.1} parent=11 // pred_check
        %p583 = pneg %p98
      $region18: #{res_attn_down_block2d_pallas.1} parent=11 // pred_check_branch
        %585 = sbr.rel (%p583) target = $region20
      $region19: #{res_attn_down_block2d_pallas.1} parent=11 // pred_region
        _
      $region20: #{res_attn_down_block2d_pallas.1} parent=11 // pred_fallthru
        _
      // Predicated region
      $region21: #{res_attn_down_block2d_pallas.1} parent=11 // pred_check
        %p586 = pneg %p119
      $region22: #{res_attn_down_block2d_pallas.1} parent=11 // pred_check_branch
        %588 = sbr.rel (%p586) target = $region24
      $region23: #{res_attn_down_block2d_pallas.1} parent=11 // pred_region
        _
      $region24: #{res_attn_down_block2d_pallas.1} parent=11 // pred_fallthru
        _
      // Predicated region
      $region25: #{res_attn_down_block2d_pallas.1} parent=11 // pred_check
        %p589 = pneg %p140
      $region26: #{res_attn_down_block2d_pallas.1} parent=11 // pred_check_branch
        %591 = sbr.rel (%p589) target = $region28
      $region27: #{res_attn_down_block2d_pallas.1} parent=11 // pred_region
        _
      $region28: #{res_attn_down_block2d_pallas.1} parent=11 // pred_fallthru
        _
      // Predicated region
      $region29: #{res_attn_down_block2d_pallas.1} parent=11 // pred_check
        %p592 = pneg %p161
      $region30: #{res_attn_down_block2d_pallas.1} parent=11 // pred_check_branch
        %594 = sbr.rel (%p592) target = $region32
      $region31: #{res_attn_down_block2d_pallas.1} parent=11 // pred_region
        _
      $region32: #{res_attn_down_block2d_pallas.1} parent=11 // pred_fallthru
        _
      // Predicated region
      $region33: #{res_attn_down_block2d_pallas.1} parent=11 // pred_check
        %p595 = pneg %p182
      $region34: #{res_attn_down_block2d_pallas.1} parent=11 // pred_check_branch
        %597 = sbr.rel (%p595) target = $region36
      $region35: #{res_attn_down_block2d_pallas.1} parent=11 // pred_region
        _
      $region36: #{res_attn_down_block2d_pallas.1} parent=11 // pred_fallthru
        _
      // Predicated region
      $region37: #{res_attn_down_block2d_pallas.1} parent=11 // pred_check
        %p598 = pneg %p203
      $region38: #{res_attn_down_block2d_pallas.1} parent=11 // pred_check_branch
        %600 = sbr.rel (%p598) target = $region40
      $region39: #{res_attn_down_block2d_pallas.1} parent=11 // pred_region
        _
      $region40: #{res_attn_down_block2d_pallas.1} parent=11 // pred_fallthru
        _
      // Predicated region
      $region41: #{res_attn_down_block2d_pallas.1} parent=11 // pred_check
        %p601 = pneg %p224
      $region42: #{res_attn_down_block2d_pallas.1} parent=11 // pred_check_branch
        %603 = sbr.rel (%p601) target = $region44
      $region43: #{res_attn_down_block2d_pallas.1} parent=11 // pred_region
        _
      $region44: #{res_attn_down_block2d_pallas.1} parent=11 // pred_fallthru
        _
      // Predicated region
      $region45: #{res_attn_down_block2d_pallas.1} parent=11 // pred_check
        %p604 = pneg %p245
      $region46: #{res_attn_down_block2d_pallas.1} parent=11 // pred_check_branch
        %606 = sbr.rel (%p604) target = $region48
      $region47: #{res_attn_down_block2d_pallas.1} parent=11 // pred_region
        _
      $region48: #{res_attn_down_block2d_pallas.1} parent=11 // pred_fallthru
        _
      // Predicated region
      $region49: #{res_attn_down_block2d_pallas.1} parent=11 // pred_check
        %p607 = pneg %p266
      $region50: #{res_attn_down_block2d_pallas.1} parent=11 // pred_check_branch
        %609 = sbr.rel (%p607) target = $region52
      $region51: #{res_attn_down_block2d_pallas.1} parent=11 // pred_region
        _
      $region52: #{res_attn_down_block2d_pallas.1} parent=11 // pred_fallthru
        _
      // Predicated region
      $region53: #{res_attn_down_block2d_pallas.1} parent=11 // pred_check
        %p610 = pneg %p287
      $region54: #{res_attn_down_block2d_pallas.1} parent=11 // pred_check_branch
        %612 = sbr.rel (%p610) target = $region56
      $region55: #{res_attn_down_block2d_pallas.1} parent=11 // pred_region
        _
      $region56: #{res_attn_down_block2d_pallas.1} parent=11 // pred_fallthru
        _
      // Predicated region
      $region57: #{res_attn_down_block2d_pallas.1} parent=11 // pred_check
        %p613 = pneg %p308
      $region58: #{res_attn_down_block2d_pallas.1} parent=11 // pred_check_branch
        %615 = sbr.rel (%p613) target = $region60
      $region59: #{res_attn_down_block2d_pallas.1} parent=11 // pred_region
        _
      $region60: #{res_attn_down_block2d_pallas.1} parent=11 // pred_fallthru
        _
      // Predicated region
      $region61: #{res_attn_down_block2d_pallas.1} parent=11 // pred_check
        %p616 = pneg %p329
      $region62: #{res_attn_down_block2d_pallas.1} parent=11 // pred_check_branch
        %618 = sbr.rel (%p616) target = $region64
      $region63: #{res_attn_down_block2d_pallas.1} parent=11 // pred_region
        _
      $region64: #{res_attn_down_block2d_pallas.1} parent=11 // pred_fallthru
        _
      // Predicated region
      $region65: #{res_attn_down_block2d_pallas.1} parent=11 // pred_check
        %p619 = pneg %p350
      $region66: #{res_attn_down_block2d_pallas.1} parent=11 // pred_check_branch
        %621 = sbr.rel (%p619) target = $region68
      $region67: #{res_attn_down_block2d_pallas.1} parent=11 // pred_region
        _
      $region68: #{res_attn_down_block2d_pallas.1} parent=11 // pred_fallthru
        _
      // Predicated region
      $region69: #{res_attn_down_block2d_pallas.1} parent=11 // pred_check
        %p622 = pneg %p371
      $region70: #{res_attn_down_block2d_pallas.1} parent=11 // pred_check_branch
        %624 = sbr.rel (%p622) target = $region72
      $region71: #{res_attn_down_block2d_pallas.1} parent=11 // pred_region
        _
      $region72: #{res_attn_down_block2d_pallas.1} parent=11 // pred_fallthru
        _
      // Predicated region
      $region73: #{res_attn_down_block2d_pallas.1} parent=11 // pred_check
        %p625 = pneg %p392
      $region74: #{res_attn_down_block2d_pallas.1} parent=11 // pred_check_branch
        %627 = sbr.rel (%p625) target = $region76
      $region75: #{res_attn_down_block2d_pallas.1} parent=11 // pred_region
        _
      $region76: #{res_attn_down_block2d_pallas.1} parent=11 // pred_fallthru
        _
      // Predicated region
      $region77: #{res_attn_down_block2d_pallas.1} parent=11 // pred_check
        %p628 = pneg %p413
      $region78: #{res_attn_down_block2d_pallas.1} parent=11 // pred_check_branch
        %630 = sbr.rel (%p628) target = $region80
      $region79: #{res_attn_down_block2d_pallas.1} parent=11 // pred_region
        _
      $region80: #{res_attn_down_block2d_pallas.1} parent=11 // pred_fallthru
        _
      // Predicated region
      $region81: #{res_attn_down_block2d_pallas.1} parent=11 // pred_check
        %p631 = pneg %p434
      $region82: #{res_attn_down_block2d_pallas.1} parent=11 // pred_check_branch
        %633 = sbr.rel (%p631) target = $region84
      $region83: #{res_attn_down_block2d_pallas.1} parent=11 // pred_region
        _
      $region84: #{res_attn_down_block2d_pallas.1} parent=11 // pred_fallthru
        _
      // Predicated region
      $region85: #{res_attn_down_block2d_pallas.1} parent=11 // pred_check
        %p634 = pneg %p455
      $region86: #{res_attn_down_block2d_pallas.1} parent=11 // pred_check_branch
        %636 = sbr.rel (%p634) target = $region88
      $region87: #{res_attn_down_block2d_pallas.1} parent=11 // pred_region
        _
      $region88: #{res_attn_down_block2d_pallas.1} parent=11 // pred_fallthru
        _
      // Predicated region
      $region89: #{res_attn_down_block2d_pallas.1} parent=11 // pred_check
        %p637 = pneg %p476
      $region90: #{res_attn_down_block2d_pallas.1} parent=11 // pred_check_branch
        %639 = sbr.rel (%p637) target = $region92
      $region91: #{res_attn_down_block2d_pallas.1} parent=11 // pred_region
        _
      $region92: #{res_attn_down_block2d_pallas.1} parent=11 // pred_fallthru
        _
      // Predicated region
      $region93: #{res_attn_down_block2d_pallas.1} parent=11 // pred_check
        %p640 = pneg %p497
      $region94: #{res_attn_down_block2d_pallas.1} parent=11 // pred_check_branch
        %642 = sbr.rel (%p640) target = $region96
      $region95: #{res_attn_down_block2d_pallas.1} parent=11 // pred_region
        _
      $region96: #{res_attn_down_block2d_pallas.1} parent=11 // pred_fallthru
        _
      // Predicated region
      $region97: #{res_attn_down_block2d_pallas.1} parent=11 // pred_check
        %p643 = pneg %p518
      $region98: #{res_attn_down_block2d_pallas.1} parent=11 // pred_check_branch
        %645 = sbr.rel (%p643) target = $region100
      $region99: #{res_attn_down_block2d_pallas.1} parent=11 // pred_region
        _
      $region100: #{res_attn_down_block2d_pallas.1} parent=11 // pred_fallthru
        _
      // Predicated region
      $region101: #{res_attn_down_block2d_pallas.1} parent=11 // pred_check
        %p646 = pneg %p539
      $region102: #{res_attn_down_block2d_pallas.1} parent=11 // pred_check_branch
        %648 = sbr.rel (%p646) target = $region104
      $region103: #{res_attn_down_block2d_pallas.1} parent=11 // pred_region
        _
      $region104: #{res_attn_down_block2d_pallas.1} parent=11 // pred_fallthru
        _
    $region12: #{res_attn_down_block2d_pallas.1} parent=5 // pred_fallthru
      _
    %p649 = scmp.lt.s32.totalorder %s30, 2
    // Predicated region
    $region105: #{res_attn_down_block2d_pallas.1} parent=5 // pred_check
      %p650 = pneg %p649
    $region106: #{res_attn_down_block2d_pallas.1} parent=5 // pred_check_branch
      %652 = sbr.rel (%p650) target = $region108
    $region107: #{res_attn_down_block2d_pallas.1} parent=5 // pred_region
      // Predicated region
      $region109: #{res_attn_down_block2d_pallas.1} parent=107 // pred_check
        %p653 = pneg %p50
      $region110: #{res_attn_down_block2d_pallas.1} parent=107 // pred_check_branch
        %655 = sbr.rel (%p653) target = $region112
      $region111: #{res_attn_down_block2d_pallas.1} parent=107 // pred_region
        %p656 = scmp.lt.s32.totalorder %s30, 1
        %s657 = scalar_select %p656, %s30, 1
        %s658 = smul.addr %s657, 4
        %s659 = smul.addr %s658, 8
        %s660 = scalar_lea.vmem %s0, %s659
      $region112: #{res_attn_down_block2d_pallas.1} parent=107 // pred_fallthru
        _
    $region108: #{res_attn_down_block2d_pallas.1} parent=5 // pred_fallthru
      _
    %p661 = scmp.le.s32.totalorder 1, %s30
    %p662 = scmp.lt.s32.totalorder %s30, 3
    %p663 = pnand %p661, %p662
    %p664 = pneg %p663
    // Predicated region
    $region113: #{res_attn_down_block2d_pallas.1} parent=5 // pred_check
      _
    $region114: #{res_attn_down_block2d_pallas.1} parent=5 // pred_check_branch
      %666 = sbr.rel (%p663) target = $region116
    $region115: #{res_attn_down_block2d_pallas.1} parent=5 // pred_region
      %s667 = ssub.s32 %s30, 1
      %p668 = scmp.lt.s32.totalorder %s35, 1
      %s669 = scalar_select %p668, %s35, 1
      %s670 = smul.addr %s669, 4
      %s671 = smul.addr %s670, 8
      %s672 = scalar_lea.vmem %s0, %s671
      %p673 = pneg %p56
      %p674 = pneg %p53
      %p675 = pneg %p77
      %p676 = pneg %p74
      %p677 = pneg %p98
      %p678 = pneg %p95
      %p679 = pneg %p119
      %p680 = pneg %p116
      %p681 = pneg %p140
      %p682 = pneg %p137
      %p683 = pneg %p161
      %p684 = pneg %p158
      %p685 = pneg %p182
      %p686 = pneg %p179
      %p687 = pneg %p203
      %p688 = pneg %p200
      %p689 = pneg %p224
      %p690 = pneg %p221
      %p691 = pneg %p245
      %p692 = pneg %p242
      %p693 = pneg %p266
      %p694 = pneg %p263
      %p695 = pneg %p287
      %p696 = pneg %p284
      %p697 = pneg %p308
      %p698 = pneg %p305
      %p699 = pneg %p329
      %p700 = pneg %p326
      %p701 = pneg %p350
      %p702 = pneg %p347
      %p703 = pneg %p371
      %p704 = pneg %p368
      %p705 = pneg %p392
      %p706 = pneg %p389
      %p707 = pneg %p413
      %p708 = pneg %p410
      %p709 = pneg %p434
      %p710 = pneg %p431
      %p711 = pneg %p455
      %p712 = pneg %p452
      %p713 = pneg %p476
      %p714 = pneg %p473
      %p715 = pneg %p497
      %p716 = pneg %p494
      %p717 = pneg %p518
      %p718 = pneg %p515
      %p719 = pneg %p539
      %p720 = pneg %p536
      %p721 = pneg %p565
      %p722 = pneg %p562
      %p723 = scmp.lt.s32.totalorder %s35, 1
      %s724 = scalar_select %p723, %s35, 1
      %s725 = smul.addr %s724, 4
      %s726 = smul.addr %s725, 8
      %s727 = scalar_lea.vmem %s24, %s726
      %p728 = scmp.lt.s32.totalorder %s35, 1
      %s729 = scalar_select %p728, %s35, 1
      %s730 = smul.addr %s729, 4
      %s731 = smul.addr %s730, 8
      %s732 = scalar_lea.vmem %s0, %s731
      %p733 = scmp.lt.s32.totalorder %s35, 1
      %s734 = scalar_select %p733, %s35, 1
      %s735 = smul.addr %s734, 4
      %s736 = smul.addr %s735, 8
      %s737 = scalar_lea.vmem %s24, %s736
      %v739 = vld [vmem:[%s732] sm:$0xff]
      %v740 = vld [vmem:[%s732 + $0x8] sm:$0xff]
      %v741 = vld [vmem:[%s732 + $0x10] sm:$0xff]
      %v742 = vld [vmem:[%s732 + $0x18] sm:$0xff]
      %v743 = vld [vmem:[%s1] sm:$0xff]
      %v744 = vld [vmem:[%s1 + $0x8] sm:$0xff]
      %v745 = vld [vmem:[%s1 + $0x10] sm:$0xff]
      %v746 = vld [vmem:[%s1 + $0x18] sm:$0xff]
      %v747 = vld [vmem:[%s2] sm:$0xff]
      %v748 = vld [vmem:[%s2 + $0x8] sm:$0xff]
      %v749 = vld [vmem:[%s2 + $0x10] sm:$0x1]
      %v750 = vld [vmem:[%s2 + $0x18] sm:$0x1]
      %v751 = vld [vmem:[%s4] sm:$0xff]
      %v752 = vld [vmem:[%s4 + $0x8] sm:$0xff]
      %v753 = vld [vmem:[%s5] sm:$0xff]
      %v754 = vld [vmem:[%s5 + $0x8] sm:$0xff]
      %v755 = vadd.f32 %v739, %v740
      %756 = vadd.xlane.f32.xlu0 %v755
      %v757 = vpop.xlane.xlu0 %756
      %v758 = vadd.f32 %v741, %v742
      %759 = vadd.xlane.f32.xlu0 %v758
      %v760 = vpop.xlane.xlu0 %759
      %v761 = vrcp.pop 256.0
      %v762 = vmul.f32 %v757, %v761
      %v763 = vmul.f32 %v760, %v761
      %v764 = vsub.f32 %v739, %v762
      %v765 = vsub.f32 %v740, %v762
      %v766 = vsub.f32 %v741, %v763
      %v767 = vsub.f32 %v742, %v763
      %v768 = vmul.f32 %v764, %v764
      %v769 = vmul.f32 %v765, %v765
      %v770 = vmul.f32 %v766, %v766
      %v771 = vmul.f32 %v767, %v767
      %v772 = vadd.f32 %v768, %v769
      %773 = vadd.xlane.f32.xlu0 %v772
      %v774 = vpop.xlane.xlu0 %773
      %v775 = vadd.f32 %v770, %v771
      %776 = vadd.xlane.f32.xlu0 %v775
      %v777 = vpop.xlane.xlu0 %776
      %v778 = vmul.f32 %v774, %v761
      %v779 = vmul.f32 %v777, %v761
      %v780 = vadd.f32 %v778, 1e-06
      %v781 = vadd.f32 %v779, 1e-06
      %v782 = vrsqrt.pop %v780
      %v783 = vrsqrt.pop %v781
      %v784 = vmul.f32 %v764, %v782
      %v785 = vmul.f32 %v765, %v782
      %v786 = vmul.f32 %v766, %v783
      %v787 = vmul.f32 %v767, %v783
      %789 = vset.pattern.permute.xlu0 0
      %790 = vperm.xlu0 %789, %v751
      %v791 = vpop.permute.xlu0 %790
      %794 = vset.pattern.permute.xlu0 0
      %795 = vperm.xlu0 %794, %v752
      %v796 = vpop.permute.xlu0 %795
      %v798 = vmul.f32 %v784, %v791
      %v799 = vmul.f32 %v785, %v791
      %v800 = vmul.f32 %v786, %v796
      %v801 = vmul.f32 %v787, %v796
      %803 = vset.pattern.permute.xlu0 0
      %804 = vperm.xlu0 %803, %v753
      %v805 = vpop.permute.xlu0 %804
      %808 = vset.pattern.permute.xlu0 0
      %809 = vperm.xlu0 %808, %v754
      %v810 = vpop.permute.xlu0 %809
      %v812 = vadd.f32 %v798, %v805
      %v813 = vadd.f32 %v799, %v805
      %v814 = vadd.f32 %v800, %v810
      %v815 = vadd.f32 %v801, %v810
      %v816 = vxor.u32 %v812, 2147483648
      %v817 = vxor.u32 %v813, 2147483648
      %v818 = vxor.u32 %v814, 2147483648
      %v819 = vxor.u32 %v815, 2147483648
      %v820 = vmul.f32 %v816, 1.442695
      %v821 = vpow.pop %v820
      %v822 = vmul.f32 %v817, 1.442695
      %v823 = vpow.pop %v822
      %v824 = vmul.f32 %v818, 1.442695
      %v825 = vpow.pop %v824
      %v826 = vmul.f32 %v819, 1.442695
      %v827 = vpow.pop %v826
      %v828 = vadd.f32 %v821, 1.0
      %v829 = vadd.f32 %v823, 1.0
      %v830 = vadd.f32 %v825, 1.0
      %v831 = vadd.f32 %v827, 1.0
      %v832 = vrcp.pop %v828
      %v833 = vmul.f32 1.0, %v832
      %v834 = vrcp.pop %v829
      %v835 = vmul.f32 1.0, %v834
      %v836 = vrcp.pop %v830
      %v837 = vmul.f32 1.0, %v836
      %v838 = vrcp.pop %v831
      %v839 = vmul.f32 1.0, %v838
      %v840 = vmul.f32 %v812, %v833
      %v841 = vmul.f32 %v813, %v835
      %v842 = vmul.f32 %v814, %v837
      %v843 = vmul.f32 %v815, %v839
      %v844 = vld [vmem:[%s6] sm:$0xff]
      %v845 = vld [vmem:[%s6 + $0x8] sm:$0xff]
      %v846 = vld [vmem:[%s6 + $0x10] sm:$0xff]
      %v847 = vld [vmem:[%s6 + $0x18] sm:$0xff]
      %v848 = vld [vmem:[%s7] sm:$0xff]
      %v849 = vld [vmem:[%s7 + $0x8] sm:$0xff]
      %v850 = vld [vmem:[%s7 + $0x10] sm:$0xff]
      %v851 = vld [vmem:[%s7 + $0x18] sm:$0xff]
      %852 = vrot.lane.b32.xlu0 %v840, 17
      %v853 = vpop.permute.xlu0 %852
      %854 = vrot.lane.b32.xlu0 %v842, 17
      %v855 = vpop.permute.xlu0 %854
      %856 = vrot.lane.b32.xlu0 %v841, 17
      %v857 = vpop.permute.xlu0 %856
      %858 = vrot.lane.b32.xlu0 %v843, 17
      %v859 = vpop.permute.xlu0 %858
      %v860 = vlaneseq
      %v861 = vand.u32 %v860, 127
      %vm862 = vcmp.lt.s32.totalorder %v861, 17
      %v863 = vsel %vm862, %v853, %v857
      %v864 = vsel %vm862, %v855, %v859
      %v865 = vsel %vm862, %v857, %v853
      %v866 = vsel %vm862, %v859, %v855
      %v867 = vlaneseq
      %v868 = vshrl.u32 %v867, 7
      %v869 = vsub.s32 0, %v868
      %v870 = vrot.slane %v747, %v869
      %v871 = vlaneseq
      %v872 = vshrl.u32 %v871, 7
      %v873 = vsub.s32 0, %v872
      %v874 = vrot.slane %v748, %v873
      %v875 = vmul.f32 %v865, %v870
      %v876 = vmul.f32 %v863, %v874
      %v877 = vmul.f32 %v866, %v870
      %v878 = vmul.f32 %v864, %v874
      %v879 = vpack.c.bf16 %v877, %v875
      %v880 = vpack.c.bf16 %v878, %v876
      %881 = vrot.lane.b32.xlu0 %v840, 16
      %v882 = vpop.permute.xlu0 %881
      %883 = vrot.lane.b32.xlu0 %v842, 16
      %v884 = vpop.permute.xlu0 %883
      %885 = vrot.lane.b32.xlu0 %v841, 16
      %v886 = vpop.permute.xlu0 %885
      %887 = vrot.lane.b32.xlu0 %v843, 16
      %v888 = vpop.permute.xlu0 %887
      %vm889 = vcmp.lt.s32.totalorder %v861, 16
      %v890 = vsel %vm889, %v882, %v886
      %v891 = vsel %vm889, %v884, %v888
      %v892 = vsel %vm889, %v886, %v882
      %v893 = vsel %vm889, %v888, %v884
      %v894 = vlaneseq
      %v895 = vshrl.u32 %v894, 7
      %v896 = vsub.s32 1, %v895
      %v897 = vrot.slane %v747, %v896
      %v898 = vlaneseq
      %v899 = vshrl.u32 %v898, 7
      %v900 = vsub.s32 1, %v899
      %v901 = vrot.slane %v748, %v900
      %v902 = vmul.f32 %v892, %v897
      %v903 = vmul.f32 %v890, %v901
      %v904 = vmul.f32 %v893, %v897
      %v905 = vmul.f32 %v891, %v901
      %v906 = vpack.c.bf16 %v904, %v902
      %v907 = vpack.c.bf16 %v905, %v903
      %908 = vrot.lane.b32.xlu0 %v840, 15
      %v909 = vpop.permute.xlu0 %908
      %910 = vrot.lane.b32.xlu0 %v842, 15
      %v911 = vpop.permute.xlu0 %910
      %912 = vrot.lane.b32.xlu0 %v841, 15
      %v913 = vpop.permute.xlu0 %912
      %914 = vrot.lane.b32.xlu0 %v843, 15
      %v915 = vpop.permute.xlu0 %914
      %vm916 = vcmp.lt.s32.totalorder %v861, 15
      %v917 = vsel %vm916, %v909, %v913
      %v918 = vsel %vm916, %v911, %v915
      %v919 = vsel %vm916, %v913, %v909
      %v920 = vsel %vm916, %v915, %v911
      %v921 = vlaneseq
      %v922 = vshrl.u32 %v921, 7
      %v923 = vsub.s32 2, %v922
      %v924 = vrot.slane %v747, %v923
      %v925 = vlaneseq
      %v926 = vshrl.u32 %v925, 7
      %v927 = vsub.s32 2, %v926
      %v928 = vrot.slane %v748, %v927
      %v929 = vmul.f32 %v919, %v924
      %v930 = vmul.f32 %v917, %v928
      %v931 = vmul.f32 %v920, %v924
      %v932 = vmul.f32 %v918, %v928
      %v933 = vpack.c.bf16 %v931, %v929
      %v934 = vpack.c.bf16 %v932, %v930
      %935 = vrot.lane.b32.xlu0 %v840, 1
      %v936 = vpop.permute.xlu0 %935
      %937 = vrot.lane.b32.xlu0 %v842, 1
      %v938 = vpop.permute.xlu0 %937
      %939 = vrot.lane.b32.xlu0 %v841, 1
      %v940 = vpop.permute.xlu0 %939
      %941 = vrot.lane.b32.xlu0 %v843, 1
      %v942 = vpop.permute.xlu0 %941
      %vm943 = vcmp.lt.s32.totalorder %v861, 1
      %v944 = vsel %vm943, %v936, %v940
      %v945 = vsel %vm943, %v938, %v942
      %v946 = vsel %vm943, %v940, %v936
      %v947 = vsel %vm943, %v942, %v938
      %v948 = vlaneseq
      %v949 = vshrl.u32 %v948, 7
      %v950 = vsub.s32 3, %v949
      %v951 = vrot.slane %v747, %v950
      %v952 = vlaneseq
      %v953 = vshrl.u32 %v952, 7
      %v954 = vsub.s32 3, %v953
      %v955 = vrot.slane %v748, %v954
      %v956 = vmul.f32 %v946, %v951
      %v957 = vmul.f32 %v944, %v955
      %v958 = vmul.f32 %v947, %v951
      %v959 = vmul.f32 %v945, %v955
      %v960 = vpack.c.bf16 %v958, %v956
      %v961 = vpack.c.bf16 %v959, %v957
      %v962 = vpack.c.bf16 %v842, %v840
      %v963 = vpack.c.bf16 %v843, %v841
      %964 = vrot.lane.b32.xlu0 %v840, 127
      %v965 = vpop.permute.xlu0 %964
      %966 = vrot.lane.b32.xlu0 %v842, 127
      %v967 = vpop.permute.xlu0 %966
      %968 = vrot.lane.b32.xlu0 %v841, 127
      %v969 = vpop.permute.xlu0 %968
      %970 = vrot.lane.b32.xlu0 %v843, 127
      %v971 = vpop.permute.xlu0 %970
      %vm972 = vcmp.lt.s32.totalorder %v861, 127
      %v973 = vsel %vm972, %v965, %v969
      %v974 = vsel %vm972, %v967, %v971
      %v975 = vsel %vm972, %v969, %v965
      %v976 = vsel %vm972, %v971, %v967
      %v977 = vlaneseq
      %v978 = vshrl.u32 %v977, 7
      %v979 = vsub.s32 5, %v978
      %v980 = vrot.slane %v747, %v979
      %v981 = vlaneseq
      %v982 = vshrl.u32 %v981, 7
      %v983 = vsub.s32 5, %v982
      %v984 = vrot.slane %v748, %v983
      %v985 = vmul.f32 %v973, %v980
      %v986 = vmul.f32 %v975, %v984
      %v987 = vmul.f32 %v974, %v980
      %v988 = vmul.f32 %v976, %v984
      %v989 = vpack.c.bf16 %v987, %v985
      %v990 = vpack.c.bf16 %v988, %v986
      %991 = vrot.lane.b32.xlu0 %v840, 113
      %v992 = vpop.permute.xlu0 %991
      %993 = vrot.lane.b32.xlu0 %v842, 113
      %v994 = vpop.permute.xlu0 %993
      %995 = vrot.lane.b32.xlu0 %v841, 113
      %v996 = vpop.permute.xlu0 %995
      %997 = vrot.lane.b32.xlu0 %v843, 113
      %v998 = vpop.permute.xlu0 %997
      %vm999 = vcmp.lt.s32.totalorder %v861, 113
      %v1000 = vsel %vm999, %v992, %v996
      %v1001 = vsel %vm999, %v994, %v998
      %v1002 = vsel %vm999, %v996, %v992
      %v1003 = vsel %vm999, %v998, %v994
      %v1004 = vlaneseq
      %v1005 = vshrl.u32 %v1004, 7
      %v1006 = vsub.s32 6, %v1005
      %v1007 = vrot.slane %v747, %v1006
      %v1008 = vlaneseq
      %v1009 = vshrl.u32 %v1008, 7
      %v1010 = vsub.s32 6, %v1009
      %v1011 = vrot.slane %v748, %v1010
      %v1012 = vmul.f32 %v1000, %v1007
      %v1013 = vmul.f32 %v1002, %v1011
      %v1014 = vmul.f32 %v1001, %v1007
      %v1015 = vmul.f32 %v1003, %v1011
      %v1016 = vpack.c.bf16 %v1014, %v1012
      %v1017 = vpack.c.bf16 %v1015, %v1013
      %1018 = vrot.lane.b32.xlu0 %v840, 112
      %v1019 = vpop.permute.xlu0 %1018
      %1020 = vrot.lane.b32.xlu0 %v842, 112
      %v1021 = vpop.permute.xlu0 %1020
      %1022 = vrot.lane.b32.xlu0 %v841, 112
      %v1023 = vpop.permute.xlu0 %1022
      %1024 = vrot.lane.b32.xlu0 %v843, 112
      %v1025 = vpop.permute.xlu0 %1024
      %vm1026 = vcmp.lt.s32.totalorder %v861, 112
      %v1027 = vsel %vm1026, %v1019, %v1023
      %v1028 = vsel %vm1026, %v1021, %v1025
      %v1029 = vsel %vm1026, %v1023, %v1019
      %v1030 = vsel %vm1026, %v1025, %v1021
      %v1031 = vlaneseq
      %v1032 = vshrl.u32 %v1031, 7
      %v1033 = vsub.s32 7, %v1032
      %v1034 = vrot.slane %v747, %v1033
      %v1035 = vlaneseq
      %v1036 = vshrl.u32 %v1035, 7
      %v1037 = vsub.s32 7, %v1036
      %v1038 = vrot.slane %v748, %v1037
      %v1039 = vmul.f32 %v1027, %v1034
      %v1040 = vmul.f32 %v1029, %v1038
      %v1041 = vmul.f32 %v1028, %v1034
      %v1042 = vmul.f32 %v1030, %v1038
      %v1043 = vpack.c.bf16 %v1041, %v1039
      %v1044 = vpack.c.bf16 %v1042, %v1040
      %1045 = vrot.lane.b32.xlu0 %v840, 111
      %v1046 = vpop.permute.xlu0 %1045
      %1047 = vrot.lane.b32.xlu0 %v842, 111
      %v1048 = vpop.permute.xlu0 %1047
      %1049 = vrot.lane.b32.xlu0 %v841, 111
      %v1050 = vpop.permute.xlu0 %1049
      %1051 = vrot.lane.b32.xlu0 %v843, 111
      %v1052 = vpop.permute.xlu0 %1051
      %vm1053 = vcmp.lt.s32.totalorder %v861, 111
      %v1054 = vsel %vm1053, %v1046, %v1050
      %v1055 = vsel %vm1053, %v1048, %v1052
      %v1056 = vsel %vm1053, %v1050, %v1046
      %v1057 = vsel %vm1053, %v1052, %v1048
      %v1058 = vlaneseq
      %v1059 = vshrl.u32 %v1058, 7
      %v1060 = vsub.s32 0, %v1059
      %v1061 = vrot.slane %v749, %v1060
      %v1062 = vlaneseq
      %v1063 = vshrl.u32 %v1062, 7
      %v1064 = vsub.s32 0, %v1063
      %v1065 = vrot.slane %v750, %v1064
      %v1066 = vmul.f32 %v1054, %v1061
      %v1067 = vmul.f32 %v1056, %v1065
      %v1068 = vmul.f32 %v1055, %v1061
      %v1069 = vmul.f32 %v1057, %v1065
      %v1070 = vpack.c.bf16 %v1068, %v1066
      %v1071 = vpack.c.bf16 %v1069, %v1067
      %1073 = vset.pattern.permute.xlu0 0
      %1074 = vperm.xlu0 %1073, %v848
      %v1075 = vpop.permute.xlu0 %1074
      %1078 = vset.pattern.permute.xlu0 0
      %1079 = vperm.xlu0 %1078, %v849
      %v1080 = vpop.permute.xlu0 %1079
      %1083 = vset.pattern.permute.xlu0 0
      %1084 = vperm.xlu0 %1083, %v850
      %v1085 = vpop.permute.xlu0 %1084
      %1088 = vset.pattern.permute.xlu0 0
      %1089 = vperm.xlu0 %1088, %v851
      %v1090 = vpop.permute.xlu0 %1089
      %v1096 = vunpack.c.l.b16 %v844
      %v1097 = vunpack.c.h.b16 %v844
      %v1098 = vunpack.c.l.b16 %v845
      %v1099 = vunpack.c.h.b16 %v845
      %v1100 = vunpack.c.l.b16 %v846
      %v1101 = vunpack.c.h.b16 %v846
      %v1102 = vunpack.c.l.b16 %v847
      %v1103 = vunpack.c.h.b16 %v847
      %v1104 = vpack.c.b16 %v1098, %v1096
      %v1105 = vpack.c.b16 %v1099, %v1097
      %v1106 = vpack.c.b16 %v1102, %v1100
      %v1107 = vpack.c.b16 %v1103, %v1101
      %vm1110 = vcmask 130048
      %v1112 = vsel %vm1110, %v1105, 0
      %v1115 = vsel %vm1110, %v1107, 0
      %1117 = vmatprep.subr.bf16.mxu0 %v880
      %1118 = vmatpush1.bf16.msra.mxu0 %v879
      %1119 = vmatprep.subr.bf16.mxu0 %v907
      %1120 = vmatpush1.bf16.msra.mxu0 %v906
      %1121 = vmatprep.subr.bf16.mxu0 %v934
      %1122 = vmatpush1.bf16.msra.mxu0 %v933
      %1123 = vmatprep.subr.bf16.mxu0 %v961
      %1124 = vmatpush1.bf16.msra.mxu0 %v960
      %1125 = vmatprep.subr.bf16.mxu0 %v963
      %1126 = vmatpush1.bf16.msra.mxu0 %v962
      %1127 = vmatprep.subr.bf16.mxu0 %v990
      %1128 = vmatpush1.bf16.msra.mxu0 %v989
      %1129 = vmatprep.subr.bf16.mxu0 %v1017
      %1130 = vmatpush1.bf16.msra.mxu0 %v1016
      %1131 = vmatprep.subr.bf16.mxu0 %v1044
      %1132 = vmatpush1.bf16.msra.mxu0 %v1043
      %1133 = vmatprep.subr.bf16.mxu0 %v1071
      %1134 = vmatpush1.bf16.msra.mxu0 %v1070
      %1135 = vmatprep.subr.bf16.mxu0 0
      %1136 = vmatpush1.bf16.msra.mxu0 0
      %1137 = vmatprep.subr.bf16.mxu0 0
      %1138 = vmatpush1.bf16.msra.mxu0 0
      %1139 = vmatprep.subr.bf16.mxu0 0
      %1140 = vmatpush1.bf16.msra.mxu0 0
      %1141 = vmatprep.subr.bf16.mxu0 0
      %1142 = vmatpush1.bf16.msra.mxu0 0
      %1143 = vmatprep.subr.bf16.mxu0 0
      %1144 = vmatpush1.bf16.msra.mxu0 0
      %1145 = vmatprep.subr.bf16.mxu0 0
      %1146 = vmatpush1.bf16.msra.mxu0 0
      %1147 = vmatprep.subr.bf16.mxu0 0
      %1148 = vmatpush1.bf16.msra.mxu0 0
      %1149 = vmatprep.mubr.bf16.mxu0 %v1112
      %1150 = vmatmul.mubr.bf16.gmra.mrb[0].mxu0 %v1104
      %v1151 = vpop.f32.mrb[0].mxu0
      %v1152 = vadd.f32 %v1075, %v1151
      %v1153 = vpop.f32.mrb[0].mxu0
      %v1154 = vadd.f32 %v1075, %v1153
      %v1155 = vpop.f32.mrb[0].mxu0
      %v1156 = vadd.f32 %v1080, %v1155
      %v1157 = vpop.f32.mrb[0].mxu0
      %v1158 = vadd.f32 %v1080, %v1157
      %1159 = vmatprep.mubr.bf16.mxu0 %v1115
      %1160 = vmatmul.mubr.bf16.gmra.mrb[0].mxu0 %v1106
      %v1161 = vpop.f32.mrb[0].mxu0
      %v1162 = vadd.f32 %v1085, %v1161
      %v1163 = vpop.f32.mrb[0].mxu0
      %v1164 = vadd.f32 %v1085, %v1163
      %v1165 = vpop.f32.mrb[0].mxu0
      %v1166 = vadd.f32 %v1090, %v1165
      %v1167 = vpop.f32.mrb[0].mxu0
      %v1168 = vadd.f32 %v1090, %v1167
      %1169 = vdwg.mxu0
      %v1170 = vld [vmem:[%s8] sm:$0xff]
      %v1171 = vld [vmem:[%s8 + $0x8] sm:$0xff]
      %v1172 = vld [vmem:[%s8 + $0x10] sm:$0xff]
      %v1173 = vld [vmem:[%s8 + $0x18] sm:$0xff]
      %v1174 = vld [vmem:[%s9] sm:$0xff]
      %v1175 = vld [vmem:[%s9 + $0x8] sm:$0xff]
      %v1176 = vld [vmem:[%s9 + $0x10] sm:$0xff]
      %v1177 = vld [vmem:[%s9 + $0x18] sm:$0xff]
      %v1178 = vadd.f32 %v1152, %v1154
      %1179 = vadd.xlane.f32.xlu0 %v1178
      %v1180 = vpop.xlane.xlu0 %1179
      %v1181 = vadd.f32 %v1156, %v1158
      %1182 = vadd.xlane.f32.xlu0 %v1181
      %v1183 = vpop.xlane.xlu0 %1182
      %v1184 = vadd.f32 %v1162, %v1164
      %1185 = vadd.xlane.f32.xlu0 %v1184
      %v1186 = vpop.xlane.xlu0 %1185
      %v1187 = vadd.f32 %v1166, %v1168
      %1188 = vadd.xlane.f32.xlu0 %v1187
      %v1189 = vpop.xlane.xlu0 %1188
      %v1190 = vmul.f32 %v1152, %v1152
      %v1191 = vmul.f32 %v1154, %v1154
      %v1192 = vmul.f32 %v1156, %v1156
      %v1193 = vmul.f32 %v1158, %v1158
      %v1194 = vmul.f32 %v1162, %v1162
      %v1195 = vmul.f32 %v1164, %v1164
      %v1196 = vmul.f32 %v1166, %v1166
      %v1197 = vmul.f32 %v1168, %v1168
      %v1198 = vadd.f32 %v1190, %v1191
      %1199 = vadd.xlane.f32.xlu0 %v1198
      %v1200 = vpop.xlane.xlu0 %1199
      %v1201 = vadd.f32 %v1192, %v1193
      %1202 = vadd.xlane.f32.xlu0 %v1201
      %v1203 = vpop.xlane.xlu0 %1202
      %v1204 = vadd.f32 %v1194, %v1195
      %1205 = vadd.xlane.f32.xlu0 %v1204
      %v1206 = vpop.xlane.xlu0 %1205
      %v1207 = vadd.f32 %v1196, %v1197
      %1208 = vadd.xlane.f32.xlu0 %v1207
      %v1209 = vpop.xlane.xlu0 %1208
      %vm1210 = vcmask 7168
      %v1211 = vsel %vm1210, %v1180, %v1200
      %v1212 = vsel %vm1210, %v1183, %v1203
      %v1213 = vsel %vm1210, %v1186, %v1206
      %v1214 = vsel %vm1210, %v1189, %v1209
      %vm1215 = vcmask 261120
      %v1217 = vsel %vm1215, %v743, 0
      %v1220 = vsel %vm1215, %v744, 0
      %v1223 = vsel %vm1215, %v745, 0
      %v1226 = vsel %vm1215, %v746, 0
      %1228 = vmatprep.subr.mxu0 0.0
      %1229 = vmatpush1.msra.mxu0 %v1211
      %1230 = vmatprep.subr.mxu0 0.0
      %1231 = vmatpush1.msra.mxu0 %v1212
      %1232 = vmatprep.subr.mxu0 0.0
      %1233 = vmatpush1.msra.mxu0 %v1213
      %1234 = vmatprep.subr.mxu0 0.0
      %1235 = vmatpush1.msra.mxu0 %v1214
      %1236 = vmatprep.subr.mxu0 0.0
      %1237 = vmatpush1.msra.mxu0 0.0
      %1238 = vmatprep.subr.mxu0 0.0
      %1239 = vmatpush1.msra.mxu0 0.0
      %1240 = vmatprep.subr.mxu0 0.0
      %1241 = vmatpush1.msra.mxu0 0.0
      %1242 = vmatprep.subr.mxu0 0.0
      %1243 = vmatpush1.msra.mxu0 0.0
      %1244 = vmatprep.subr.mxu0 0.0
      %1245 = vmatpush1.msra.mxu0 0.0
      %1246 = vmatprep.subr.mxu0 0.0
      %1247 = vmatpush1.msra.mxu0 0.0
      %1248 = vmatprep.subr.mxu0 0.0
      %1249 = vmatpush1.msra.mxu0 0.0
      %1250 = vmatprep.subr.mxu0 0.0
      %1251 = vmatpush1.msra.mxu0 0.0
      %1252 = vmatprep.subr.mxu0 0.0
      %1253 = vmatpush1.msra.mxu0 0.0
      %1254 = vmatprep.subr.mxu0 0.0
      %1255 = vmatpush1.msra.mxu0 0.0
      %1256 = vmatprep.subr.mxu0 0.0
      %1257 = vmatpush1.msra.mxu0 0.0
      %1258 = vmatprep.subr.mxu0 0.0
      %1259 = vmatpush1.msra.mxu0 0.0
      %1260 = vmatprep.subr.mxu0 0.0
      %1261 = vmatpush1.msra.mxu0 0.0
      %1262 = vmatprep.subr.mxu0 0.0
      %1263 = vmatpush1.msra.mxu0 0.0
      %1264 = vmatprep.subr.mxu0 0.0
      %1265 = vmatpush1.msra.mxu0 0.0
      %1266 = vmatprep.subr.mxu0 0.0
      %1267 = vmatpush1.msra.mxu0 0.0
      %1268 = vmatprep.subr.mxu0 0.0
      %1269 = vmatpush1.msra.mxu0 0.0
      %1270 = vmatprep.subr.mxu0 0.0
      %1271 = vmatpush1.msra.mxu0 0.0
      %1272 = vmatprep.subr.mxu0 0.0
      %1273 = vmatpush1.msra.mxu0 0.0
      %1274 = vmatprep.subr.mxu0 0.0
      %1275 = vmatpush1.msra.mxu0 0.0
      %1276 = vmatprep.subr.mxu0 0.0
      %1277 = vmatpush1.msra.mxu0 0.0
      %1278 = vmatprep.subr.mxu0 0.0
      %1279 = vmatpush1.msra.mxu0 0.0
      %1280 = vmatprep.subr.mxu0 0.0
      %1281 = vmatpush1.msra.mxu0 0.0
      %1282 = vmatprep.subr.mxu0 0.0
      %1283 = vmatpush1.msra.mxu0 0.0
      %1284 = vmatprep.subr.mxu0 0.0
      %1285 = vmatpush1.msra.mxu0 0.0
      %1286 = vmatprep.subr.mxu0 0.0
      %1287 = vmatpush1.msra.mxu0 0.0
      %1288 = vmatprep.subr.mxu0 0.0
      %1289 = vmatpush1.msra.mxu0 0.0
      %1290 = vmatprep.subr.mxu0 0.0
      %1291 = vmatpush1.msra.mxu0 0.0
      %1292 = vmatprep.mubr.f32.mxu0 0.0
      %1293 = vmatmul.mubr.f32.gmra.mrb[0].mxu0 %v1217
      %v1294 = vpop.f32.mrb[0].mxu0
      %v1295 = vadd.f32 0.0, %v1294
      %v1296 = vpop.f32.mrb[0].mxu0
      %1297 = vmatprep.mubr.f32.mxu0 0.0
      %1298 = vmatmul.mubr.f32.gmra.mrb[0].mxu0 %v1220
      %v1299 = vpop.f32.mrb[0].mxu0
      %v1300 = vadd.f32 0.0, %v1299
      %v1301 = vpop.f32.mrb[0].mxu0
      %1302 = vmatprep.mubr.f32.mxu0 0.0
      %1303 = vmatmul.mubr.f32.gmra.mrb[0].mxu0 %v1223
      %v1304 = vpop.f32.mrb[0].mxu0
      %v1305 = vadd.f32 0.0, %v1304
      %v1306 = vpop.f32.mrb[0].mxu0
      %1307 = vmatprep.mubr.f32.mxu0 0.0
      %1308 = vmatmul.mubr.f32.gmra.mrb[0].mxu0 %v1226
      %v1309 = vpop.f32.mrb[0].mxu0
      %v1310 = vadd.f32 0.0, %v1309
      %v1311 = vpop.f32.mrb[0].mxu0
      %1312 = vdwg.mxu0
      %v1313 = vmul.f32 %v1295, 0.001953125
      %v1314 = vmul.f32 %v1300, 0.001953125
      %v1315 = vmul.f32 %v1305, 0.001953125
      %v1316 = vmul.f32 %v1310, 0.001953125
      %v1317 = vmul.f32 %v1313, %v1313
      %v1318 = vmul.f32 %v1314, %v1314
      %v1319 = vmul.f32 %v1315, %v1315
      %v1320 = vmul.f32 %v1316, %v1316
      %1325 = vrot.lane.b32.xlu0 %v1317, 1
      %v1326 = vpop.permute.xlu0 %1325
      %1327 = vrot.lane.b32.xlu0 %v1318, 1
      %v1328 = vpop.permute.xlu0 %1327
      %1329 = vrot.lane.b32.xlu0 %v1319, 1
      %v1330 = vpop.permute.xlu0 %1329
      %1331 = vrot.lane.b32.xlu0 %v1320, 1
      %v1332 = vpop.permute.xlu0 %1331
      %v1337 = vsub.f32 %v1313, %v1326
      %v1338 = vsub.f32 %v1314, %v1328
      %v1339 = vsub.f32 %v1315, %v1330
      %v1340 = vsub.f32 %v1316, %v1332
      %1342 = vset.pattern.permute.xlu0 0
      %1343 = vperm.xlu0 %1342, %v1313
      %v1344 = vpop.permute.xlu0 %1343
      %1347 = vset.pattern.permute.xlu0 0
      %1348 = vperm.xlu0 %1347, %v1314
      %v1349 = vpop.permute.xlu0 %1348
      %1352 = vset.pattern.permute.xlu0 0
      %1353 = vperm.xlu0 %1352, %v1315
      %v1354 = vpop.permute.xlu0 %1353
      %1357 = vset.pattern.permute.xlu0 0
      %1358 = vperm.xlu0 %1357, %v1316
      %v1359 = vpop.permute.xlu0 %1358
      %v1361 = vsub.f32 %v1152, %v1344
      %v1362 = vsub.f32 %v1154, %v1344
      %v1363 = vsub.f32 %v1156, %v1349
      %v1364 = vsub.f32 %v1158, %v1349
      %v1365 = vsub.f32 %v1162, %v1354
      %v1366 = vsub.f32 %v1164, %v1354
      %v1367 = vsub.f32 %v1166, %v1359
      %v1368 = vsub.f32 %v1168, %v1359
      %v1369 = vadd.f32 %v1337, 1e-06
      %v1370 = vadd.f32 %v1338, 1e-06
      %v1371 = vadd.f32 %v1339, 1e-06
      %v1372 = vadd.f32 %v1340, 1e-06
      %v1373 = vrsqrt.pop %v1369
      %v1374 = vrsqrt.pop %v1370
      %v1375 = vrsqrt.pop %v1371
      %v1376 = vrsqrt.pop %v1372
      %1378 = vset.pattern.permute.xlu0 1
      %1379 = vperm.xlu0 %1378, %v1373
      %v1380 = vpop.permute.xlu0 %1379
      %1383 = vset.pattern.permute.xlu0 1
      %1384 = vperm.xlu0 %1383, %v1374
      %v1385 = vpop.permute.xlu0 %1384
      %1388 = vset.pattern.permute.xlu0 1
      %1389 = vperm.xlu0 %1388, %v1375
      %v1390 = vpop.permute.xlu0 %1389
      %1393 = vset.pattern.permute.xlu0 1
      %1394 = vperm.xlu0 %1393, %v1376
      %v1395 = vpop.permute.xlu0 %1394
      %v1397 = vmul.f32 %v1361, %v1380
      %v1398 = vmul.f32 %v1362, %v1380
      %v1399 = vmul.f32 %v1363, %v1385
      %v1400 = vmul.f32 %v1364, %v1385
      %v1401 = vmul.f32 %v1365, %v1390
      %v1402 = vmul.f32 %v1366, %v1390
      %v1403 = vmul.f32 %v1367, %v1395
      %v1404 = vmul.f32 %v1368, %v1395
      %1406 = vset.pattern.permute.xlu0 0
      %1407 = vperm.xlu0 %1406, %v1170
      %v1408 = vpop.permute.xlu0 %1407
      %1411 = vset.pattern.permute.xlu0 0
      %1412 = vperm.xlu0 %1411, %v1171
      %v1413 = vpop.permute.xlu0 %1412
      %1416 = vset.pattern.permute.xlu0 0
      %1417 = vperm.xlu0 %1416, %v1172
      %v1418 = vpop.permute.xlu0 %1417
      %1421 = vset.pattern.permute.xlu0 0
      %1422 = vperm.xlu0 %1421, %v1173
      %v1423 = vpop.permute.xlu0 %1422
      %v1425 = vmul.f32 %v1397, %v1408
      %v1426 = vmul.f32 %v1398, %v1408
      %v1427 = vmul.f32 %v1399, %v1413
      %v1428 = vmul.f32 %v1400, %v1413
      %v1429 = vmul.f32 %v1401, %v1418
      %v1430 = vmul.f32 %v1402, %v1418
      %v1431 = vmul.f32 %v1403, %v1423
      %v1432 = vmul.f32 %v1404, %v1423
      %1434 = vset.pattern.permute.xlu0 0
      %1435 = vperm.xlu0 %1434, %v1174
      %v1436 = vpop.permute.xlu0 %1435
      %1439 = vset.pattern.permute.xlu0 0
      %1440 = vperm.xlu0 %1439, %v1175
      %v1441 = vpop.permute.xlu0 %1440
      %1444 = vset.pattern.permute.xlu0 0
      %1445 = vperm.xlu0 %1444, %v1176
      %v1446 = vpop.permute.xlu0 %1445
      %1449 = vset.pattern.permute.xlu0 0
      %1450 = vperm.xlu0 %1449, %v1177
      %v1451 = vpop.permute.xlu0 %1450
      %v1453 = vadd.f32 %v1425, %v1436
      %v1454 = vadd.f32 %v1426, %v1436
      %v1455 = vadd.f32 %v1427, %v1441
      %v1456 = vadd.f32 %v1428, %v1441
      %v1457 = vadd.f32 %v1429, %v1446
      %v1458 = vadd.f32 %v1430, %v1446
      %v1459 = vadd.f32 %v1431, %v1451
      %v1460 = vadd.f32 %v1432, %v1451
      %v1461 = vxor.u32 %v1453, 2147483648
      %v1462 = vxor.u32 %v1454, 2147483648
      %v1463 = vxor.u32 %v1455, 2147483648
      %v1464 = vxor.u32 %v1456, 2147483648
      %v1465 = vxor.u32 %v1457, 2147483648
      %v1466 = vxor.u32 %v1458, 2147483648
      %v1467 = vxor.u32 %v1459, 2147483648
      %v1468 = vxor.u32 %v1460, 2147483648
      %v1469 = vmul.f32 %v1461, 1.442695
      %v1470 = vpow.pop %v1469
      %v1471 = vmul.f32 %v1462, 1.442695
      %v1472 = vpow.pop %v1471
      %v1473 = vmul.f32 %v1463, 1.442695
      %v1474 = vpow.pop %v1473
      %v1475 = vmul.f32 %v1464, 1.442695
      %v1476 = vpow.pop %v1475
      %v1477 = vmul.f32 %v1465, 1.442695
      %v1478 = vpow.pop %v1477
      %v1479 = vmul.f32 %v1466, 1.442695
      %v1480 = vpow.pop %v1479
      %v1481 = vmul.f32 %v1467, 1.442695
      %v1482 = vpow.pop %v1481
      %v1483 = vmul.f32 %v1468, 1.442695
      %v1484 = vpow.pop %v1483
      %v1485 = vadd.f32 %v1470, 1.0
      %v1486 = vadd.f32 %v1472, 1.0
      %v1487 = vadd.f32 %v1474, 1.0
      %v1488 = vadd.f32 %v1476, 1.0
      %v1489 = vadd.f32 %v1478, 1.0
      %v1490 = vadd.f32 %v1480, 1.0
      %v1491 = vadd.f32 %v1482, 1.0
      %v1492 = vadd.f32 %v1484, 1.0
      %v1493 = vrcp.pop %v1485
      %v1494 = vmul.f32 1.0, %v1493
      %v1495 = vrcp.pop %v1486
      %v1496 = vmul.f32 1.0, %v1495
      %v1497 = vrcp.pop %v1487
      %v1498 = vmul.f32 1.0, %v1497
      %v1499 = vrcp.pop %v1488
      %v1500 = vmul.f32 1.0, %v1499
      %v1501 = vrcp.pop %v1489
      %v1502 = vmul.f32 1.0, %v1501
      %v1503 = vrcp.pop %v1490
      %v1504 = vmul.f32 1.0, %v1503
      %v1505 = vrcp.pop %v1491
      %v1506 = vmul.f32 1.0, %v1505
      %v1507 = vrcp.pop %v1492
      %v1508 = vmul.f32 1.0, %v1507
      %v1509 = vmul.f32 %v1453, %v1494
      %v1510 = vmul.f32 %v1454, %v1496
      %v1511 = vmul.f32 %v1455, %v1498
      %v1512 = vmul.f32 %v1456, %v1500
      %v1513 = vmul.f32 %v1457, %v1502
      %v1514 = vmul.f32 %v1458, %v1504
      %v1515 = vmul.f32 %v1459, %v1506
      %v1516 = vmul.f32 %v1460, %v1508
      %v1517 = vld [vmem:[%s10] sm:$0xff]
      %v1518 = vld [vmem:[%s10 + $0x8] sm:$0xf]
      %v1519 = vld [vmem:[%s10 + $0xc] sm:$0xff]
      %v1520 = vld [vmem:[%s10 + $0x14] sm:$0xf]
      %v1521 = vld [vmem:[%s10 + $0x18] sm:$0xff]
      %v1522 = vld [vmem:[%s10 + $0x20] sm:$0xf]
      %v1523 = vld [vmem:[%s10 + $0x24] sm:$0xff]
      %v1524 = vld [vmem:[%s10 + $0x2c] sm:$0xf]
      %v1525 = vld [vmem:[%s11] sm:$0xff]
      %v1526 = vld [vmem:[%s11 + $0x8] sm:$0xff]
      %v1527 = vld [vmem:[%s11 + $0x10] sm:$0xff]
      %v1528 = vld [vmem:[%s11 + $0x18] sm:$0xff]
      %1529 = vrot.lane.b32.xlu0 %v1509, 17
      %v1530 = vpop.permute.xlu0 %1529
      %1531 = vrot.lane.b32.xlu0 %v1511, 17
      %v1532 = vpop.permute.xlu0 %1531
      %1533 = vrot.lane.b32.xlu0 %v1513, 17
      %v1534 = vpop.permute.xlu0 %1533
      %1535 = vrot.lane.b32.xlu0 %v1515, 17
      %v1536 = vpop.permute.xlu0 %1535
      %1537 = vrot.lane.b32.xlu0 %v1510, 17
      %v1538 = vpop.permute.xlu0 %1537
      %1539 = vrot.lane.b32.xlu0 %v1512, 17
      %v1540 = vpop.permute.xlu0 %1539
      %1541 = vrot.lane.b32.xlu0 %v1514, 17
      %v1542 = vpop.permute.xlu0 %1541
      %1543 = vrot.lane.b32.xlu0 %v1516, 17
      %v1544 = vpop.permute.xlu0 %1543
      %v1545 = vsel %vm862, %v1530, %v1538
      %v1546 = vsel %vm862, %v1532, %v1540
      %v1547 = vsel %vm862, %v1534, %v1542
      %v1548 = vsel %vm862, %v1536, %v1544
      %v1549 = vsel %vm862, %v1538, %v1530
      %v1550 = vsel %vm862, %v1540, %v1532
      %v1551 = vsel %vm862, %v1542, %v1534
      %v1552 = vsel %vm862, %v1544, %v1536
      %v1553 = vmul.f32 %v1549, %v870
      %v1554 = vmul.f32 %v1545, %v874
      %v1555 = vmul.f32 %v1550, %v870
      %v1556 = vmul.f32 %v1546, %v874
      %v1557 = vmul.f32 %v1551, %v870
      %v1558 = vmul.f32 %v1547, %v874
      %v1559 = vmul.f32 %v1552, %v870
      %v1560 = vmul.f32 %v1548, %v874
      %v1561 = vpack.c.bf16 %v1555, %v1553
      %v1562 = vpack.c.bf16 %v1556, %v1554
      %v1563 = vpack.c.bf16 %v1559, %v1557
      %v1564 = vpack.c.bf16 %v1560, %v1558
      %1565 = vrot.lane.b32.xlu0 %v1509, 16
      %v1566 = vpop.permute.xlu0 %1565
      %1567 = vrot.lane.b32.xlu0 %v1511, 16
      %v1568 = vpop.permute.xlu0 %1567
      %1569 = vrot.lane.b32.xlu0 %v1513, 16
      %v1570 = vpop.permute.xlu0 %1569
      %1571 = vrot.lane.b32.xlu0 %v1515, 16
      %v1572 = vpop.permute.xlu0 %1571
      %1573 = vrot.lane.b32.xlu0 %v1510, 16
      %v1574 = vpop.permute.xlu0 %1573
      %1575 = vrot.lane.b32.xlu0 %v1512, 16
      %v1576 = vpop.permute.xlu0 %1575
      %1577 = vrot.lane.b32.xlu0 %v1514, 16
      %v1578 = vpop.permute.xlu0 %1577
      %1579 = vrot.lane.b32.xlu0 %v1516, 16
      %v1580 = vpop.permute.xlu0 %1579
      %v1581 = vsel %vm889, %v1566, %v1574
      %v1582 = vsel %vm889, %v1568, %v1576
      %v1583 = vsel %vm889, %v1570, %v1578
      %v1584 = vsel %vm889, %v1572, %v1580
      %v1585 = vsel %vm889, %v1574, %v1566
      %v1586 = vsel %vm889, %v1576, %v1568
      %v1587 = vsel %vm889, %v1578, %v1570
      %v1588 = vsel %vm889, %v1580, %v1572
      %v1589 = vmul.f32 %v1585, %v897
      %v1590 = vmul.f32 %v1581, %v901
      %v1591 = vmul.f32 %v1586, %v897
      %v1592 = vmul.f32 %v1582, %v901
      %v1593 = vmul.f32 %v1587, %v897
      %v1594 = vmul.f32 %v1583, %v901
      %v1595 = vmul.f32 %v1588, %v897
      %v1596 = vmul.f32 %v1584, %v901
      %v1597 = vpack.c.bf16 %v1591, %v1589
      %v1598 = vpack.c.bf16 %v1592, %v1590
      %v1599 = vpack.c.bf16 %v1595, %v1593
      %v1600 = vpack.c.bf16 %v1596, %v1594
      %1601 = vrot.lane.b32.xlu0 %v1509, 15
      %v1602 = vpop.permute.xlu0 %1601
      %1603 = vrot.lane.b32.xlu0 %v1511, 15
      %v1604 = vpop.permute.xlu0 %1603
      %1605 = vrot.lane.b32.xlu0 %v1513, 15
      %v1606 = vpop.permute.xlu0 %1605
      %1607 = vrot.lane.b32.xlu0 %v1515, 15
      %v1608 = vpop.permute.xlu0 %1607
      %1609 = vrot.lane.b32.xlu0 %v1510, 15
      %v1610 = vpop.permute.xlu0 %1609
      %1611 = vrot.lane.b32.xlu0 %v1512, 15
      %v1612 = vpop.permute.xlu0 %1611
      %1613 = vrot.lane.b32.xlu0 %v1514, 15
      %v1614 = vpop.permute.xlu0 %1613
      %1615 = vrot.lane.b32.xlu0 %v1516, 15
      %v1616 = vpop.permute.xlu0 %1615
      %v1617 = vsel %vm916, %v1602, %v1610
      %v1618 = vsel %vm916, %v1604, %v1612
      %v1619 = vsel %vm916, %v1606, %v1614
      %v1620 = vsel %vm916, %v1608, %v1616
      %v1621 = vsel %vm916, %v1610, %v1602
      %v1622 = vsel %vm916, %v1612, %v1604
      %v1623 = vsel %vm916, %v1614, %v1606
      %v1624 = vsel %vm916, %v1616, %v1608
      %v1625 = vmul.f32 %v1621, %v924
      %v1626 = vmul.f32 %v1617, %v928
      %v1627 = vmul.f32 %v1622, %v924
      %v1628 = vmul.f32 %v1618, %v928
      %v1629 = vmul.f32 %v1623, %v924
      %v1630 = vmul.f32 %v1619, %v928
      %v1631 = vmul.f32 %v1624, %v924
      %v1632 = vmul.f32 %v1620, %v928
      %v1633 = vpack.c.bf16 %v1627, %v1625
      %v1634 = vpack.c.bf16 %v1628, %v1626
      %v1635 = vpack.c.bf16 %v1631, %v1629
      %v1636 = vpack.c.bf16 %v1632, %v1630
      %1637 = vrot.lane.b32.xlu0 %v1509, 1
      %v1638 = vpop.permute.xlu0 %1637
      %1639 = vrot.lane.b32.xlu0 %v1511, 1
      %v1640 = vpop.permute.xlu0 %1639
      %1641 = vrot.lane.b32.xlu0 %v1513, 1
      %v1642 = vpop.permute.xlu0 %1641
      %1643 = vrot.lane.b32.xlu0 %v1515, 1
      %v1644 = vpop.permute.xlu0 %1643
      %1645 = vrot.lane.b32.xlu0 %v1510, 1
      %v1646 = vpop.permute.xlu0 %1645
      %1647 = vrot.lane.b32.xlu0 %v1512, 1
      %v1648 = vpop.permute.xlu0 %1647
      %1649 = vrot.lane.b32.xlu0 %v1514, 1
      %v1650 = vpop.permute.xlu0 %1649
      %1651 = vrot.lane.b32.xlu0 %v1516, 1
      %v1652 = vpop.permute.xlu0 %1651
      %v1653 = vsel %vm943, %v1638, %v1646
      %v1654 = vsel %vm943, %v1640, %v1648
      %v1655 = vsel %vm943, %v1642, %v1650
      %v1656 = vsel %vm943, %v1644, %v1652
      %v1657 = vsel %vm943, %v1646, %v1638
      %v1658 = vsel %vm943, %v1648, %v1640
      %v1659 = vsel %vm943, %v1650, %v1642
      %v1660 = vsel %vm943, %v1652, %v1644
      %v1661 = vmul.f32 %v1657, %v951
      %v1662 = vmul.f32 %v1653, %v955
      %v1663 = vmul.f32 %v1658, %v951
      %v1664 = vmul.f32 %v1654, %v955
      %v1665 = vmul.f32 %v1659, %v951
      %v1666 = vmul.f32 %v1655, %v955
      %v1667 = vmul.f32 %v1660, %v951
      %v1668 = vmul.f32 %v1656, %v955
      %v1669 = vpack.c.bf16 %v1663, %v1661
      %v1670 = vpack.c.bf16 %v1664, %v1662
      %v1671 = vpack.c.bf16 %v1667, %v1665
      %v1672 = vpack.c.bf16 %v1668, %v1666
      %v1673 = vpack.c.bf16 %v1511, %v1509
      %v1674 = vpack.c.bf16 %v1512, %v1510
      %v1675 = vpack.c.bf16 %v1515, %v1513
      %v1676 = vpack.c.bf16 %v1516, %v1514
      %1677 = vrot.lane.b32.xlu0 %v1509, 127
      %v1678 = vpop.permute.xlu0 %1677
      %1679 = vrot.lane.b32.xlu0 %v1511, 127
      %v1680 = vpop.permute.xlu0 %1679
      %1681 = vrot.lane.b32.xlu0 %v1513, 127
      %v1682 = vpop.permute.xlu0 %1681
      %1683 = vrot.lane.b32.xlu0 %v1515, 127
      %v1684 = vpop.permute.xlu0 %1683
      %1685 = vrot.lane.b32.xlu0 %v1510, 127
      %v1686 = vpop.permute.xlu0 %1685
      %1687 = vrot.lane.b32.xlu0 %v1512, 127
      %v1688 = vpop.permute.xlu0 %1687
      %1689 = vrot.lane.b32.xlu0 %v1514, 127
      %v1690 = vpop.permute.xlu0 %1689
      %1691 = vrot.lane.b32.xlu0 %v1516, 127
      %v1692 = vpop.permute.xlu0 %1691
      %v1693 = vsel %vm972, %v1678, %v1686
      %v1694 = vsel %vm972, %v1680, %v1688
      %v1695 = vsel %vm972, %v1682, %v1690
      %v1696 = vsel %vm972, %v1684, %v1692
      %v1697 = vsel %vm972, %v1686, %v1678
      %v1698 = vsel %vm972, %v1688, %v1680
      %v1699 = vsel %vm972, %v1690, %v1682
      %v1700 = vsel %vm972, %v1692, %v1684
      %v1701 = vmul.f32 %v1693, %v980
      %v1702 = vmul.f32 %v1697, %v984
      %v1703 = vmul.f32 %v1694, %v980
      %v1704 = vmul.f32 %v1698, %v984
      %v1705 = vmul.f32 %v1695, %v980
      %v1706 = vmul.f32 %v1699, %v984
      %v1707 = vmul.f32 %v1696, %v980
      %v1708 = vmul.f32 %v1700, %v984
      %v1709 = vpack.c.bf16 %v1703, %v1701
      %v1710 = vpack.c.bf16 %v1704, %v1702
      %v1711 = vpack.c.bf16 %v1707, %v1705
      %v1712 = vpack.c.bf16 %v1708, %v1706
      %1713 = vrot.lane.b32.xlu0 %v1509, 113
      %v1714 = vpop.permute.xlu0 %1713
      %1715 = vrot.lane.b32.xlu0 %v1511, 113
      %v1716 = vpop.permute.xlu0 %1715
      %1717 = vrot.lane.b32.xlu0 %v1513, 113
      %v1718 = vpop.permute.xlu0 %1717
      %1719 = vrot.lane.b32.xlu0 %v1515, 113
      %v1720 = vpop.permute.xlu0 %1719
      %1721 = vrot.lane.b32.xlu0 %v1510, 113
      %v1722 = vpop.permute.xlu0 %1721
      %1723 = vrot.lane.b32.xlu0 %v1512, 113
      %v1724 = vpop.permute.xlu0 %1723
      %1725 = vrot.lane.b32.xlu0 %v1514, 113
      %v1726 = vpop.permute.xlu0 %1725
      %1727 = vrot.lane.b32.xlu0 %v1516, 113
      %v1728 = vpop.permute.xlu0 %1727
      %v1729 = vsel %vm999, %v1714, %v1722
      %v1730 = vsel %vm999, %v1716, %v1724
      %v1731 = vsel %vm999, %v1718, %v1726
      %v1732 = vsel %vm999, %v1720, %v1728
      %v1733 = vsel %vm999, %v1722, %v1714
      %v1734 = vsel %vm999, %v1724, %v1716
      %v1735 = vsel %vm999, %v1726, %v1718
      %v1736 = vsel %vm999, %v1728, %v1720
      %v1737 = vmul.f32 %v1729, %v1007
      %v1738 = vmul.f32 %v1733, %v1011
      %v1739 = vmul.f32 %v1730, %v1007
      %v1740 = vmul.f32 %v1734, %v1011
      %v1741 = vmul.f32 %v1731, %v1007
      %v1742 = vmul.f32 %v1735, %v1011
      %v1743 = vmul.f32 %v1732, %v1007
      %v1744 = vmul.f32 %v1736, %v1011
      %v1745 = vpack.c.bf16 %v1739, %v1737
      %v1746 = vpack.c.bf16 %v1740, %v1738
      %v1747 = vpack.c.bf16 %v1743, %v1741
      %v1748 = vpack.c.bf16 %v1744, %v1742
      %1749 = vrot.lane.b32.xlu0 %v1509, 112
      %v1750 = vpop.permute.xlu0 %1749
      %1751 = vrot.lane.b32.xlu0 %v1511, 112
      %v1752 = vpop.permute.xlu0 %1751
      %1753 = vrot.lane.b32.xlu0 %v1513, 112
      %v1754 = vpop.permute.xlu0 %1753
      %1755 = vrot.lane.b32.xlu0 %v1515, 112
      %v1756 = vpop.permute.xlu0 %1755
      %1757 = vrot.lane.b32.xlu0 %v1510, 112
      %v1758 = vpop.permute.xlu0 %1757
      %1759 = vrot.lane.b32.xlu0 %v1512, 112
      %v1760 = vpop.permute.xlu0 %1759
      %1761 = vrot.lane.b32.xlu0 %v1514, 112
      %v1762 = vpop.permute.xlu0 %1761
      %1763 = vrot.lane.b32.xlu0 %v1516, 112
      %v1764 = vpop.permute.xlu0 %1763
      %v1765 = vsel %vm1026, %v1750, %v1758
      %v1766 = vsel %vm1026, %v1752, %v1760
      %v1767 = vsel %vm1026, %v1754, %v1762
      %v1768 = vsel %vm1026, %v1756, %v1764
      %v1769 = vsel %vm1026, %v1758, %v1750
      %v1770 = vsel %vm1026, %v1760, %v1752
      %v1771 = vsel %vm1026, %v1762, %v1754
      %v1772 = vsel %vm1026, %v1764, %v1756
      %v1773 = vmul.f32 %v1765, %v1034
      %v1774 = vmul.f32 %v1769, %v1038
      %v1775 = vmul.f32 %v1766, %v1034
      %v1776 = vmul.f32 %v1770, %v1038
      %v1777 = vmul.f32 %v1767, %v1034
      %v1778 = vmul.f32 %v1771, %v1038
      %v1779 = vmul.f32 %v1768, %v1034
      %v1780 = vmul.f32 %v1772, %v1038
      %v1781 = vpack.c.bf16 %v1775, %v1773
      %v1782 = vpack.c.bf16 %v1776, %v1774
      %v1783 = vpack.c.bf16 %v1779, %v1777
      %v1784 = vpack.c.bf16 %v1780, %v1778
      %1785 = vrot.lane.b32.xlu0 %v1509, 111
      %v1786 = vpop.permute.xlu0 %1785
      %1787 = vrot.lane.b32.xlu0 %v1511, 111
      %v1788 = vpop.permute.xlu0 %1787
      %1789 = vrot.lane.b32.xlu0 %v1513, 111
      %v1790 = vpop.permute.xlu0 %1789
      %1791 = vrot.lane.b32.xlu0 %v1515, 111
      %v1792 = vpop.permute.xlu0 %1791
      %1793 = vrot.lane.b32.xlu0 %v1510, 111
      %v1794 = vpop.permute.xlu0 %1793
      %1795 = vrot.lane.b32.xlu0 %v1512, 111
      %v1796 = vpop.permute.xlu0 %1795
      %1797 = vrot.lane.b32.xlu0 %v1514, 111
      %v1798 = vpop.permute.xlu0 %1797
      %1799 = vrot.lane.b32.xlu0 %v1516, 111
      %v1800 = vpop.permute.xlu0 %1799
      %v1801 = vsel %vm1053, %v1786, %v1794
      %v1802 = vsel %vm1053, %v1788, %v1796
      %v1803 = vsel %vm1053, %v1790, %v1798
      %v1804 = vsel %vm1053, %v1792, %v1800
      %v1805 = vsel %vm1053, %v1794, %v1786
      %v1806 = vsel %vm1053, %v1796, %v1788
      %v1807 = vsel %vm1053, %v1798, %v1790
      %v1808 = vsel %vm1053, %v1800, %v1792
      %v1809 = vmul.f32 %v1801, %v1061
      %v1810 = vmul.f32 %v1805, %v1065
      %v1811 = vmul.f32 %v1802, %v1061
      %v1812 = vmul.f32 %v1806, %v1065
      %v1813 = vmul.f32 %v1803, %v1061
      %v1814 = vmul.f32 %v1807, %v1065
      %v1815 = vmul.f32 %v1804, %v1061
      %v1816 = vmul.f32 %v1808, %v1065
      %v1817 = vpack.c.bf16 %v1811, %v1809
      %v1818 = vpack.c.bf16 %v1812, %v1810
      %v1819 = vpack.c.bf16 %v1815, %v1813
      %v1820 = vpack.c.bf16 %v1816, %v1814
      %1822 = vset.pattern.permute.xlu0 0
      %1823 = vperm.xlu0 %1822, %v1525
      %v1824 = vpop.permute.xlu0 %1823
      %1827 = vset.pattern.permute.xlu0 0
      %1828 = vperm.xlu0 %1827, %v1526
      %v1829 = vpop.permute.xlu0 %1828
      %1832 = vset.pattern.permute.xlu0 0
      %1833 = vperm.xlu0 %1832, %v1527
      %v1834 = vpop.permute.xlu0 %1833
      %1837 = vset.pattern.permute.xlu0 0
      %1838 = vperm.xlu0 %1837, %v1528
      %v1839 = vpop.permute.xlu0 %1838
      %v1849 = vunpack.c.l.b16 %v1517
      %v1850 = vunpack.c.h.b16 %v1517
      %v1851 = vunpack.c.l.b16 %v1518
      %v1852 = vunpack.c.l.b16 %v1519
      %v1853 = vunpack.c.h.b16 %v1519
      %v1854 = vunpack.c.l.b16 %v1520
      %v1855 = vunpack.c.l.b16 %v1521
      %v1856 = vunpack.c.h.b16 %v1521
      %v1857 = vunpack.c.l.b16 %v1522
      %v1858 = vunpack.c.l.b16 %v1523
      %v1859 = vunpack.c.h.b16 %v1523
      %v1860 = vunpack.c.l.b16 %v1524
      %v1861 = vpack.c.b16 %v1852, %v1849
      %v1862 = vpack.c.b16 %v1853, %v1850
      %v1863 = vpack.c.b16 %v1854, %v1851
      %v1864 = vpack.c.b16 %v1858, %v1855
      %v1865 = vpack.c.b16 %v1859, %v1856
      %v1866 = vpack.c.b16 %v1860, %v1857
      %v1872 = vsel %vm1215, %v1863, 0
      %v1875 = vsel %vm1215, %v1866, 0
      %1877 = vmatprep.subr.bf16.mxu0 %v1562
      %1878 = vmatpush1.bf16.msra.mxu0 %v1561
      %1879 = vmatprep.subr.bf16.mxu0 %v1564
      %1880 = vmatpush1.bf16.msra.mxu0 %v1563
      %1881 = vmatprep.subr.bf16.mxu0 %v1598
      %1882 = vmatpush1.bf16.msra.mxu0 %v1597
      %1883 = vmatprep.subr.bf16.mxu0 %v1600
      %1884 = vmatpush1.bf16.msra.mxu0 %v1599
      %1885 = vmatprep.subr.bf16.mxu0 %v1634
      %1886 = vmatpush1.bf16.msra.mxu0 %v1633
      %1887 = vmatprep.subr.bf16.mxu0 %v1636
      %1888 = vmatpush1.bf16.msra.mxu0 %v1635
      %1889 = vmatprep.subr.bf16.mxu0 %v1670
      %1890 = vmatpush1.bf16.msra.mxu0 %v1669
      %1891 = vmatprep.subr.bf16.mxu0 %v1672
      %1892 = vmatpush1.bf16.msra.mxu0 %v1671
      %1893 = vmatprep.subr.bf16.mxu0 %v1674
      %1894 = vmatpush1.bf16.msra.mxu0 %v1673
      %1895 = vmatprep.subr.bf16.mxu0 %v1676
      %1896 = vmatpush1.bf16.msra.mxu0 %v1675
      %1897 = vmatprep.subr.bf16.mxu0 %v1710
      %1898 = vmatpush1.bf16.msra.mxu0 %v1709
      %1899 = vmatprep.subr.bf16.mxu0 %v1712
      %1900 = vmatpush1.bf16.msra.mxu0 %v1711
      %1901 = vmatprep.subr.bf16.mxu0 %v1746
      %1902 = vmatpush1.bf16.msra.mxu0 %v1745
      %1903 = vmatprep.subr.bf16.mxu0 %v1748
      %1904 = vmatpush1.bf16.msra.mxu0 %v1747
      %1905 = vmatprep.subr.bf16.mxu0 %v1782
      %1906 = vmatpush1.bf16.msra.mxu0 %v1781
      %1907 = vmatprep.subr.bf16.mxu0 %v1784
      %1908 = vmatpush1.bf16.msra.mxu0 %v1783
      %1909 = vmatprep.mubr.bf16.mxu0 %v1862
      %1910 = vmatmul.mubr.bf16.gmra.mrb[0].mxu0 %v1861
      %v1911 = vpop.f32.mrb[0].mxu0
      %v1912 = vadd.f32 %v1824, %v1911
      %v1913 = vpop.f32.mrb[0].mxu0
      %v1914 = vadd.f32 %v1824, %v1913
      %v1915 = vpop.f32.mrb[0].mxu0
      %v1916 = vadd.f32 %v1829, %v1915
      %v1917 = vpop.f32.mrb[0].mxu0
      %v1918 = vadd.f32 %v1829, %v1917
      %1919 = vmatprep.mubr.bf16.mxu0 %v1865
      %1920 = vmatmul.mubr.bf16.gmra.mrb[0].mxu0 %v1864
      %v1921 = vpop.f32.mrb[0].mxu0
      %v1922 = vadd.f32 %v1834, %v1921
      %v1923 = vpop.f32.mrb[0].mxu0
      %v1924 = vadd.f32 %v1834, %v1923
      %v1925 = vpop.f32.mrb[0].mxu0
      %v1926 = vadd.f32 %v1839, %v1925
      %v1927 = vpop.f32.mrb[0].mxu0
      %v1928 = vadd.f32 %v1839, %v1927
      %1929 = vdwg.mxu0
      %1930 = vmatprep.subr.bf16.mxu0 %v1818
      %1931 = vmatpush1.bf16.msra.mxu0 %v1817
      %1932 = vmatprep.subr.bf16.mxu0 %v1820
      %1933 = vmatpush1.bf16.msra.mxu0 %v1819
      %1934 = vmatprep.subr.bf16.mxu0 0
      %1935 = vmatpush1.bf16.msra.mxu0 0
      %1936 = vmatprep.subr.bf16.mxu0 0
      %1937 = vmatpush1.bf16.msra.mxu0 0
      %1938 = vmatprep.subr.bf16.mxu0 0
      %1939 = vmatpush1.bf16.msra.mxu0 0
      %1940 = vmatprep.subr.bf16.mxu0 0
      %1941 = vmatpush1.bf16.msra.mxu0 0
      %1942 = vmatprep.subr.bf16.mxu0 0
      %1943 = vmatpush1.bf16.msra.mxu0 0
      %1944 = vmatprep.subr.bf16.mxu0 0
      %1945 = vmatpush1.bf16.msra.mxu0 0
      %1946 = vmatprep.subr.bf16.mxu0 0
      %1947 = vmatpush1.bf16.msra.mxu0 0
      %1948 = vmatprep.subr.bf16.mxu0 0
      %1949 = vmatpush1.bf16.msra.mxu0 0
      %1950 = vmatprep.subr.bf16.mxu0 0
      %1951 = vmatpush1.bf16.msra.mxu0 0
      %1952 = vmatprep.subr.bf16.mxu0 0
      %1953 = vmatpush1.bf16.msra.mxu0 0
      %1954 = vmatprep.subr.bf16.mxu0 0
      %1955 = vmatpush1.bf16.msra.mxu0 0
      %1956 = vmatprep.subr.bf16.mxu0 0
      %1957 = vmatpush1.bf16.msra.mxu0 0
      %1958 = vmatprep.subr.bf16.mxu0 0
      %1959 = vmatpush1.bf16.msra.mxu0 0
      %1960 = vmatprep.subr.bf16.mxu0 0
      %1961 = vmatpush1.bf16.msra.mxu0 0
      %1962 = vmatprep.mubr.bf16.mxu0 0
      %1963 = vmatmul.mubr.bf16.gmra.mrb[0].mxu0 %v1872
      %v1964 = vpop.f32.mrb[0].mxu0
      %v1965 = vadd.f32 %v1912, %v1964
      %v1966 = vpop.f32.mrb[0].mxu0
      %v1967 = vadd.f32 %v1914, %v1966
      %v1968 = vpop.f32.mrb[0].mxu0
      %v1969 = vadd.f32 %v1916, %v1968
      %v1970 = vpop.f32.mrb[0].mxu0
      %v1971 = vadd.f32 %v1918, %v1970
      %1972 = vmatprep.mubr.bf16.mxu0 0
      %1973 = vmatmul.mubr.bf16.gmra.mrb[0].mxu0 %v1875
      %v1974 = vpop.f32.mrb[0].mxu0
      %v1975 = vadd.f32 %v1922, %v1974
      %v1976 = vpop.f32.mrb[0].mxu0
      %v1977 = vadd.f32 %v1924, %v1976
      %v1978 = vpop.f32.mrb[0].mxu0
      %v1979 = vadd.f32 %v1926, %v1978
      %v1980 = vpop.f32.mrb[0].mxu0
      %v1981 = vadd.f32 %v1928, %v1980
      %1982 = vdwg.mxu0
      %v1983 = vld [vmem:[%s12] sm:$0xf]
      %v1984 = vld [vmem:[%s12 + $0x4] sm:$0xf]
      %v1985 = vld [vmem:[%s12 + $0x8] sm:$0xf]
      %v1986 = vld [vmem:[%s12 + $0xc] sm:$0xf]
      %v1987 = vpack.c.bf16 %v741, %v739
      %v1988 = vpack.c.bf16 %v742, %v740
      %v1989 = vld [vmem:[%s13] sm:$0xff]
      %v1990 = vld [vmem:[%s13 + $0x8] sm:$0xff]
      %v1991 = vld [vmem:[%s13 + $0x10] sm:$0xff]
      %v1992 = vld [vmem:[%s13 + $0x18] sm:$0xff]
      %1994 = vset.pattern.permute.xlu0 0
      %1995 = vperm.xlu0 %1994, %v1989
      %v1996 = vpop.permute.xlu0 %1995
      %1999 = vset.pattern.permute.xlu0 0
      %2000 = vperm.xlu0 %1999, %v1990
      %v2001 = vpop.permute.xlu0 %2000
      %2004 = vset.pattern.permute.xlu0 0
      %2005 = vperm.xlu0 %2004, %v1991
      %v2006 = vpop.permute.xlu0 %2005
      %2009 = vset.pattern.permute.xlu0 0
      %2010 = vperm.xlu0 %2009, %v1992
      %v2011 = vpop.permute.xlu0 %2010
      %v2017 = vunpack.c.l.b16 %v1983
      %v2018 = vunpack.c.l.b16 %v1984
      %v2019 = vunpack.c.l.b16 %v1985
      %v2020 = vunpack.c.l.b16 %v1986
      %v2021 = vpack.c.b16 %v2018, %v2017
      %v2022 = vpack.c.b16 %v2020, %v2019
      %v2024 = vsel %vm1110, %v2021, 0
      %v2027 = vsel %vm1110, %v2022, 0
      %2029 = vmatprep.subr.bf16.mxu0 %v1988
      %2030 = vmatpush1.bf16.msra.mxu0 %v1987
      %2031 = vmatprep.subr.bf16.mxu0 0
      %2032 = vmatpush1.bf16.msra.mxu0 0
      %2033 = vmatprep.subr.bf16.mxu0 0
      %2034 = vmatpush1.bf16.msra.mxu0 0
      %2035 = vmatprep.subr.bf16.mxu0 0
      %2036 = vmatpush1.bf16.msra.mxu0 0
      %2037 = vmatprep.subr.bf16.mxu0 0
      %2038 = vmatpush1.bf16.msra.mxu0 0
      %2039 = vmatprep.subr.bf16.mxu0 0
      %2040 = vmatpush1.bf16.msra.mxu0 0
      %2041 = vmatprep.subr.bf16.mxu0 0
      %2042 = vmatpush1.bf16.msra.mxu0 0
      %2043 = vmatprep.subr.bf16.mxu0 0
      %2044 = vmatpush1.bf16.msra.mxu0 0
      %2045 = vmatprep.subr.bf16.mxu0 0
      %2046 = vmatpush1.bf16.msra.mxu0 0
      %2047 = vmatprep.subr.bf16.mxu0 0
      %2048 = vmatpush1.bf16.msra.mxu0 0
      %2049 = vmatprep.subr.bf16.mxu0 0
      %2050 = vmatpush1.bf16.msra.mxu0 0
      %2051 = vmatprep.subr.bf16.mxu0 0
      %2052 = vmatpush1.bf16.msra.mxu0 0
      %2053 = vmatprep.subr.bf16.mxu0 0
      %2054 = vmatpush1.bf16.msra.mxu0 0
      %2055 = vmatprep.subr.bf16.mxu0 0
      %2056 = vmatpush1.bf16.msra.mxu0 0
      %2057 = vmatprep.subr.bf16.mxu0 0
      %2058 = vmatpush1.bf16.msra.mxu0 0
      %2059 = vmatprep.subr.bf16.mxu0 0
      %2060 = vmatpush1.bf16.msra.mxu0 0
      %2061 = vmatprep.mubr.bf16.mxu0 0
      %2062 = vmatmul.mubr.bf16.gmra.mrb[0].mxu0 %v2024
      %v2063 = vpop.f32.mrb[0].mxu0
      %v2064 = vadd.f32 %v1996, %v2063
      %v2065 = vpop.f32.mrb[0].mxu0
      %v2066 = vadd.f32 %v1996, %v2065
      %v2067 = vpop.f32.mrb[0].mxu0
      %v2068 = vadd.f32 %v2001, %v2067
      %v2069 = vpop.f32.mrb[0].mxu0
      %v2070 = vadd.f32 %v2001, %v2069
      %2071 = vmatprep.mubr.bf16.mxu0 0
      %2072 = vmatmul.mubr.bf16.gmra.mrb[0].mxu0 %v2027
      %v2073 = vpop.f32.mrb[0].mxu0
      %v2074 = vadd.f32 %v2006, %v2073
      %v2075 = vpop.f32.mrb[0].mxu0
      %v2076 = vadd.f32 %v2006, %v2075
      %v2077 = vpop.f32.mrb[0].mxu0
      %v2078 = vadd.f32 %v2011, %v2077
      %v2079 = vpop.f32.mrb[0].mxu0
      %v2080 = vadd.f32 %v2011, %v2079
      %2081 = vdwg.mxu0
      %v2082 = vadd.f32 %v1965, %v2064
      %v2083 = vadd.f32 %v1967, %v2066
      %v2084 = vadd.f32 %v1969, %v2068
      %v2085 = vadd.f32 %v1971, %v2070
      %v2086 = vadd.f32 %v1975, %v2074
      %v2087 = vadd.f32 %v1977, %v2076
      %v2088 = vadd.f32 %v1979, %v2078
      %v2089 = vadd.f32 %v1981, %v2080
      %v2090 = vld [vmem:[%s14] sm:$0xff]
      %v2091 = vld [vmem:[%s14 + $0x8] sm:$0xff]
      %v2092 = vld [vmem:[%s14 + $0x10] sm:$0xff]
      %v2093 = vld [vmem:[%s14 + $0x18] sm:$0xff]
      %v2094 = vld [vmem:[%s15] sm:$0xff]
      %v2095 = vld [vmem:[%s15 + $0x8] sm:$0xff]
      %v2096 = vld [vmem:[%s15 + $0x10] sm:$0xff]
      %v2097 = vld [vmem:[%s15 + $0x18] sm:$0xff]
      %v2098 = vadd.f32 %v2082, %v2083
      %2099 = vadd.xlane.f32.xlu0 %v2098
      %v2100 = vpop.xlane.xlu0 %2099
      %v2101 = vadd.f32 %v2084, %v2085
      %2102 = vadd.xlane.f32.xlu0 %v2101
      %v2103 = vpop.xlane.xlu0 %2102
      %v2104 = vadd.f32 %v2086, %v2087
      %2105 = vadd.xlane.f32.xlu0 %v2104
      %v2106 = vpop.xlane.xlu0 %2105
      %v2107 = vadd.f32 %v2088, %v2089
      %2108 = vadd.xlane.f32.xlu0 %v2107
      %v2109 = vpop.xlane.xlu0 %2108
      %v2110 = vmul.f32 %v2082, %v2082
      %v2111 = vmul.f32 %v2083, %v2083
      %v2112 = vmul.f32 %v2084, %v2084
      %v2113 = vmul.f32 %v2085, %v2085
      %v2114 = vmul.f32 %v2086, %v2086
      %v2115 = vmul.f32 %v2087, %v2087
      %v2116 = vmul.f32 %v2088, %v2088
      %v2117 = vmul.f32 %v2089, %v2089
      %v2118 = vadd.f32 %v2110, %v2111
      %2119 = vadd.xlane.f32.xlu0 %v2118
      %v2120 = vpop.xlane.xlu0 %2119
      %v2121 = vadd.f32 %v2112, %v2113
      %2122 = vadd.xlane.f32.xlu0 %v2121
      %v2123 = vpop.xlane.xlu0 %2122
      %v2124 = vadd.f32 %v2114, %v2115
      %2125 = vadd.xlane.f32.xlu0 %v2124
      %v2126 = vpop.xlane.xlu0 %2125
      %v2127 = vadd.f32 %v2116, %v2117
      %2128 = vadd.xlane.f32.xlu0 %v2127
      %v2129 = vpop.xlane.xlu0 %2128
      %v2130 = vsel %vm1210, %v2100, %v2120
      %v2131 = vsel %vm1210, %v2103, %v2123
      %v2132 = vsel %vm1210, %v2106, %v2126
      %v2133 = vsel %vm1210, %v2109, %v2129
      %2134 = vmatprep.subr.mxu0 0.0
      %2135 = vmatpush1.msra.mxu0 %v2130
      %2136 = vmatprep.subr.mxu0 0.0
      %2137 = vmatpush1.msra.mxu0 %v2131
      %2138 = vmatprep.subr.mxu0 0.0
      %2139 = vmatpush1.msra.mxu0 %v2132
      %2140 = vmatprep.subr.mxu0 0.0
      %2141 = vmatpush1.msra.mxu0 %v2133
      %2142 = vmatprep.subr.mxu0 0.0
      %2143 = vmatpush1.msra.mxu0 0.0
      %2144 = vmatprep.subr.mxu0 0.0
      %2145 = vmatpush1.msra.mxu0 0.0
      %2146 = vmatprep.subr.mxu0 0.0
      %2147 = vmatpush1.msra.mxu0 0.0
      %2148 = vmatprep.subr.mxu0 0.0
      %2149 = vmatpush1.msra.mxu0 0.0
      %2150 = vmatprep.subr.mxu0 0.0
      %2151 = vmatpush1.msra.mxu0 0.0
      %2152 = vmatprep.subr.mxu0 0.0
      %2153 = vmatpush1.msra.mxu0 0.0
      %2154 = vmatprep.subr.mxu0 0.0
      %2155 = vmatpush1.msra.mxu0 0.0
      %2156 = vmatprep.subr.mxu0 0.0
      %2157 = vmatpush1.msra.mxu0 0.0
      %2158 = vmatprep.subr.mxu0 0.0
      %2159 = vmatpush1.msra.mxu0 0.0
      %2160 = vmatprep.subr.mxu0 0.0
      %2161 = vmatpush1.msra.mxu0 0.0
      %2162 = vmatprep.subr.mxu0 0.0
      %2163 = vmatpush1.msra.mxu0 0.0
      %2164 = vmatprep.subr.mxu0 0.0
      %2165 = vmatpush1.msra.mxu0 0.0
      %2166 = vmatprep.subr.mxu0 0.0
      %2167 = vmatpush1.msra.mxu0 0.0
      %2168 = vmatprep.subr.mxu0 0.0
      %2169 = vmatpush1.msra.mxu0 0.0
      %2170 = vmatprep.subr.mxu0 0.0
      %2171 = vmatpush1.msra.mxu0 0.0
      %2172 = vmatprep.subr.mxu0 0.0
      %2173 = vmatpush1.msra.mxu0 0.0
      %2174 = vmatprep.subr.mxu0 0.0
      %2175 = vmatpush1.msra.mxu0 0.0
      %2176 = vmatprep.subr.mxu0 0.0
      %2177 = vmatpush1.msra.mxu0 0.0
      %2178 = vmatprep.subr.mxu0 0.0
      %2179 = vmatpush1.msra.mxu0 0.0
      %2180 = vmatprep.subr.mxu0 0.0
      %2181 = vmatpush1.msra.mxu0 0.0
      %2182 = vmatprep.subr.mxu0 0.0
      %2183 = vmatpush1.msra.mxu0 0.0
      %2184 = vmatprep.subr.mxu0 0.0
      %2185 = vmatpush1.msra.mxu0 0.0
      %2186 = vmatprep.subr.mxu0 0.0
      %2187 = vmatpush1.msra.mxu0 0.0
      %2188 = vmatprep.subr.mxu0 0.0
      %2189 = vmatpush1.msra.mxu0 0.0
      %2190 = vmatprep.subr.mxu0 0.0
      %2191 = vmatpush1.msra.mxu0 0.0
      %2192 = vmatprep.subr.mxu0 0.0
      %2193 = vmatpush1.msra.mxu0 0.0
      %2194 = vmatprep.subr.mxu0 0.0
      %2195 = vmatpush1.msra.mxu0 0.0
      %2196 = vmatprep.subr.mxu0 0.0
      %2197 = vmatpush1.msra.mxu0 0.0
      %2198 = vmatprep.mubr.f32.mxu0 0.0
      %2199 = vmatmul.mubr.f32.gmra.mrb[0].mxu0 %v1217
      %v2200 = vpop.f32.mrb[0].mxu0
      %v2201 = vadd.f32 0.0, %v2200
      %v2202 = vpop.f32.mrb[0].mxu0
      %2203 = vmatprep.mubr.f32.mxu0 0.0
      %2204 = vmatmul.mubr.f32.gmra.mrb[0].mxu0 %v1220
      %v2205 = vpop.f32.mrb[0].mxu0
      %v2206 = vadd.f32 0.0, %v2205
      %v2207 = vpop.f32.mrb[0].mxu0
      %2208 = vmatprep.mubr.f32.mxu0 0.0
      %2209 = vmatmul.mubr.f32.gmra.mrb[0].mxu0 %v1223
      %v2210 = vpop.f32.mrb[0].mxu0
      %v2211 = vadd.f32 0.0, %v2210
      %v2212 = vpop.f32.mrb[0].mxu0
      %2213 = vmatprep.mubr.f32.mxu0 0.0
      %2214 = vmatmul.mubr.f32.gmra.mrb[0].mxu0 %v1226
      %v2215 = vpop.f32.mrb[0].mxu0
      %v2216 = vadd.f32 0.0, %v2215
      %v2217 = vpop.f32.mrb[0].mxu0
      %2218 = vdwg.mxu0
      %v2219 = vmul.f32 %v2201, 0.001953125
      %v2220 = vmul.f32 %v2206, 0.001953125
      %v2221 = vmul.f32 %v2211, 0.001953125
      %v2222 = vmul.f32 %v2216, 0.001953125
      %v2223 = vmul.f32 %v2219, %v2219
      %v2224 = vmul.f32 %v2220, %v2220
      %v2225 = vmul.f32 %v2221, %v2221
      %v2226 = vmul.f32 %v2222, %v2222
      %2231 = vrot.lane.b32.xlu0 %v2223, 1
      %v2232 = vpop.permute.xlu0 %2231
      %2233 = vrot.lane.b32.xlu0 %v2224, 1
      %v2234 = vpop.permute.xlu0 %2233
      %2235 = vrot.lane.b32.xlu0 %v2225, 1
      %v2236 = vpop.permute.xlu0 %2235
      %2237 = vrot.lane.b32.xlu0 %v2226, 1
      %v2238 = vpop.permute.xlu0 %2237
      %v2243 = vsub.f32 %v2219, %v2232
      %v2244 = vsub.f32 %v2220, %v2234
      %v2245 = vsub.f32 %v2221, %v2236
      %v2246 = vsub.f32 %v2222, %v2238
      %2248 = vset.pattern.permute.xlu0 0
      %2249 = vperm.xlu0 %2248, %v2219
      %v2250 = vpop.permute.xlu0 %2249
      %2253 = vset.pattern.permute.xlu0 0
      %2254 = vperm.xlu0 %2253, %v2220
      %v2255 = vpop.permute.xlu0 %2254
      %2258 = vset.pattern.permute.xlu0 0
      %2259 = vperm.xlu0 %2258, %v2221
      %v2260 = vpop.permute.xlu0 %2259
      %2263 = vset.pattern.permute.xlu0 0
      %2264 = vperm.xlu0 %2263, %v2222
      %v2265 = vpop.permute.xlu0 %2264
      %v2267 = vsub.f32 %v2082, %v2250
      %v2268 = vsub.f32 %v2083, %v2250
      %v2269 = vsub.f32 %v2084, %v2255
      %v2270 = vsub.f32 %v2085, %v2255
      %v2271 = vsub.f32 %v2086, %v2260
      %v2272 = vsub.f32 %v2087, %v2260
      %v2273 = vsub.f32 %v2088, %v2265
      %v2274 = vsub.f32 %v2089, %v2265
      %v2275 = vadd.f32 %v2243, 1e-06
      %v2276 = vadd.f32 %v2244, 1e-06
      %v2277 = vadd.f32 %v2245, 1e-06
      %v2278 = vadd.f32 %v2246, 1e-06
      %v2279 = vrsqrt.pop %v2275
      %v2280 = vrsqrt.pop %v2276
      %v2281 = vrsqrt.pop %v2277
      %v2282 = vrsqrt.pop %v2278
      %2284 = vset.pattern.permute.xlu0 1
      %2285 = vperm.xlu0 %2284, %v2279
      %v2286 = vpop.permute.xlu0 %2285
      %2289 = vset.pattern.permute.xlu0 1
      %2290 = vperm.xlu0 %2289, %v2280
      %v2291 = vpop.permute.xlu0 %2290
      %2294 = vset.pattern.permute.xlu0 1
      %2295 = vperm.xlu0 %2294, %v2281
      %v2296 = vpop.permute.xlu0 %2295
      %2299 = vset.pattern.permute.xlu0 1
      %2300 = vperm.xlu0 %2299, %v2282
      %v2301 = vpop.permute.xlu0 %2300
      %v2303 = vmul.f32 %v2267, %v2286
      %v2304 = vmul.f32 %v2268, %v2286
      %v2305 = vmul.f32 %v2269, %v2291
      %v2306 = vmul.f32 %v2270, %v2291
      %v2307 = vmul.f32 %v2271, %v2296
      %v2308 = vmul.f32 %v2272, %v2296
      %v2309 = vmul.f32 %v2273, %v2301
      %v2310 = vmul.f32 %v2274, %v2301
      %2312 = vset.pattern.permute.xlu0 0
      %2313 = vperm.xlu0 %2312, %v2090
      %v2314 = vpop.permute.xlu0 %2313
      %2317 = vset.pattern.permute.xlu0 0
      %2318 = vperm.xlu0 %2317, %v2091
      %v2319 = vpop.permute.xlu0 %2318
      %2322 = vset.pattern.permute.xlu0 0
      %2323 = vperm.xlu0 %2322, %v2092
      %v2324 = vpop.permute.xlu0 %2323
      %2327 = vset.pattern.permute.xlu0 0
      %2328 = vperm.xlu0 %2327, %v2093
      %v2329 = vpop.permute.xlu0 %2328
      %v2331 = vmul.f32 %v2303, %v2314
      %v2332 = vmul.f32 %v2304, %v2314
      %v2333 = vmul.f32 %v2305, %v2319
      %v2334 = vmul.f32 %v2306, %v2319
      %v2335 = vmul.f32 %v2307, %v2324
      %v2336 = vmul.f32 %v2308, %v2324
      %v2337 = vmul.f32 %v2309, %v2329
      %v2338 = vmul.f32 %v2310, %v2329
      %2340 = vset.pattern.permute.xlu0 0
      %2341 = vperm.xlu0 %2340, %v2094
      %v2342 = vpop.permute.xlu0 %2341
      %2345 = vset.pattern.permute.xlu0 0
      %2346 = vperm.xlu0 %2345, %v2095
      %v2347 = vpop.permute.xlu0 %2346
      %2350 = vset.pattern.permute.xlu0 0
      %2351 = vperm.xlu0 %2350, %v2096
      %v2352 = vpop.permute.xlu0 %2351
      %2355 = vset.pattern.permute.xlu0 0
      %2356 = vperm.xlu0 %2355, %v2097
      %v2357 = vpop.permute.xlu0 %2356
      %v2359 = vadd.f32 %v2331, %v2342
      %v2360 = vadd.f32 %v2332, %v2342
      %v2361 = vadd.f32 %v2333, %v2347
      %v2362 = vadd.f32 %v2334, %v2347
      %v2363 = vadd.f32 %v2335, %v2352
      %v2364 = vadd.f32 %v2336, %v2352
      %v2365 = vadd.f32 %v2337, %v2357
      %v2366 = vadd.f32 %v2338, %v2357
      %v2367 = vpack.c.bf16 %v2361, %v2359
      %v2368 = vpack.c.bf16 %v2362, %v2360
      %v2369 = vpack.c.bf16 %v2365, %v2363
      %v2370 = vpack.c.bf16 %v2366, %v2364
      %v2371 = vld [vmem:[%s16] sm:$0xf]
      %v2372 = vld [vmem:[%s16 + $0x4] sm:$0xf]
      %v2373 = vld [vmem:[%s16 + $0x8] sm:$0xf]
      %v2374 = vld [vmem:[%s16 + $0xc] sm:$0xf]
      %v2375 = vld [vmem:[%s17] sm:$0xff]
      %v2376 = vld [vmem:[%s17 + $0x8] sm:$0xff]
      %v2377 = vld [vmem:[%s17 + $0x10] sm:$0xff]
      %v2378 = vld [vmem:[%s17 + $0x18] sm:$0xff]
      %2380 = vset.pattern.permute.xlu0 0
      %2381 = vperm.xlu0 %2380, %v2375
      %v2382 = vpop.permute.xlu0 %2381
      %2385 = vset.pattern.permute.xlu0 0
      %2386 = vperm.xlu0 %2385, %v2376
      %v2387 = vpop.permute.xlu0 %2386
      %2390 = vset.pattern.permute.xlu0 0
      %2391 = vperm.xlu0 %2390, %v2377
      %v2392 = vpop.permute.xlu0 %2391
      %2395 = vset.pattern.permute.xlu0 0
      %2396 = vperm.xlu0 %2395, %v2378
      %v2397 = vpop.permute.xlu0 %2396
      %v2403 = vunpack.c.l.b16 %v2371
      %v2404 = vunpack.c.l.b16 %v2372
      %v2405 = vunpack.c.l.b16 %v2373
      %v2406 = vunpack.c.l.b16 %v2374
      %v2407 = vpack.c.b16 %v2404, %v2403
      %v2408 = vpack.c.b16 %v2406, %v2405
      %v2410 = vsel %vm1215, %v2407, 0
      %v2413 = vsel %vm1215, %v2408, 0
      %2415 = vmatprep.subr.bf16.mxu0 %v2368
      %2416 = vmatpush1.bf16.msra.mxu0 %v2367
      %2417 = vmatprep.subr.bf16.mxu0 %v2370
      %2418 = vmatpush1.bf16.msra.mxu0 %v2369
      %2419 = vmatprep.subr.bf16.mxu0 0
      %2420 = vmatpush1.bf16.msra.mxu0 0
      %2421 = vmatprep.subr.bf16.mxu0 0
      %2422 = vmatpush1.bf16.msra.mxu0 0
      %2423 = vmatprep.subr.bf16.mxu0 0
      %2424 = vmatpush1.bf16.msra.mxu0 0
      %2425 = vmatprep.subr.bf16.mxu0 0
      %2426 = vmatpush1.bf16.msra.mxu0 0
      %2427 = vmatprep.subr.bf16.mxu0 0
      %2428 = vmatpush1.bf16.msra.mxu0 0
      %2429 = vmatprep.subr.bf16.mxu0 0
      %2430 = vmatpush1.bf16.msra.mxu0 0
      %2431 = vmatprep.subr.bf16.mxu0 0
      %2432 = vmatpush1.bf16.msra.mxu0 0
      %2433 = vmatprep.subr.bf16.mxu0 0
      %2434 = vmatpush1.bf16.msra.mxu0 0
      %2435 = vmatprep.subr.bf16.mxu0 0
      %2436 = vmatpush1.bf16.msra.mxu0 0
      %2437 = vmatprep.subr.bf16.mxu0 0
      %2438 = vmatpush1.bf16.msra.mxu0 0
      %2439 = vmatprep.subr.bf16.mxu0 0
      %2440 = vmatpush1.bf16.msra.mxu0 0
      %2441 = vmatprep.subr.bf16.mxu0 0
      %2442 = vmatpush1.bf16.msra.mxu0 0
      %2443 = vmatprep.subr.bf16.mxu0 0
      %2444 = vmatpush1.bf16.msra.mxu0 0
      %2445 = vmatprep.subr.bf16.mxu0 0
      %2446 = vmatpush1.bf16.msra.mxu0 0
      %2447 = vmatprep.mubr.bf16.mxu0 0
      %2448 = vmatmul.mubr.bf16.gmra.mrb[0].mxu0 %v2410
      %v2449 = vpop.f32.mrb[0].mxu0
      %v2450 = vadd.f32 %v2382, %v2449
      %v2451 = vpop.f32.mrb[0].mxu0
      %v2452 = vadd.f32 %v2382, %v2451
      %v2453 = vpop.f32.mrb[0].mxu0
      %v2454 = vadd.f32 %v2387, %v2453
      %v2455 = vpop.f32.mrb[0].mxu0
      %v2456 = vadd.f32 %v2387, %v2455
      %2457 = vmatprep.mubr.bf16.mxu0 0
      %2458 = vmatmul.mubr.bf16.gmra.mrb[0].mxu0 %v2413
      %v2459 = vpop.f32.mrb[0].mxu0
      %v2460 = vadd.f32 %v2392, %v2459
      %v2461 = vpop.f32.mrb[0].mxu0
      %v2462 = vadd.f32 %v2392, %v2461
      %v2463 = vpop.f32.mrb[0].mxu0
      %v2464 = vadd.f32 %v2397, %v2463
      %v2465 = vpop.f32.mrb[0].mxu0
      %v2466 = vadd.f32 %v2397, %v2465
      %2467 = vdwg.mxu0
      %v2468 = vld [vmem:[%s18] sm:$0xf]
      %v2469 = vld [vmem:[%s18 + $0x4] sm:$0xf]
      %v2470 = vld [vmem:[%s18 + $0x8] sm:$0xf]
      %v2471 = vld [vmem:[%s18 + $0xc] sm:$0xf]
      %v2472 = vld [vmem:[%s19] sm:$0xff]
      %v2473 = vld [vmem:[%s19 + $0x8] sm:$0xff]
      %v2474 = vld [vmem:[%s19 + $0x10] sm:$0xff]
      %v2475 = vld [vmem:[%s19 + $0x18] sm:$0xff]
      %2477 = vset.pattern.permute.xlu0 0
      %2478 = vperm.xlu0 %2477, %v2472
      %v2479 = vpop.permute.xlu0 %2478
      %2482 = vset.pattern.permute.xlu0 0
      %2483 = vperm.xlu0 %2482, %v2473
      %v2484 = vpop.permute.xlu0 %2483
      %2487 = vset.pattern.permute.xlu0 0
      %2488 = vperm.xlu0 %2487, %v2474
      %v2489 = vpop.permute.xlu0 %2488
      %2492 = vset.pattern.permute.xlu0 0
      %2493 = vperm.xlu0 %2492, %v2475
      %v2494 = vpop.permute.xlu0 %2493
      %v2500 = vunpack.c.l.b16 %v2468
      %v2501 = vunpack.c.l.b16 %v2469
      %v2502 = vunpack.c.l.b16 %v2470
      %v2503 = vunpack.c.l.b16 %v2471
      %v2504 = vpack.c.b16 %v2501, %v2500
      %v2505 = vpack.c.b16 %v2503, %v2502
      %v2507 = vsel %vm1215, %v2504, 0
      %v2510 = vsel %vm1215, %v2505, 0
      %2512 = vmatprep.subr.bf16.mxu0 %v2368
      %2513 = vmatpush1.bf16.msra.mxu0 %v2367
      %2514 = vmatprep.subr.bf16.mxu0 %v2370
      %2515 = vmatpush1.bf16.msra.mxu0 %v2369
      %2516 = vmatprep.subr.bf16.mxu0 0
      %2517 = vmatpush1.bf16.msra.mxu0 0
      %2518 = vmatprep.subr.bf16.mxu0 0
      %2519 = vmatpush1.bf16.msra.mxu0 0
      %2520 = vmatprep.subr.bf16.mxu0 0
      %2521 = vmatpush1.bf16.msra.mxu0 0
      %2522 = vmatprep.subr.bf16.mxu0 0
      %2523 = vmatpush1.bf16.msra.mxu0 0
      %2524 = vmatprep.subr.bf16.mxu0 0
      %2525 = vmatpush1.bf16.msra.mxu0 0
      %2526 = vmatprep.subr.bf16.mxu0 0
      %2527 = vmatpush1.bf16.msra.mxu0 0
      %2528 = vmatprep.subr.bf16.mxu0 0
      %2529 = vmatpush1.bf16.msra.mxu0 0
      %2530 = vmatprep.subr.bf16.mxu0 0
      %2531 = vmatpush1.bf16.msra.mxu0 0
      %2532 = vmatprep.subr.bf16.mxu0 0
      %2533 = vmatpush1.bf16.msra.mxu0 0
      %2534 = vmatprep.subr.bf16.mxu0 0
      %2535 = vmatpush1.bf16.msra.mxu0 0
      %2536 = vmatprep.subr.bf16.mxu0 0
      %2537 = vmatpush1.bf16.msra.mxu0 0
      %2538 = vmatprep.subr.bf16.mxu0 0
      %2539 = vmatpush1.bf16.msra.mxu0 0
      %2540 = vmatprep.subr.bf16.mxu0 0
      %2541 = vmatpush1.bf16.msra.mxu0 0
      %2542 = vmatprep.subr.bf16.mxu0 0
      %2543 = vmatpush1.bf16.msra.mxu0 0
      %2544 = vmatprep.mubr.bf16.mxu0 0
      %2545 = vmatmul.mubr.bf16.gmra.mrb[0].mxu0 %v2507
      %v2546 = vpop.f32.mrb[0].mxu0
      %v2547 = vadd.f32 %v2479, %v2546
      %v2548 = vpop.f32.mrb[0].mxu0
      %v2549 = vadd.f32 %v2479, %v2548
      %v2550 = vpop.f32.mrb[0].mxu0
      %v2551 = vadd.f32 %v2484, %v2550
      %v2552 = vpop.f32.mrb[0].mxu0
      %v2553 = vadd.f32 %v2484, %v2552
      %2554 = vmatprep.mubr.bf16.mxu0 0
      %2555 = vmatmul.mubr.bf16.gmra.mrb[0].mxu0 %v2510
      %v2556 = vpop.f32.mrb[0].mxu0
      %v2557 = vadd.f32 %v2489, %v2556
      %v2558 = vpop.f32.mrb[0].mxu0
      %v2559 = vadd.f32 %v2489, %v2558
      %v2560 = vpop.f32.mrb[0].mxu0
      %v2561 = vadd.f32 %v2494, %v2560
      %v2562 = vpop.f32.mrb[0].mxu0
      %v2563 = vadd.f32 %v2494, %v2562
      %2564 = vdwg.mxu0
      %v2565 = vld [vmem:[%s20] sm:$0xf]
      %v2566 = vld [vmem:[%s20 + $0x4] sm:$0xf]
      %v2567 = vld [vmem:[%s20 + $0x8] sm:$0xf]
      %v2568 = vld [vmem:[%s20 + $0xc] sm:$0xf]
      %v2569 = vld [vmem:[%s21] sm:$0xff]
      %v2570 = vld [vmem:[%s21 + $0x8] sm:$0xff]
      %v2571 = vld [vmem:[%s21 + $0x10] sm:$0xff]
      %v2572 = vld [vmem:[%s21 + $0x18] sm:$0xff]
      %2574 = vset.pattern.permute.xlu0 0
      %2575 = vperm.xlu0 %2574, %v2569
      %v2576 = vpop.permute.xlu0 %2575
      %2579 = vset.pattern.permute.xlu0 0
      %2580 = vperm.xlu0 %2579, %v2570
      %v2581 = vpop.permute.xlu0 %2580
      %2584 = vset.pattern.permute.xlu0 0
      %2585 = vperm.xlu0 %2584, %v2571
      %v2586 = vpop.permute.xlu0 %2585
      %2589 = vset.pattern.permute.xlu0 0
      %2590 = vperm.xlu0 %2589, %v2572
      %v2591 = vpop.permute.xlu0 %2590
      %v2597 = vunpack.c.l.b16 %v2565
      %v2598 = vunpack.c.l.b16 %v2566
      %v2599 = vunpack.c.l.b16 %v2567
      %v2600 = vunpack.c.l.b16 %v2568
      %v2601 = vpack.c.b16 %v2598, %v2597
      %v2602 = vpack.c.b16 %v2600, %v2599
      %v2604 = vsel %vm1215, %v2601, 0
      %v2607 = vsel %vm1215, %v2602, 0
      %2609 = vmatprep.subr.bf16.mxu0 %v2368
      %2610 = vmatpush1.bf16.msra.mxu0 %v2367
      %2611 = vmatprep.subr.bf16.mxu0 %v2370
      %2612 = vmatpush1.bf16.msra.mxu0 %v2369
      %2613 = vmatprep.subr.bf16.mxu0 0
      %2614 = vmatpush1.bf16.msra.mxu0 0
      %2615 = vmatprep.subr.bf16.mxu0 0
      %2616 = vmatpush1.bf16.msra.mxu0 0
      %2617 = vmatprep.subr.bf16.mxu0 0
      %2618 = vmatpush1.bf16.msra.mxu0 0
      %2619 = vmatprep.subr.bf16.mxu0 0
      %2620 = vmatpush1.bf16.msra.mxu0 0
      %2621 = vmatprep.subr.bf16.mxu0 0
      %2622 = vmatpush1.bf16.msra.mxu0 0
      %2623 = vmatprep.subr.bf16.mxu0 0
      %2624 = vmatpush1.bf16.msra.mxu0 0
      %2625 = vmatprep.subr.bf16.mxu0 0
      %2626 = vmatpush1.bf16.msra.mxu0 0
      %2627 = vmatprep.subr.bf16.mxu0 0
      %2628 = vmatpush1.bf16.msra.mxu0 0
      %2629 = vmatprep.subr.bf16.mxu0 0
      %2630 = vmatpush1.bf16.msra.mxu0 0
      %2631 = vmatprep.subr.bf16.mxu0 0
      %2632 = vmatpush1.bf16.msra.mxu0 0
      %2633 = vmatprep.subr.bf16.mxu0 0
      %2634 = vmatpush1.bf16.msra.mxu0 0
      %2635 = vmatprep.subr.bf16.mxu0 0
      %2636 = vmatpush1.bf16.msra.mxu0 0
      %2637 = vmatprep.subr.bf16.mxu0 0
      %2638 = vmatpush1.bf16.msra.mxu0 0
      %2639 = vmatprep.subr.bf16.mxu0 0
      %2640 = vmatpush1.bf16.msra.mxu0 0
      %2641 = vmatprep.mubr.bf16.mxu0 0
      %2642 = vmatmul.mubr.bf16.gmra.mrb[0].mxu0 %v2604
      %v2643 = vpop.f32.mrb[0].mxu0
      %v2644 = vadd.f32 %v2576, %v2643
      %v2645 = vpop.f32.mrb[0].mxu0
      %v2646 = vadd.f32 %v2576, %v2645
      %v2647 = vpop.f32.mrb[0].mxu0
      %v2648 = vadd.f32 %v2581, %v2647
      %v2649 = vpop.f32.mrb[0].mxu0
      %v2650 = vadd.f32 %v2581, %v2649
      %2651 = vmatprep.mubr.bf16.mxu0 0
      %2652 = vmatmul.mubr.bf16.gmra.mrb[0].mxu0 %v2607
      %v2653 = vpop.f32.mrb[0].mxu0
      %v2654 = vadd.f32 %v2586, %v2653
      %v2655 = vpop.f32.mrb[0].mxu0
      %v2656 = vadd.f32 %v2586, %v2655
      %v2657 = vpop.f32.mrb[0].mxu0
      %v2658 = vadd.f32 %v2591, %v2657
      %v2659 = vpop.f32.mrb[0].mxu0
      %v2660 = vadd.f32 %v2591, %v2659
      %2661 = vdwg.mxu0
      %v2662 = vpack.c.bf16 %v2454, %v2450
      %v2663 = vpack.c.bf16 %v2456, %v2452
      %v2664 = vpack.c.bf16 %v2464, %v2460
      %v2665 = vpack.c.bf16 %v2466, %v2462
      %v2666 = vpack.c.bf16 %v2551, %v2547
      %v2667 = vpack.c.bf16 %v2553, %v2549
      %v2668 = vpack.c.bf16 %v2561, %v2557
      %v2669 = vpack.c.bf16 %v2563, %v2559
      %v2670 = vpack.c.bf16 %v2648, %v2644
      %v2671 = vpack.c.bf16 %v2650, %v2646
      %v2672 = vpack.c.bf16 %v2658, %v2654
      %v2673 = vpack.c.bf16 %v2660, %v2656
      %2674 = vxpose.xlu0.c.b16.start [1/8] %v2662, 128
      %2675 = vxpose.xlu0.c.b16.cont [2/8] %v2664, 128
      %2676 = vxpose.xlu0.c.b16.cont [3/8] 0, 128
      %2677 = vxpose.xlu0.c.b16.cont [4/8] 0, 128
      %2678 = vxpose.xlu0.c.b16.cont [5/8] 0, 128
      %2679 = vxpose.xlu0.c.b16.cont [6/8] 0, 128
      %2680 = vxpose.xlu0.c.b16.cont [7/8] 0, 128
      %2681 = vxpose.xlu0.c.b16.end [8/8] 0, 128
      %v2682 = vpop.trf.xlu0
      %v2683 = vpop.trf.xlu0
      %v2684 = vpop.trf.xlu0
      %v2685 = vpop.trf.xlu0
      %v2686 = vpop.trf.xlu0
      %v2687 = vpop.trf.xlu0
      %v2688 = vpop.trf.xlu0
      %v2689 = vpop.trf.xlu0
      %v2691 = vsel %vm1215, %v2682, 0
      %v2694 = vsel %vm1215, %v2683, 0
      %v2697 = vsel %vm1215, %v2684, 0
      %v2700 = vsel %vm1215, %v2685, 0
      %v2703 = vsel %vm1215, %v2686, 0
      %v2706 = vsel %vm1215, %v2687, 0
      %v2709 = vsel %vm1215, %v2688, 0
      %v2712 = vsel %vm1215, %v2689, 0
      %2714 = vmatprep.subr.bf16.mxu0 %v2667
      %2715 = vmatpush1.bf16.msra.mxu0 %v2666
      %2716 = vmatprep.subr.bf16.mxu0 %v2669
      %2717 = vmatpush1.bf16.msra.mxu0 %v2668
      %2718 = vmatprep.subr.bf16.mxu0 0
      %2719 = vmatpush1.bf16.msra.mxu0 0
      %2720 = vmatprep.subr.bf16.mxu0 0
      %2721 = vmatpush1.bf16.msra.mxu0 0
      %2722 = vmatprep.subr.bf16.mxu0 0
      %2723 = vmatpush1.bf16.msra.mxu0 0
      %2724 = vmatprep.subr.bf16.mxu0 0
      %2725 = vmatpush1.bf16.msra.mxu0 0
      %2726 = vmatprep.subr.bf16.mxu0 0
      %2727 = vmatpush1.bf16.msra.mxu0 0
      %2728 = vmatprep.subr.bf16.mxu0 0
      %2729 = vmatpush1.bf16.msra.mxu0 0
      %2730 = vmatprep.subr.bf16.mxu0 0
      %2731 = vmatpush1.bf16.msra.mxu0 0
      %2732 = vmatprep.subr.bf16.mxu0 0
      %2733 = vmatpush1.bf16.msra.mxu0 0
      %2734 = vmatprep.subr.bf16.mxu0 0
      %2735 = vmatpush1.bf16.msra.mxu0 0
      %2736 = vmatprep.subr.bf16.mxu0 0
      %2737 = vmatpush1.bf16.msra.mxu0 0
      %2738 = vmatprep.subr.bf16.mxu0 0
      %2739 = vmatpush1.bf16.msra.mxu0 0
      %2740 = vmatprep.subr.bf16.mxu0 0
      %2741 = vmatpush1.bf16.msra.mxu0 0
      %2742 = vmatprep.subr.bf16.mxu0 0
      %2743 = vmatpush1.bf16.msra.mxu0 0
      %2744 = vmatprep.subr.bf16.mxu0 0
      %2745 = vmatpush1.bf16.msra.mxu0 0
      %2746 = vmatprep.mubr.bf16.mxu0 0
      %2747 = vmatmul.mubr.bf16.gmra.mrb[0].mxu0 %v2691
      %v2748 = vpop.f32.mrb[0].mxu0
      %v2749 = vadd.f32 0.0, %v2748
      %v2750 = vpop.f32.mrb[0].mxu0
      %v2751 = vadd.f32 0.0, %v2750
      %v2752 = vpop.f32.mrb[0].mxu0
      %v2753 = vadd.f32 0.0, %v2752
      %v2754 = vpop.f32.mrb[0].mxu0
      %v2755 = vadd.f32 0.0, %v2754
      %2756 = vmatprep.mubr.bf16.mxu0 0
      %2757 = vmatmul.mubr.bf16.gmra.mrb[0].mxu0 %v2694
      %v2758 = vpop.f32.mrb[0].mxu0
      %v2759 = vadd.f32 0.0, %v2758
      %v2760 = vpop.f32.mrb[0].mxu0
      %v2761 = vadd.f32 0.0, %v2760
      %v2762 = vpop.f32.mrb[0].mxu0
      %v2763 = vadd.f32 0.0, %v2762
      %v2764 = vpop.f32.mrb[0].mxu0
      %v2765 = vadd.f32 0.0, %v2764
      %2766 = vmatprep.mubr.bf16.mxu0 0
      %2767 = vmatmul.mubr.bf16.gmra.mrb[0].mxu0 %v2697
      %v2768 = vpop.f32.mrb[0].mxu0
      %v2769 = vadd.f32 0.0, %v2768
      %v2770 = vpop.f32.mrb[0].mxu0
      %v2771 = vadd.f32 0.0, %v2770
      %v2772 = vpop.f32.mrb[0].mxu0
      %v2773 = vadd.f32 0.0, %v2772
      %v2774 = vpop.f32.mrb[0].mxu0
      %v2775 = vadd.f32 0.0, %v2774
      %2776 = vmatprep.mubr.bf16.mxu0 0
      %2777 = vmatmul.mubr.bf16.gmra.mrb[0].mxu0 %v2700
      %v2778 = vpop.f32.mrb[0].mxu0
      %v2779 = vadd.f32 0.0, %v2778
      %v2780 = vpop.f32.mrb[0].mxu0
      %v2781 = vadd.f32 0.0, %v2780
      %v2782 = vpop.f32.mrb[0].mxu0
      %v2783 = vadd.f32 0.0, %v2782
      %v2784 = vpop.f32.mrb[0].mxu0
      %v2785 = vadd.f32 0.0, %v2784
      %2786 = vmatprep.mubr.bf16.mxu0 0
      %2787 = vmatmul.mubr.bf16.gmra.mrb[0].mxu0 %v2703
      %v2788 = vpop.f32.mrb[0].mxu0
      %v2789 = vadd.f32 0.0, %v2788
      %v2790 = vpop.f32.mrb[0].mxu0
      %v2791 = vadd.f32 0.0, %v2790
      %v2792 = vpop.f32.mrb[0].mxu0
      %v2793 = vadd.f32 0.0, %v2792
      %v2794 = vpop.f32.mrb[0].mxu0
      %v2795 = vadd.f32 0.0, %v2794
      %2796 = vmatprep.mubr.bf16.mxu0 0
      %2797 = vmatmul.mubr.bf16.gmra.mrb[0].mxu0 %v2706
      %v2798 = vpop.f32.mrb[0].mxu0
      %v2799 = vadd.f32 0.0, %v2798
      %v2800 = vpop.f32.mrb[0].mxu0
      %v2801 = vadd.f32 0.0, %v2800
      %v2802 = vpop.f32.mrb[0].mxu0
      %v2803 = vadd.f32 0.0, %v2802
      %v2804 = vpop.f32.mrb[0].mxu0
      %v2805 = vadd.f32 0.0, %v2804
      %2806 = vmatprep.mubr.bf16.mxu0 0
      %2807 = vmatmul.mubr.bf16.gmra.mrb[0].mxu0 %v2709
      %v2808 = vpop.f32.mrb[0].mxu0
      %v2809 = vadd.f32 0.0, %v2808
      %v2810 = vpop.f32.mrb[0].mxu0
      %v2811 = vadd.f32 0.0, %v2810
      %v2812 = vpop.f32.mrb[0].mxu0
      %v2813 = vadd.f32 0.0, %v2812
      %v2814 = vpop.f32.mrb[0].mxu0
      %v2815 = vadd.f32 0.0, %v2814
      %2816 = vmatprep.mubr.bf16.mxu0 0
      %2817 = vmatmul.mubr.bf16.gmra.mrb[0].mxu0 %v2712
      %v2818 = vpop.f32.mrb[0].mxu0
      %v2819 = vadd.f32 0.0, %v2818
      %v2820 = vpop.f32.mrb[0].mxu0
      %v2821 = vadd.f32 0.0, %v2820
      %v2822 = vpop.f32.mrb[0].mxu0
      %v2823 = vadd.f32 0.0, %v2822
      %v2824 = vpop.f32.mrb[0].mxu0
      %v2825 = vadd.f32 0.0, %v2824
      %2826 = vdwg.mxu0
      %v2827 = vmax.f32 %v2749, %v2751
      %2828 = vmax.xlane.f32.xlu0 %v2827
      %v2829 = vpop.xlane.xlu0 %2828
      %v2830 = vmax.f32 %v2753, %v2755
      %2831 = vmax.xlane.f32.xlu0 %v2830
      %v2832 = vpop.xlane.xlu0 %2831
      %v2833 = vmax.f32 %v2759, %v2761
      %2834 = vmax.xlane.f32.xlu0 %v2833
      %v2835 = vpop.xlane.xlu0 %2834
      %v2836 = vmax.f32 %v2763, %v2765
      %2837 = vmax.xlane.f32.xlu0 %v2836
      %v2838 = vpop.xlane.xlu0 %2837
      %v2839 = vmax.f32 %v2769, %v2771
      %2840 = vmax.xlane.f32.xlu0 %v2839
      %v2841 = vpop.xlane.xlu0 %2840
      %v2842 = vmax.f32 %v2773, %v2775
      %2843 = vmax.xlane.f32.xlu0 %v2842
      %v2844 = vpop.xlane.xlu0 %2843
      %v2845 = vmax.f32 %v2779, %v2781
      %2846 = vmax.xlane.f32.xlu0 %v2845
      %v2847 = vpop.xlane.xlu0 %2846
      %v2848 = vmax.f32 %v2783, %v2785
      %2849 = vmax.xlane.f32.xlu0 %v2848
      %v2850 = vpop.xlane.xlu0 %2849
      %v2851 = vmax.f32 %v2789, %v2791
      %2852 = vmax.xlane.f32.xlu0 %v2851
      %v2853 = vpop.xlane.xlu0 %2852
      %v2854 = vmax.f32 %v2793, %v2795
      %2855 = vmax.xlane.f32.xlu0 %v2854
      %v2856 = vpop.xlane.xlu0 %2855
      %v2857 = vmax.f32 %v2799, %v2801
      %2858 = vmax.xlane.f32.xlu0 %v2857
      %v2859 = vpop.xlane.xlu0 %2858
      %v2860 = vmax.f32 %v2803, %v2805
      %2861 = vmax.xlane.f32.xlu0 %v2860
      %v2862 = vpop.xlane.xlu0 %2861
      %v2863 = vmax.f32 %v2809, %v2811
      %2864 = vmax.xlane.f32.xlu0 %v2863
      %v2865 = vpop.xlane.xlu0 %2864
      %v2866 = vmax.f32 %v2813, %v2815
      %2867 = vmax.xlane.f32.xlu0 %v2866
      %v2868 = vpop.xlane.xlu0 %2867
      %v2869 = vmax.f32 %v2819, %v2821
      %2870 = vmax.xlane.f32.xlu0 %v2869
      %v2871 = vpop.xlane.xlu0 %2870
      %v2872 = vmax.f32 %v2823, %v2825
      %2873 = vmax.xlane.f32.xlu0 %v2872
      %v2874 = vpop.xlane.xlu0 %2873
      %v2875 = vsub.f32 %v2749, %v2829
      %v2876 = vsub.f32 %v2751, %v2829
      %v2877 = vsub.f32 %v2753, %v2832
      %v2878 = vsub.f32 %v2755, %v2832
      %v2879 = vsub.f32 %v2759, %v2835
      %v2880 = vsub.f32 %v2761, %v2835
      %v2881 = vsub.f32 %v2763, %v2838
      %v2882 = vsub.f32 %v2765, %v2838
      %v2883 = vsub.f32 %v2769, %v2841
      %v2884 = vsub.f32 %v2771, %v2841
      %v2885 = vsub.f32 %v2773, %v2844
      %v2886 = vsub.f32 %v2775, %v2844
      %v2887 = vsub.f32 %v2779, %v2847
      %v2888 = vsub.f32 %v2781, %v2847
      %v2889 = vsub.f32 %v2783, %v2850
      %v2890 = vsub.f32 %v2785, %v2850
      %v2891 = vsub.f32 %v2789, %v2853
      %v2892 = vsub.f32 %v2791, %v2853
      %v2893 = vsub.f32 %v2793, %v2856
      %v2894 = vsub.f32 %v2795, %v2856
      %v2895 = vsub.f32 %v2799, %v2859
      %v2896 = vsub.f32 %v2801, %v2859
      %v2897 = vsub.f32 %v2803, %v2862
      %v2898 = vsub.f32 %v2805, %v2862
      %v2899 = vsub.f32 %v2809, %v2865
      %v2900 = vsub.f32 %v2811, %v2865
      %v2901 = vsub.f32 %v2813, %v2868
      %v2902 = vsub.f32 %v2815, %v2868
      %v2903 = vsub.f32 %v2819, %v2871
      %v2904 = vsub.f32 %v2821, %v2871
      %v2905 = vsub.f32 %v2823, %v2874
      %v2906 = vsub.f32 %v2825, %v2874
      %v2907 = vmul.f32 %v2875, 1.442695
      %v2908 = vpow.pop %v2907
      %v2909 = vmul.f32 %v2876, 1.442695
      %v2910 = vpow.pop %v2909
      %v2911 = vmul.f32 %v2877, 1.442695
      %v2912 = vpow.pop %v2911
      %v2913 = vmul.f32 %v2878, 1.442695
      %v2914 = vpow.pop %v2913
      %v2915 = vmul.f32 %v2879, 1.442695
      %v2916 = vpow.pop %v2915
      %v2917 = vmul.f32 %v2880, 1.442695
      %v2918 = vpow.pop %v2917
      %v2919 = vmul.f32 %v2881, 1.442695
      %v2920 = vpow.pop %v2919
      %v2921 = vmul.f32 %v2882, 1.442695
      %v2922 = vpow.pop %v2921
      %v2923 = vmul.f32 %v2883, 1.442695
      %v2924 = vpow.pop %v2923
      %v2925 = vmul.f32 %v2884, 1.442695
      %v2926 = vpow.pop %v2925
      %v2927 = vmul.f32 %v2885, 1.442695
      %v2928 = vpow.pop %v2927
      %v2929 = vmul.f32 %v2886, 1.442695
      %v2930 = vpow.pop %v2929
      %v2931 = vmul.f32 %v2887, 1.442695
      %v2932 = vpow.pop %v2931
      %v2933 = vmul.f32 %v2888, 1.442695
      %v2934 = vpow.pop %v2933
      %v2935 = vmul.f32 %v2889, 1.442695
      %v2936 = vpow.pop %v2935
      %v2937 = vmul.f32 %v2890, 1.442695
      %v2938 = vpow.pop %v2937
      %v2939 = vmul.f32 %v2891, 1.442695
      %v2940 = vpow.pop %v2939
      %v2941 = vmul.f32 %v2892, 1.442695
      %v2942 = vpow.pop %v2941
      %v2943 = vmul.f32 %v2893, 1.442695
      %v2944 = vpow.pop %v2943
      %v2945 = vmul.f32 %v2894, 1.442695
      %v2946 = vpow.pop %v2945
      %v2947 = vmul.f32 %v2895, 1.442695
      %v2948 = vpow.pop %v2947
      %v2949 = vmul.f32 %v2896, 1.442695
      %v2950 = vpow.pop %v2949
      %v2951 = vmul.f32 %v2897, 1.442695
      %v2952 = vpow.pop %v2951
      %v2953 = vmul.f32 %v2898, 1.442695
      %v2954 = vpow.pop %v2953
      %v2955 = vmul.f32 %v2899, 1.442695
      %v2956 = vpow.pop %v2955
      %v2957 = vmul.f32 %v2900, 1.442695
      %v2958 = vpow.pop %v2957
      %v2959 = vmul.f32 %v2901, 1.442695
      %v2960 = vpow.pop %v2959
      %v2961 = vmul.f32 %v2902, 1.442695
      %v2962 = vpow.pop %v2961
      %v2963 = vmul.f32 %v2903, 1.442695
      %v2964 = vpow.pop %v2963
      %v2965 = vmul.f32 %v2904, 1.442695
      %v2966 = vpow.pop %v2965
      %v2967 = vmul.f32 %v2905, 1.442695
      %v2968 = vpow.pop %v2967
      %v2969 = vmul.f32 %v2906, 1.442695
      %v2970 = vpow.pop %v2969
      %v2971 = vadd.f32 %v2908, %v2910
      %2972 = vadd.xlane.f32.xlu0 %v2971
      %v2973 = vpop.xlane.xlu0 %2972
      %v2974 = vadd.f32 %v2912, %v2914
      %2975 = vadd.xlane.f32.xlu0 %v2974
      %v2976 = vpop.xlane.xlu0 %2975
      %v2977 = vadd.f32 %v2916, %v2918
      %2978 = vadd.xlane.f32.xlu0 %v2977
      %v2979 = vpop.xlane.xlu0 %2978
      %v2980 = vadd.f32 %v2920, %v2922
      %2981 = vadd.xlane.f32.xlu0 %v2980
      %v2982 = vpop.xlane.xlu0 %2981
      %v2983 = vadd.f32 %v2924, %v2926
      %2984 = vadd.xlane.f32.xlu0 %v2983
      %v2985 = vpop.xlane.xlu0 %2984
      %v2986 = vadd.f32 %v2928, %v2930
      %2987 = vadd.xlane.f32.xlu0 %v2986
      %v2988 = vpop.xlane.xlu0 %2987
      %v2989 = vadd.f32 %v2932, %v2934
      %2990 = vadd.xlane.f32.xlu0 %v2989
      %v2991 = vpop.xlane.xlu0 %2990
      %v2992 = vadd.f32 %v2936, %v2938
      %2993 = vadd.xlane.f32.xlu0 %v2992
      %v2994 = vpop.xlane.xlu0 %2993
      %v2995 = vadd.f32 %v2940, %v2942
      %2996 = vadd.xlane.f32.xlu0 %v2995
      %v2997 = vpop.xlane.xlu0 %2996
      %v2998 = vadd.f32 %v2944, %v2946
      %2999 = vadd.xlane.f32.xlu0 %v2998
      %v3000 = vpop.xlane.xlu0 %2999
      %v3001 = vadd.f32 %v2948, %v2950
      %3002 = vadd.xlane.f32.xlu0 %v3001
      %v3003 = vpop.xlane.xlu0 %3002
      %v3004 = vadd.f32 %v2952, %v2954
      %3005 = vadd.xlane.f32.xlu0 %v3004
      %v3006 = vpop.xlane.xlu0 %3005
      %v3007 = vadd.f32 %v2956, %v2958
      %3008 = vadd.xlane.f32.xlu0 %v3007
      %v3009 = vpop.xlane.xlu0 %3008
      %v3010 = vadd.f32 %v2960, %v2962
      %3011 = vadd.xlane.f32.xlu0 %v3010
      %v3012 = vpop.xlane.xlu0 %3011
      %v3013 = vadd.f32 %v2964, %v2966
      %3014 = vadd.xlane.f32.xlu0 %v3013
      %v3015 = vpop.xlane.xlu0 %3014
      %v3016 = vadd.f32 %v2968, %v2970
      %3017 = vadd.xlane.f32.xlu0 %v3016
      %v3018 = vpop.xlane.xlu0 %3017
      %v3019 = vrcp.pop %v2973
      %v3020 = vrcp.pop %v2976
      %v3021 = vrcp.pop %v2979
      %v3022 = vrcp.pop %v2982
      %v3023 = vrcp.pop %v2985
      %v3024 = vrcp.pop %v2988
      %v3025 = vrcp.pop %v2991
      %v3026 = vrcp.pop %v2994
      %v3027 = vrcp.pop %v2997
      %v3028 = vrcp.pop %v3000
      %v3029 = vrcp.pop %v3003
      %v3030 = vrcp.pop %v3006
      %v3031 = vrcp.pop %v3009
      %v3032 = vrcp.pop %v3012
      %v3033 = vrcp.pop %v3015
      %v3034 = vrcp.pop %v3018
      %v3035 = vmul.f32 %v2908, %v3019
      %v3036 = vmul.f32 %v2910, %v3019
      %v3037 = vmul.f32 %v2912, %v3020
      %v3038 = vmul.f32 %v2914, %v3020
      %v3039 = vmul.f32 %v2916, %v3021
      %v3040 = vmul.f32 %v2918, %v3021
      %v3041 = vmul.f32 %v2920, %v3022
      %v3042 = vmul.f32 %v2922, %v3022
      %v3043 = vmul.f32 %v2924, %v3023
      %v3044 = vmul.f32 %v2926, %v3023
      %v3045 = vmul.f32 %v2928, %v3024
      %v3046 = vmul.f32 %v2930, %v3024
      %v3047 = vmul.f32 %v2932, %v3025
      %v3048 = vmul.f32 %v2934, %v3025
      %v3049 = vmul.f32 %v2936, %v3026
      %v3050 = vmul.f32 %v2938, %v3026
      %v3051 = vmul.f32 %v2940, %v3027
      %v3052 = vmul.f32 %v2942, %v3027
      %v3053 = vmul.f32 %v2944, %v3028
      %v3054 = vmul.f32 %v2946, %v3028
      %v3055 = vmul.f32 %v2948, %v3029
      %v3056 = vmul.f32 %v2950, %v3029
      %v3057 = vmul.f32 %v2952, %v3030
      %v3058 = vmul.f32 %v2954, %v3030
      %v3059 = vmul.f32 %v2956, %v3031
      %v3060 = vmul.f32 %v2958, %v3031
      %v3061 = vmul.f32 %v2960, %v3032
      %v3062 = vmul.f32 %v2962, %v3032
      %v3063 = vmul.f32 %v2964, %v3033
      %v3064 = vmul.f32 %v2966, %v3033
      %v3065 = vmul.f32 %v2968, %v3034
      %v3066 = vmul.f32 %v2970, %v3034
      %v3067 = vpack.c.bf16 %v3037, %v3035
      %v3068 = vpack.c.bf16 %v3038, %v3036
      %v3069 = vpack.c.bf16 %v3041, %v3039
      %v3070 = vpack.c.bf16 %v3042, %v3040
      %v3071 = vpack.c.bf16 %v3045, %v3043
      %v3072 = vpack.c.bf16 %v3046, %v3044
      %v3073 = vpack.c.bf16 %v3049, %v3047
      %v3074 = vpack.c.bf16 %v3050, %v3048
      %v3075 = vpack.c.bf16 %v3053, %v3051
      %v3076 = vpack.c.bf16 %v3054, %v3052
      %v3077 = vpack.c.bf16 %v3057, %v3055
      %v3078 = vpack.c.bf16 %v3058, %v3056
      %v3079 = vpack.c.bf16 %v3061, %v3059
      %v3080 = vpack.c.bf16 %v3062, %v3060
      %v3081 = vpack.c.bf16 %v3065, %v3063
      %v3082 = vpack.c.bf16 %v3066, %v3064
      %3083 = vmatprep.subr.bf16.mxu0 %v3068
      %3084 = vmatpush1.bf16.xpose.msra.mxu0 %v3067
      %3085 = vmatprep.subr.bf16.mxu0 %v3070
      %3086 = vmatpush1.bf16.xpose.msra.mxu0 %v3069
      %3087 = vmatprep.subr.bf16.mxu0 %v3072
      %3088 = vmatpush1.bf16.xpose.msra.mxu0 %v3071
      %3089 = vmatprep.subr.bf16.mxu0 %v3074
      %3090 = vmatpush1.bf16.xpose.msra.mxu0 %v3073
      %3091 = vmatprep.subr.bf16.mxu0 %v3076
      %3092 = vmatpush1.bf16.xpose.msra.mxu0 %v3075
      %3093 = vmatprep.subr.bf16.mxu0 %v3078
      %3094 = vmatpush1.bf16.xpose.msra.mxu0 %v3077
      %3095 = vmatprep.subr.bf16.mxu0 %v3080
      %3096 = vmatpush1.bf16.xpose.msra.mxu0 %v3079
      %3097 = vmatprep.subr.bf16.mxu0 %v3082
      %3098 = vmatpush1.bf16.xpose.msra.mxu0 %v3081
      %3099 = vmatprep.subr.bf16.mxu0 0
      %3100 = vmatpush1.bf16.xpose.msra.mxu0 0
      %3101 = vmatprep.subr.bf16.mxu0 0
      %3102 = vmatpush1.bf16.xpose.msra.mxu0 0
      %3103 = vmatprep.subr.bf16.mxu0 0
      %3104 = vmatpush1.bf16.xpose.msra.mxu0 0
      %3105 = vmatprep.subr.bf16.mxu0 0
      %3106 = vmatpush1.bf16.xpose.msra.mxu0 0
      %3107 = vmatprep.subr.bf16.mxu0 0
      %3108 = vmatpush1.bf16.xpose.msra.mxu0 0
      %3109 = vmatprep.subr.bf16.mxu0 0
      %3110 = vmatpush1.bf16.xpose.msra.mxu0 0
      %3111 = vmatprep.subr.bf16.mxu0 0
      %3112 = vmatpush1.bf16.xpose.msra.mxu0 0
      %3113 = vmatprep.subr.bf16.mxu0 0
      %3114 = vmatpush1.bf16.xpose.msra.mxu0 0
      %3115 = vmatprep.mubr.bf16.mxu0 %v2671
      %3116 = vmatmul.mubr.bf16.gmra.mrb[0].mxu0 %v2670
      %v3117 = vpop.f32.mrb[0].mxu0
      %v3118 = vadd.f32 0.0, %v3117
      %v3119 = vpop.f32.mrb[0].mxu0
      %v3120 = vpop.f32.mrb[0].mxu0
      %v3121 = vadd.f32 0.0, %v3120
      %v3122 = vpop.f32.mrb[0].mxu0
      %3123 = vmatprep.mubr.bf16.mxu0 %v2673
      %3124 = vmatmul.mubr.bf16.gmra.mrb[0].mxu0 %v2672
      %v3125 = vpop.f32.mrb[0].mxu0
      %v3126 = vadd.f32 0.0, %v3125
      %v3127 = vpop.f32.mrb[0].mxu0
      %v3128 = vpop.f32.mrb[0].mxu0
      %v3129 = vadd.f32 0.0, %v3128
      %v3130 = vpop.f32.mrb[0].mxu0
      %3131 = vdwg.mxu0
      %3132 = vxpose.xlu0.c.b16.start [1/8] %v2663, 128
      %3133 = vxpose.xlu0.c.b16.cont [2/8] %v2665, 128
      %3134 = vxpose.xlu0.c.b16.cont [3/8] 0, 128
      %3135 = vxpose.xlu0.c.b16.cont [4/8] 0, 128
      %3136 = vxpose.xlu0.c.b16.cont [5/8] 0, 128
      %3137 = vxpose.xlu0.c.b16.cont [6/8] 0, 128
      %3138 = vxpose.xlu0.c.b16.cont [7/8] 0, 128
      %3139 = vxpose.xlu0.c.b16.end [8/8] 0, 128
      %v3140 = vpop.trf.xlu0
      %v3141 = vpop.trf.xlu0
      %v3142 = vpop.trf.xlu0
      %v3143 = vpop.trf.xlu0
      %v3144 = vpop.trf.xlu0
      %v3145 = vpop.trf.xlu0
      %v3146 = vpop.trf.xlu0
      %v3147 = vpop.trf.xlu0
      %v3149 = vsel %vm1215, %v3140, 0
      %v3152 = vsel %vm1215, %v3141, 0
      %v3155 = vsel %vm1215, %v3142, 0
      %v3158 = vsel %vm1215, %v3143, 0
      %v3161 = vsel %vm1215, %v3144, 0
      %v3164 = vsel %vm1215, %v3145, 0
      %v3167 = vsel %vm1215, %v3146, 0
      %v3170 = vsel %vm1215, %v3147, 0
      %3172 = vmatprep.subr.bf16.mxu0 %v2667
      %3173 = vmatpush1.bf16.msra.mxu0 %v2666
      %3174 = vmatprep.subr.bf16.mxu0 %v2669
      %3175 = vmatpush1.bf16.msra.mxu0 %v2668
      %3176 = vmatprep.subr.bf16.mxu0 0
      %3177 = vmatpush1.bf16.msra.mxu0 0
      %3178 = vmatprep.subr.bf16.mxu0 0
      %3179 = vmatpush1.bf16.msra.mxu0 0
      %3180 = vmatprep.subr.bf16.mxu0 0
      %3181 = vmatpush1.bf16.msra.mxu0 0
      %3182 = vmatprep.subr.bf16.mxu0 0
      %3183 = vmatpush1.bf16.msra.mxu0 0
      %3184 = vmatprep.subr.bf16.mxu0 0
      %3185 = vmatpush1.bf16.msra.mxu0 0
      %3186 = vmatprep.subr.bf16.mxu0 0
      %3187 = vmatpush1.bf16.msra.mxu0 0
      %3188 = vmatprep.subr.bf16.mxu0 0
      %3189 = vmatpush1.bf16.msra.mxu0 0
      %3190 = vmatprep.subr.bf16.mxu0 0
      %3191 = vmatpush1.bf16.msra.mxu0 0
      %3192 = vmatprep.subr.bf16.mxu0 0
      %3193 = vmatpush1.bf16.msra.mxu0 0
      %3194 = vmatprep.subr.bf16.mxu0 0
      %3195 = vmatpush1.bf16.msra.mxu0 0
      %3196 = vmatprep.subr.bf16.mxu0 0
      %3197 = vmatpush1.bf16.msra.mxu0 0
      %3198 = vmatprep.subr.bf16.mxu0 0
      %3199 = vmatpush1.bf16.msra.mxu0 0
      %3200 = vmatprep.subr.bf16.mxu0 0
      %3201 = vmatpush1.bf16.msra.mxu0 0
      %3202 = vmatprep.subr.bf16.mxu0 0
      %3203 = vmatpush1.bf16.msra.mxu0 0
      %3204 = vmatprep.mubr.bf16.mxu0 0
      %3205 = vmatmul.mubr.bf16.gmra.mrb[0].mxu0 %v3149
      %v3206 = vpop.f32.mrb[0].mxu0
      %v3207 = vadd.f32 0.0, %v3206
      %v3208 = vpop.f32.mrb[0].mxu0
      %v3209 = vadd.f32 0.0, %v3208
      %v3210 = vpop.f32.mrb[0].mxu0
      %v3211 = vadd.f32 0.0, %v3210
      %v3212 = vpop.f32.mrb[0].mxu0
      %v3213 = vadd.f32 0.0, %v3212
      %3214 = vmatprep.mubr.bf16.mxu0 0
      %3215 = vmatmul.mubr.bf16.gmra.mrb[0].mxu0 %v3152
      %v3216 = vpop.f32.mrb[0].mxu0
      %v3217 = vadd.f32 0.0, %v3216
      %v3218 = vpop.f32.mrb[0].mxu0
      %v3219 = vadd.f32 0.0, %v3218
      %v3220 = vpop.f32.mrb[0].mxu0
      %v3221 = vadd.f32 0.0, %v3220
      %v3222 = vpop.f32.mrb[0].mxu0
      %v3223 = vadd.f32 0.0, %v3222
      %3224 = vmatprep.mubr.bf16.mxu0 0
      %3225 = vmatmul.mubr.bf16.gmra.mrb[0].mxu0 %v3155
      %v3226 = vpop.f32.mrb[0].mxu0
      %v3227 = vadd.f32 0.0, %v3226
      %v3228 = vpop.f32.mrb[0].mxu0
      %v3229 = vadd.f32 0.0, %v3228
      %v3230 = vpop.f32.mrb[0].mxu0
      %v3231 = vadd.f32 0.0, %v3230
      %v3232 = vpop.f32.mrb[0].mxu0
      %v3233 = vadd.f32 0.0, %v3232
      %3234 = vmatprep.mubr.bf16.mxu0 0
      %3235 = vmatmul.mubr.bf16.gmra.mrb[0].mxu0 %v3158
      %v3236 = vpop.f32.mrb[0].mxu0
      %v3237 = vadd.f32 0.0, %v3236
      %v3238 = vpop.f32.mrb[0].mxu0
      %v3239 = vadd.f32 0.0, %v3238
      %v3240 = vpop.f32.mrb[0].mxu0
      %v3241 = vadd.f32 0.0, %v3240
      %v3242 = vpop.f32.mrb[0].mxu0
      %v3243 = vadd.f32 0.0, %v3242
      %3244 = vmatprep.mubr.bf16.mxu0 0
      %3245 = vmatmul.mubr.bf16.gmra.mrb[0].mxu0 %v3161
      %v3246 = vpop.f32.mrb[0].mxu0
      %v3247 = vadd.f32 0.0, %v3246
      %v3248 = vpop.f32.mrb[0].mxu0
      %v3249 = vadd.f32 0.0, %v3248
      %v3250 = vpop.f32.mrb[0].mxu0
      %v3251 = vadd.f32 0.0, %v3250
      %v3252 = vpop.f32.mrb[0].mxu0
      %v3253 = vadd.f32 0.0, %v3252
      %3254 = vmatprep.mubr.bf16.mxu0 0
      %3255 = vmatmul.mubr.bf16.gmra.mrb[0].mxu0 %v3164
      %v3256 = vpop.f32.mrb[0].mxu0
      %v3257 = vadd.f32 0.0, %v3256
      %v3258 = vpop.f32.mrb[0].mxu0
      %v3259 = vadd.f32 0.0, %v3258
      %v3260 = vpop.f32.mrb[0].mxu0
      %v3261 = vadd.f32 0.0, %v3260
      %v3262 = vpop.f32.mrb[0].mxu0
      %v3263 = vadd.f32 0.0, %v3262
      %3264 = vmatprep.mubr.bf16.mxu0 0
      %3265 = vmatmul.mubr.bf16.gmra.mrb[0].mxu0 %v3167
      %v3266 = vpop.f32.mrb[0].mxu0
      %v3267 = vadd.f32 0.0, %v3266
      %v3268 = vpop.f32.mrb[0].mxu0
      %v3269 = vadd.f32 0.0, %v3268
      %v3270 = vpop.f32.mrb[0].mxu0
      %v3271 = vadd.f32 0.0, %v3270
      %v3272 = vpop.f32.mrb[0].mxu0
      %v3273 = vadd.f32 0.0, %v3272
      %3274 = vmatprep.mubr.bf16.mxu0 0
      %3275 = vmatmul.mubr.bf16.gmra.mrb[0].mxu0 %v3170
      %v3276 = vpop.f32.mrb[0].mxu0
      %v3277 = vadd.f32 0.0, %v3276
      %v3278 = vpop.f32.mrb[0].mxu0
      %v3279 = vadd.f32 0.0, %v3278
      %v3280 = vpop.f32.mrb[0].mxu0
      %v3281 = vadd.f32 0.0, %v3280
      %v3282 = vpop.f32.mrb[0].mxu0
      %v3283 = vadd.f32 0.0, %v3282
      %3284 = vdwg.mxu0
      %v3285 = vmax.f32 %v3207, %v3209
      %3286 = vmax.xlane.f32.xlu0 %v3285
      %v3287 = vpop.xlane.xlu0 %3286
      %v3288 = vmax.f32 %v3211, %v3213
      %3289 = vmax.xlane.f32.xlu0 %v3288
      %v3290 = vpop.xlane.xlu0 %3289
      %v3291 = vmax.f32 %v3217, %v3219
      %3292 = vmax.xlane.f32.xlu0 %v3291
      %v3293 = vpop.xlane.xlu0 %3292
      %v3294 = vmax.f32 %v3221, %v3223
      %3295 = vmax.xlane.f32.xlu0 %v3294
      %v3296 = vpop.xlane.xlu0 %3295
      %v3297 = vmax.f32 %v3227, %v3229
      %3298 = vmax.xlane.f32.xlu0 %v3297
      %v3299 = vpop.xlane.xlu0 %3298
      %v3300 = vmax.f32 %v3231, %v3233
      %3301 = vmax.xlane.f32.xlu0 %v3300
      %v3302 = vpop.xlane.xlu0 %3301
      %v3303 = vmax.f32 %v3237, %v3239
      %3304 = vmax.xlane.f32.xlu0 %v3303
      %v3305 = vpop.xlane.xlu0 %3304
      %v3306 = vmax.f32 %v3241, %v3243
      %3307 = vmax.xlane.f32.xlu0 %v3306
      %v3308 = vpop.xlane.xlu0 %3307
      %v3309 = vmax.f32 %v3247, %v3249
      %3310 = vmax.xlane.f32.xlu0 %v3309
      %v3311 = vpop.xlane.xlu0 %3310
      %v3312 = vmax.f32 %v3251, %v3253
      %3313 = vmax.xlane.f32.xlu0 %v3312
      %v3314 = vpop.xlane.xlu0 %3313
      %v3315 = vmax.f32 %v3257, %v3259
      %3316 = vmax.xlane.f32.xlu0 %v3315
      %v3317 = vpop.xlane.xlu0 %3316
      %v3318 = vmax.f32 %v3261, %v3263
      %3319 = vmax.xlane.f32.xlu0 %v3318
      %v3320 = vpop.xlane.xlu0 %3319
      %v3321 = vmax.f32 %v3267, %v3269
      %3322 = vmax.xlane.f32.xlu0 %v3321
      %v3323 = vpop.xlane.xlu0 %3322
      %v3324 = vmax.f32 %v3271, %v3273
      %3325 = vmax.xlane.f32.xlu0 %v3324
      %v3326 = vpop.xlane.xlu0 %3325
      %v3327 = vmax.f32 %v3277, %v3279
      %3328 = vmax.xlane.f32.xlu0 %v3327
      %v3329 = vpop.xlane.xlu0 %3328
      %v3330 = vmax.f32 %v3281, %v3283
      %3331 = vmax.xlane.f32.xlu0 %v3330
      %v3332 = vpop.xlane.xlu0 %3331
      %v3333 = vsub.f32 %v3207, %v3287
      %v3334 = vsub.f32 %v3209, %v3287
      %v3335 = vsub.f32 %v3211, %v3290
      %v3336 = vsub.f32 %v3213, %v3290
      %v3337 = vsub.f32 %v3217, %v3293
      %v3338 = vsub.f32 %v3219, %v3293
      %v3339 = vsub.f32 %v3221, %v3296
      %v3340 = vsub.f32 %v3223, %v3296
      %v3341 = vsub.f32 %v3227, %v3299
      %v3342 = vsub.f32 %v3229, %v3299
      %v3343 = vsub.f32 %v3231, %v3302
      %v3344 = vsub.f32 %v3233, %v3302
      %v3345 = vsub.f32 %v3237, %v3305
      %v3346 = vsub.f32 %v3239, %v3305
      %v3347 = vsub.f32 %v3241, %v3308
      %v3348 = vsub.f32 %v3243, %v3308
      %v3349 = vsub.f32 %v3247, %v3311
      %v3350 = vsub.f32 %v3249, %v3311
      %v3351 = vsub.f32 %v3251, %v3314
      %v3352 = vsub.f32 %v3253, %v3314
      %v3353 = vsub.f32 %v3257, %v3317
      %v3354 = vsub.f32 %v3259, %v3317
      %v3355 = vsub.f32 %v3261, %v3320
      %v3356 = vsub.f32 %v3263, %v3320
      %v3357 = vsub.f32 %v3267, %v3323
      %v3358 = vsub.f32 %v3269, %v3323
      %v3359 = vsub.f32 %v3271, %v3326
      %v3360 = vsub.f32 %v3273, %v3326
      %v3361 = vsub.f32 %v3277, %v3329
      %v3362 = vsub.f32 %v3279, %v3329
      %v3363 = vsub.f32 %v3281, %v3332
      %v3364 = vsub.f32 %v3283, %v3332
      %v3365 = vmul.f32 %v3333, 1.442695
      %v3366 = vpow.pop %v3365
      %v3367 = vmul.f32 %v3334, 1.442695
      %v3368 = vpow.pop %v3367
      %v3369 = vmul.f32 %v3335, 1.442695
      %v3370 = vpow.pop %v3369
      %v3371 = vmul.f32 %v3336, 1.442695
      %v3372 = vpow.pop %v3371
      %v3373 = vmul.f32 %v3337, 1.442695
      %v3374 = vpow.pop %v3373
      %v3375 = vmul.f32 %v3338, 1.442695
      %v3376 = vpow.pop %v3375
      %v3377 = vmul.f32 %v3339, 1.442695
      %v3378 = vpow.pop %v3377
      %v3379 = vmul.f32 %v3340, 1.442695
      %v3380 = vpow.pop %v3379
      %v3381 = vmul.f32 %v3341, 1.442695
      %v3382 = vpow.pop %v3381
      %v3383 = vmul.f32 %v3342, 1.442695
      %v3384 = vpow.pop %v3383
      %v3385 = vmul.f32 %v3343, 1.442695
      %v3386 = vpow.pop %v3385
      %v3387 = vmul.f32 %v3344, 1.442695
      %v3388 = vpow.pop %v3387
      %v3389 = vmul.f32 %v3345, 1.442695
      %v3390 = vpow.pop %v3389
      %v3391 = vmul.f32 %v3346, 1.442695
      %v3392 = vpow.pop %v3391
      %v3393 = vmul.f32 %v3347, 1.442695
      %v3394 = vpow.pop %v3393
      %v3395 = vmul.f32 %v3348, 1.442695
      %v3396 = vpow.pop %v3395
      %v3397 = vmul.f32 %v3349, 1.442695
      %v3398 = vpow.pop %v3397
      %v3399 = vmul.f32 %v3350, 1.442695
      %v3400 = vpow.pop %v3399
      %v3401 = vmul.f32 %v3351, 1.442695
      %v3402 = vpow.pop %v3401
      %v3403 = vmul.f32 %v3352, 1.442695
      %v3404 = vpow.pop %v3403
      %v3405 = vmul.f32 %v3353, 1.442695
      %v3406 = vpow.pop %v3405
      %v3407 = vmul.f32 %v3354, 1.442695
      %v3408 = vpow.pop %v3407
      %v3409 = vmul.f32 %v3355, 1.442695
      %v3410 = vpow.pop %v3409
      %v3411 = vmul.f32 %v3356, 1.442695
      %v3412 = vpow.pop %v3411
      %v3413 = vmul.f32 %v3357, 1.442695
      %v3414 = vpow.pop %v3413
      %v3415 = vmul.f32 %v3358, 1.442695
      %v3416 = vpow.pop %v3415
      %v3417 = vmul.f32 %v3359, 1.442695
      %v3418 = vpow.pop %v3417
      %v3419 = vmul.f32 %v3360, 1.442695
      %v3420 = vpow.pop %v3419
      %v3421 = vmul.f32 %v3361, 1.442695
      %v3422 = vpow.pop %v3421
      %v3423 = vmul.f32 %v3362, 1.442695
      %v3424 = vpow.pop %v3423
      %v3425 = vmul.f32 %v3363, 1.442695
      %v3426 = vpow.pop %v3425
      %v3427 = vmul.f32 %v3364, 1.442695
      %v3428 = vpow.pop %v3427
      %v3429 = vadd.f32 %v3366, %v3368
      %3430 = vadd.xlane.f32.xlu0 %v3429
      %v3431 = vpop.xlane.xlu0 %3430
      %v3432 = vadd.f32 %v3370, %v3372
      %3433 = vadd.xlane.f32.xlu0 %v3432
      %v3434 = vpop.xlane.xlu0 %3433
      %v3435 = vadd.f32 %v3374, %v3376
      %3436 = vadd.xlane.f32.xlu0 %v3435
      %v3437 = vpop.xlane.xlu0 %3436
      %v3438 = vadd.f32 %v3378, %v3380
      %3439 = vadd.xlane.f32.xlu0 %v3438
      %v3440 = vpop.xlane.xlu0 %3439
      %v3441 = vadd.f32 %v3382, %v3384
      %3442 = vadd.xlane.f32.xlu0 %v3441
      %v3443 = vpop.xlane.xlu0 %3442
      %v3444 = vadd.f32 %v3386, %v3388
      %3445 = vadd.xlane.f32.xlu0 %v3444
      %v3446 = vpop.xlane.xlu0 %3445
      %v3447 = vadd.f32 %v3390, %v3392
      %3448 = vadd.xlane.f32.xlu0 %v3447
      %v3449 = vpop.xlane.xlu0 %3448
      %v3450 = vadd.f32 %v3394, %v3396
      %3451 = vadd.xlane.f32.xlu0 %v3450
      %v3452 = vpop.xlane.xlu0 %3451
      %v3453 = vadd.f32 %v3398, %v3400
      %3454 = vadd.xlane.f32.xlu0 %v3453
      %v3455 = vpop.xlane.xlu0 %3454
      %v3456 = vadd.f32 %v3402, %v3404
      %3457 = vadd.xlane.f32.xlu0 %v3456
      %v3458 = vpop.xlane.xlu0 %3457
      %v3459 = vadd.f32 %v3406, %v3408
      %3460 = vadd.xlane.f32.xlu0 %v3459
      %v3461 = vpop.xlane.xlu0 %3460
      %v3462 = vadd.f32 %v3410, %v3412
      %3463 = vadd.xlane.f32.xlu0 %v3462
      %v3464 = vpop.xlane.xlu0 %3463
      %v3465 = vadd.f32 %v3414, %v3416
      %3466 = vadd.xlane.f32.xlu0 %v3465
      %v3467 = vpop.xlane.xlu0 %3466
      %v3468 = vadd.f32 %v3418, %v3420
      %3469 = vadd.xlane.f32.xlu0 %v3468
      %v3470 = vpop.xlane.xlu0 %3469
      %v3471 = vadd.f32 %v3422, %v3424
      %3472 = vadd.xlane.f32.xlu0 %v3471
      %v3473 = vpop.xlane.xlu0 %3472
      %v3474 = vadd.f32 %v3426, %v3428
      %3475 = vadd.xlane.f32.xlu0 %v3474
      %v3476 = vpop.xlane.xlu0 %3475
      %v3477 = vrcp.pop %v3431
      %v3478 = vrcp.pop %v3434
      %v3479 = vrcp.pop %v3437
      %v3480 = vrcp.pop %v3440
      %v3481 = vrcp.pop %v3443
      %v3482 = vrcp.pop %v3446
      %v3483 = vrcp.pop %v3449
      %v3484 = vrcp.pop %v3452
      %v3485 = vrcp.pop %v3455
      %v3486 = vrcp.pop %v3458
      %v3487 = vrcp.pop %v3461
      %v3488 = vrcp.pop %v3464
      %v3489 = vrcp.pop %v3467
      %v3490 = vrcp.pop %v3470
      %v3491 = vrcp.pop %v3473
      %v3492 = vrcp.pop %v3476
      %v3493 = vmul.f32 %v3366, %v3477
      %v3494 = vmul.f32 %v3368, %v3477
      %v3495 = vmul.f32 %v3370, %v3478
      %v3496 = vmul.f32 %v3372, %v3478
      %v3497 = vmul.f32 %v3374, %v3479
      %v3498 = vmul.f32 %v3376, %v3479
      %v3499 = vmul.f32 %v3378, %v3480
      %v3500 = vmul.f32 %v3380, %v3480
      %v3501 = vmul.f32 %v3382, %v3481
      %v3502 = vmul.f32 %v3384, %v3481
      %v3503 = vmul.f32 %v3386, %v3482
      %v3504 = vmul.f32 %v3388, %v3482
      %v3505 = vmul.f32 %v3390, %v3483
      %v3506 = vmul.f32 %v3392, %v3483
      %v3507 = vmul.f32 %v3394, %v3484
      %v3508 = vmul.f32 %v3396, %v3484
      %v3509 = vmul.f32 %v3398, %v3485
      %v3510 = vmul.f32 %v3400, %v3485
      %v3511 = vmul.f32 %v3402, %v3486
      %v3512 = vmul.f32 %v3404, %v3486
      %v3513 = vmul.f32 %v3406, %v3487
      %v3514 = vmul.f32 %v3408, %v3487
      %v3515 = vmul.f32 %v3410, %v3488
      %v3516 = vmul.f32 %v3412, %v3488
      %v3517 = vmul.f32 %v3414, %v3489
      %v3518 = vmul.f32 %v3416, %v3489
      %v3519 = vmul.f32 %v3418, %v3490
      %v3520 = vmul.f32 %v3420, %v3490
      %v3521 = vmul.f32 %v3422, %v3491
      %v3522 = vmul.f32 %v3424, %v3491
      %v3523 = vmul.f32 %v3426, %v3492
      %v3524 = vmul.f32 %v3428, %v3492
      %v3525 = vpack.c.bf16 %v3495, %v3493
      %v3526 = vpack.c.bf16 %v3496, %v3494
      %v3527 = vpack.c.bf16 %v3499, %v3497
      %v3528 = vpack.c.bf16 %v3500, %v3498
      %v3529 = vpack.c.bf16 %v3503, %v3501
      %v3530 = vpack.c.bf16 %v3504, %v3502
      %v3531 = vpack.c.bf16 %v3507, %v3505
      %v3532 = vpack.c.bf16 %v3508, %v3506
      %v3533 = vpack.c.bf16 %v3511, %v3509
      %v3534 = vpack.c.bf16 %v3512, %v3510
      %v3535 = vpack.c.bf16 %v3515, %v3513
      %v3536 = vpack.c.bf16 %v3516, %v3514
      %v3537 = vpack.c.bf16 %v3519, %v3517
      %v3538 = vpack.c.bf16 %v3520, %v3518
      %v3539 = vpack.c.bf16 %v3523, %v3521
      %v3540 = vpack.c.bf16 %v3524, %v3522
      %3541 = vmatprep.subr.bf16.mxu0 %v3526
      %3542 = vmatpush1.bf16.xpose.msra.mxu0 %v3525
      %3543 = vmatprep.subr.bf16.mxu0 %v3528
      %3544 = vmatpush1.bf16.xpose.msra.mxu0 %v3527
      %3545 = vmatprep.subr.bf16.mxu0 %v3530
      %3546 = vmatpush1.bf16.xpose.msra.mxu0 %v3529
      %3547 = vmatprep.subr.bf16.mxu0 %v3532
      %3548 = vmatpush1.bf16.xpose.msra.mxu0 %v3531
      %3549 = vmatprep.subr.bf16.mxu0 %v3534
      %3550 = vmatpush1.bf16.xpose.msra.mxu0 %v3533
      %3551 = vmatprep.subr.bf16.mxu0 %v3536
      %3552 = vmatpush1.bf16.xpose.msra.mxu0 %v3535
      %3553 = vmatprep.subr.bf16.mxu0 %v3538
      %3554 = vmatpush1.bf16.xpose.msra.mxu0 %v3537
      %3555 = vmatprep.subr.bf16.mxu0 %v3540
      %3556 = vmatpush1.bf16.xpose.msra.mxu0 %v3539
      %3557 = vmatprep.subr.bf16.mxu0 0
      %3558 = vmatpush1.bf16.xpose.msra.mxu0 0
      %3559 = vmatprep.subr.bf16.mxu0 0
      %3560 = vmatpush1.bf16.xpose.msra.mxu0 0
      %3561 = vmatprep.subr.bf16.mxu0 0
      %3562 = vmatpush1.bf16.xpose.msra.mxu0 0
      %3563 = vmatprep.subr.bf16.mxu0 0
      %3564 = vmatpush1.bf16.xpose.msra.mxu0 0
      %3565 = vmatprep.subr.bf16.mxu0 0
      %3566 = vmatpush1.bf16.xpose.msra.mxu0 0
      %3567 = vmatprep.subr.bf16.mxu0 0
      %3568 = vmatpush1.bf16.xpose.msra.mxu0 0
      %3569 = vmatprep.subr.bf16.mxu0 0
      %3570 = vmatpush1.bf16.xpose.msra.mxu0 0
      %3571 = vmatprep.subr.bf16.mxu0 0
      %3572 = vmatpush1.bf16.xpose.msra.mxu0 0
      %3573 = vmatprep.mubr.bf16.mxu0 %v2671
      %3574 = vmatmul.mubr.bf16.gmra.mrb[0].mxu0 %v2670
      %v3575 = vpop.f32.mrb[0].mxu0
      %v3576 = vadd.f32 0.0, %v3575
      %v3577 = vpop.f32.mrb[0].mxu0
      %v3578 = vpop.f32.mrb[0].mxu0
      %v3579 = vadd.f32 0.0, %v3578
      %v3580 = vpop.f32.mrb[0].mxu0
      %3581 = vmatprep.mubr.bf16.mxu0 %v2673
      %3582 = vmatmul.mubr.bf16.gmra.mrb[0].mxu0 %v2672
      %v3583 = vpop.f32.mrb[0].mxu0
      %v3584 = vadd.f32 0.0, %v3583
      %v3585 = vpop.f32.mrb[0].mxu0
      %v3586 = vpop.f32.mrb[0].mxu0
      %v3587 = vadd.f32 0.0, %v3586
      %v3588 = vpop.f32.mrb[0].mxu0
      %3589 = vdwg.mxu0
      %v3590 = vld [vmem:[%s22] sm:$0xf]
      %v3591 = vld [vmem:[%s22 + $0x4] sm:$0xf]
      %v3592 = vld [vmem:[%s22 + $0x8] sm:$0xf]
      %v3593 = vld [vmem:[%s22 + $0xc] sm:$0xf]
      %v3594 = vpack.c.bf16 %v3121, %v3118
      %v3595 = vpack.c.bf16 %v3579, %v3576
      %v3596 = vpack.c.bf16 %v3129, %v3126
      %v3597 = vpack.c.bf16 %v3587, %v3584
      %v3598 = vld [vmem:[%s23] sm:$0xff]
      %v3599 = vld [vmem:[%s23 + $0x8] sm:$0xff]
      %v3600 = vld [vmem:[%s23 + $0x10] sm:$0xff]
      %v3601 = vld [vmem:[%s23 + $0x18] sm:$0xff]
      %3603 = vset.pattern.permute.xlu0 0
      %3604 = vperm.xlu0 %3603, %v3598
      %v3605 = vpop.permute.xlu0 %3604
      %3608 = vset.pattern.permute.xlu0 0
      %3609 = vperm.xlu0 %3608, %v3599
      %v3610 = vpop.permute.xlu0 %3609
      %3613 = vset.pattern.permute.xlu0 0
      %3614 = vperm.xlu0 %3613, %v3600
      %v3615 = vpop.permute.xlu0 %3614
      %3618 = vset.pattern.permute.xlu0 0
      %3619 = vperm.xlu0 %3618, %v3601
      %v3620 = vpop.permute.xlu0 %3619
      %v3626 = vunpack.c.l.b16 %v3590
      %v3627 = vunpack.c.l.b16 %v3591
      %v3628 = vunpack.c.l.b16 %v3592
      %v3629 = vunpack.c.l.b16 %v3593
      %v3630 = vpack.c.b16 %v3627, %v3626
      %v3631 = vpack.c.b16 %v3629, %v3628
      %v3633 = vsel %vm1215, %v3630, 0
      %v3636 = vsel %vm1215, %v3631, 0
      %3638 = vmatprep.subr.bf16.mxu0 %v3595
      %3639 = vmatpush1.bf16.msra.mxu0 %v3594
      %3640 = vmatprep.subr.bf16.mxu0 %v3597
      %3641 = vmatpush1.bf16.msra.mxu0 %v3596
      %3642 = vmatprep.subr.bf16.mxu0 0
      %3643 = vmatpush1.bf16.msra.mxu0 0
      %3644 = vmatprep.subr.bf16.mxu0 0
      %3645 = vmatpush1.bf16.msra.mxu0 0
      %3646 = vmatprep.subr.bf16.mxu0 0
      %3647 = vmatpush1.bf16.msra.mxu0 0
      %3648 = vmatprep.subr.bf16.mxu0 0
      %3649 = vmatpush1.bf16.msra.mxu0 0
      %3650 = vmatprep.subr.bf16.mxu0 0
      %3651 = vmatpush1.bf16.msra.mxu0 0
      %3652 = vmatprep.subr.bf16.mxu0 0
      %3653 = vmatpush1.bf16.msra.mxu0 0
      %3654 = vmatprep.subr.bf16.mxu0 0
      %3655 = vmatpush1.bf16.msra.mxu0 0
      %3656 = vmatprep.subr.bf16.mxu0 0
      %3657 = vmatpush1.bf16.msra.mxu0 0
      %3658 = vmatprep.subr.bf16.mxu0 0
      %3659 = vmatpush1.bf16.msra.mxu0 0
      %3660 = vmatprep.subr.bf16.mxu0 0
      %3661 = vmatpush1.bf16.msra.mxu0 0
      %3662 = vmatprep.subr.bf16.mxu0 0
      %3663 = vmatpush1.bf16.msra.mxu0 0
      %3664 = vmatprep.subr.bf16.mxu0 0
      %3665 = vmatpush1.bf16.msra.mxu0 0
      %3666 = vmatprep.subr.bf16.mxu0 0
      %3667 = vmatpush1.bf16.msra.mxu0 0
      %3668 = vmatprep.subr.bf16.mxu0 0
      %3669 = vmatpush1.bf16.msra.mxu0 0
      %3670 = vmatprep.mubr.bf16.mxu0 0
      %3671 = vmatmul.mubr.bf16.gmra.mrb[0].mxu0 %v3633
      %v3672 = vpop.f32.mrb[0].mxu0
      %v3673 = vadd.f32 %v3605, %v3672
      %v3674 = vpop.f32.mrb[0].mxu0
      %v3675 = vadd.f32 %v3605, %v3674
      %v3676 = vpop.f32.mrb[0].mxu0
      %v3677 = vadd.f32 %v3610, %v3676
      %v3678 = vpop.f32.mrb[0].mxu0
      %v3679 = vadd.f32 %v3610, %v3678
      %3680 = vmatprep.mubr.bf16.mxu0 0
      %3681 = vmatmul.mubr.bf16.gmra.mrb[0].mxu0 %v3636
      %v3682 = vpop.f32.mrb[0].mxu0
      %v3683 = vadd.f32 %v3615, %v3682
      %v3684 = vpop.f32.mrb[0].mxu0
      %v3685 = vadd.f32 %v3615, %v3684
      %v3686 = vpop.f32.mrb[0].mxu0
      %v3687 = vadd.f32 %v3620, %v3686
      %v3688 = vpop.f32.mrb[0].mxu0
      %v3689 = vadd.f32 %v3620, %v3688
      %3690 = vdwg.mxu0
      %v3691 = vadd.f32 %v2082, %v3673
      %v3692 = vadd.f32 %v2083, %v3675
      %v3693 = vadd.f32 %v2084, %v3677
      %v3694 = vadd.f32 %v2085, %v3679
      %v3695 = vadd.f32 %v2086, %v3683
      %v3696 = vadd.f32 %v2087, %v3685
      %v3697 = vadd.f32 %v2088, %v3687
      %v3698 = vadd.f32 %v2089, %v3689
      %3699 = vrot.lane.b32.xlu0 %v3691, 127
      %v3700 = vpop.permute.xlu0 %3699
      %3701 = vrot.lane.b32.xlu0 %v3693, 127
      %v3702 = vpop.permute.xlu0 %3701
      %3703 = vrot.lane.b32.xlu0 %v3695, 127
      %v3704 = vpop.permute.xlu0 %3703
      %3705 = vrot.lane.b32.xlu0 %v3697, 127
      %v3706 = vpop.permute.xlu0 %3705
      %3707 = vrot.lane.b32.xlu0 %v3692, 127
      %v3708 = vpop.permute.xlu0 %3707
      %3709 = vrot.lane.b32.xlu0 %v3694, 127
      %v3710 = vpop.permute.xlu0 %3709
      %3711 = vrot.lane.b32.xlu0 %v3696, 127
      %v3712 = vpop.permute.xlu0 %3711
      %3713 = vrot.lane.b32.xlu0 %v3698, 127
      %v3714 = vpop.permute.xlu0 %3713
      %v3715 = vsel %vm972, %v3700, %v3708
      %v3716 = vsel %vm972, %v3702, %v3710
      %v3717 = vsel %vm972, %v3704, %v3712
      %v3718 = vsel %vm972, %v3706, %v3714
      %v3719 = vsel %vm972, %v3708, %v3700
      %v3720 = vsel %vm972, %v3710, %v3702
      %v3721 = vsel %vm972, %v3712, %v3704
      %v3722 = vsel %vm972, %v3714, %v3706
      %v3723 = vmax.f32 %v3691, %v3715
      %v3724 = vmax.f32 %v3692, %v3719
      %v3725 = vmax.f32 %v3693, %v3716
      %v3726 = vmax.f32 %v3694, %v3720
      %v3727 = vmax.f32 %v3695, %v3717
      %v3728 = vmax.f32 %v3696, %v3721
      %v3729 = vmax.f32 %v3697, %v3718
      %v3730 = vmax.f32 %v3698, %v3722
      %3731 = vrot.lane.b32.xlu0 %v3723, 112
      %v3732 = vpop.permute.xlu0 %3731
      %3733 = vrot.lane.b32.xlu0 %v3725, 112
      %v3734 = vpop.permute.xlu0 %3733
      %3735 = vrot.lane.b32.xlu0 %v3727, 112
      %v3736 = vpop.permute.xlu0 %3735
      %3737 = vrot.lane.b32.xlu0 %v3729, 112
      %v3738 = vpop.permute.xlu0 %3737
      %3739 = vrot.lane.b32.xlu0 %v3724, 112
      %v3740 = vpop.permute.xlu0 %3739
      %3741 = vrot.lane.b32.xlu0 %v3726, 112
      %v3742 = vpop.permute.xlu0 %3741
      %3743 = vrot.lane.b32.xlu0 %v3728, 112
      %v3744 = vpop.permute.xlu0 %3743
      %3745 = vrot.lane.b32.xlu0 %v3730, 112
      %v3746 = vpop.permute.xlu0 %3745
      %v3747 = vsel %vm1026, %v3732, %v3740
      %v3748 = vsel %vm1026, %v3734, %v3742
      %v3749 = vsel %vm1026, %v3736, %v3744
      %v3750 = vsel %vm1026, %v3738, %v3746
      %v3751 = vsel %vm1026, %v3740, %v3732
      %v3752 = vsel %vm1026, %v3742, %v3734
      %v3753 = vsel %vm1026, %v3744, %v3736
      %v3754 = vsel %vm1026, %v3746, %v3738
      %v3755 = vmax.f32 %v3723, %v3747
      %v3756 = vmax.f32 %v3724, %v3751
      %v3757 = vmax.f32 %v3725, %v3748
      %v3758 = vmax.f32 %v3726, %v3752
      %v3759 = vmax.f32 %v3727, %v3749
      %v3760 = vmax.f32 %v3728, %v3753
      %v3761 = vmax.f32 %v3729, %v3750
      %v3762 = vmax.f32 %v3730, %v3754
      %v3763 = vld [vmem:[%s3] sm:$0xff]
      %v3764 = vld [vmem:[%s3 + $0x8] sm:$0xff]
      %v3765 = vld [vmem:[%s3 + $0x10] sm:$0xff]
      %v3766 = vld [vmem:[%s3 + $0x18] sm:$0xff]
      %v3767 = vld [vmem:[%s3 + $0x20] sm:$0xff]
      %v3768 = vld [vmem:[%s3 + $0x28] sm:$0xff]
      %v3769 = vld [vmem:[%s3 + $0x30] sm:$0xff]
      %v3770 = vld [vmem:[%s3 + $0x38] sm:$0xff]
      %v3771 = vld [vmem:[%s3 + $0x40] sm:$0xff]
      %v3772 = vld [vmem:[%s3 + $0x48] sm:$0xff]
      %v3773 = vld [vmem:[%s3 + $0x50] sm:$0xff]
      %v3774 = vld [vmem:[%s3 + $0x58] sm:$0xff]
      %v3775 = vld [vmem:[%s3 + $0x60] sm:$0xff]
      %v3776 = vld [vmem:[%s3 + $0x68] sm:$0xff]
      %v3777 = vld [vmem:[%s3 + $0x70] sm:$0xff]
      %v3778 = vld [vmem:[%s3 + $0x78] sm:$0xff]
      %v3779 = vld [vmem:[%s3 + $0x80] sm:$0xff]
      %v3780 = vld [vmem:[%s3 + $0x88] sm:$0xff]
      %v3781 = vld [vmem:[%s3 + $0x90] sm:$0xff]
      %v3782 = vld [vmem:[%s3 + $0x98] sm:$0xff]
      %v3783 = vld [vmem:[%s3 + $0xa0] sm:$0xff]
      %v3784 = vld [vmem:[%s3 + $0xa8] sm:$0xff]
      %v3785 = vld [vmem:[%s3 + $0xb0] sm:$0xff]
      %v3786 = vld [vmem:[%s3 + $0xb8] sm:$0xff]
      %v3787 = vld [vmem:[%s3 + $0xc0] sm:$0xff]
      %v3788 = vld [vmem:[%s3 + $0xc8] sm:$0xff]
      %v3789 = vld [vmem:[%s3 + $0xd0] sm:$0xff]
      %v3790 = vld [vmem:[%s3 + $0xd8] sm:$0xff]
      %v3791 = vld [vmem:[%s3 + $0xe0] sm:$0xff]
      %v3792 = vld [vmem:[%s3 + $0xe8] sm:$0xff]
      %v3793 = vld [vmem:[%s3 + $0xf0] sm:$0xff]
      %v3794 = vld [vmem:[%s3 + $0xf8] sm:$0xff]
      %3795 = vmatprep.subr.mxu0 0.0
      %3796 = vmatpush1.msra.mxu0 %v3763
      %3797 = vmatprep.subr.mxu0 0.0
      %3798 = vmatpush1.msra.mxu0 %v3764
      %3799 = vmatprep.subr.mxu0 0.0
      %3800 = vmatpush1.msra.mxu0 %v3765
      %3801 = vmatprep.subr.mxu0 0.0
      %3802 = vmatpush1.msra.mxu0 %v3766
      %3803 = vmatprep.subr.mxu0 0.0
      %3804 = vmatpush1.msra.mxu0 %v3767
      %3805 = vmatprep.subr.mxu0 0.0
      %3806 = vmatpush1.msra.mxu0 %v3768
      %3807 = vmatprep.subr.mxu0 0.0
      %3808 = vmatpush1.msra.mxu0 %v3769
      %3809 = vmatprep.subr.mxu0 0.0
      %3810 = vmatpush1.msra.mxu0 %v3770
      %3811 = vmatprep.subr.mxu0 0.0
      %3812 = vmatpush1.msra.mxu0 %v3771
      %3813 = vmatprep.subr.mxu0 0.0
      %3814 = vmatpush1.msra.mxu0 %v3772
      %3815 = vmatprep.subr.mxu0 0.0
      %3816 = vmatpush1.msra.mxu0 %v3773
      %3817 = vmatprep.subr.mxu0 0.0
      %3818 = vmatpush1.msra.mxu0 %v3774
      %3819 = vmatprep.subr.mxu0 0.0
      %3820 = vmatpush1.msra.mxu0 %v3775
      %3821 = vmatprep.subr.mxu0 0.0
      %3822 = vmatpush1.msra.mxu0 %v3776
      %3823 = vmatprep.subr.mxu0 0.0
      %3824 = vmatpush1.msra.mxu0 %v3777
      %3825 = vmatprep.subr.mxu0 0.0
      %3826 = vmatpush1.msra.mxu0 %v3778
      %3827 = vmatprep.subr.mxu0 0.0
      %3828 = vmatpush1.msra.mxu0 %v3779
      %3829 = vmatprep.subr.mxu0 0.0
      %3830 = vmatpush1.msra.mxu0 %v3780
      %3831 = vmatprep.subr.mxu0 0.0
      %3832 = vmatpush1.msra.mxu0 %v3781
      %3833 = vmatprep.subr.mxu0 0.0
      %3834 = vmatpush1.msra.mxu0 %v3782
      %3835 = vmatprep.subr.mxu0 0.0
      %3836 = vmatpush1.msra.mxu0 %v3783
      %3837 = vmatprep.subr.mxu0 0.0
      %3838 = vmatpush1.msra.mxu0 %v3784
      %3839 = vmatprep.subr.mxu0 0.0
      %3840 = vmatpush1.msra.mxu0 %v3785
      %3841 = vmatprep.subr.mxu0 0.0
      %3842 = vmatpush1.msra.mxu0 %v3786
      %3843 = vmatprep.subr.mxu0 0.0
      %3844 = vmatpush1.msra.mxu0 %v3787
      %3845 = vmatprep.subr.mxu0 0.0
      %3846 = vmatpush1.msra.mxu0 %v3788
      %3847 = vmatprep.subr.mxu0 0.0
      %3848 = vmatpush1.msra.mxu0 %v3789
      %3849 = vmatprep.subr.mxu0 0.0
      %3850 = vmatpush1.msra.mxu0 %v3790
      %3851 = vmatprep.subr.mxu0 0.0
      %3852 = vmatpush1.msra.mxu0 %v3791
      %3853 = vmatprep.subr.mxu0 0.0
      %3854 = vmatpush1.msra.mxu0 %v3792
      %3855 = vmatprep.subr.mxu0 0.0
      %3856 = vmatpush1.msra.mxu0 %v3793
      %3857 = vmatprep.subr.mxu0 0.0
      %3858 = vmatpush1.msra.mxu0 %v3794
      %3859 = vmatprep.mubr.f32.mxu0 %v3756
      %3860 = vmatmul.mubr.f32.gmra.mrb[0].mxu0 %v3755
      %v3861 = vpop.f32.mrb[0].mxu0
      %v3862 = vadd.f32 0.0, %v3861
      %v3863 = vpop.f32.mrb[0].mxu0
      %3864 = vmatprep.mubr.f32.mxu0 %v3758
      %3865 = vmatmul.mubr.f32.gmra.mrb[0].mxu0 %v3757
      %v3866 = vpop.f32.mrb[0].mxu0
      %v3867 = vadd.f32 0.0, %v3866
      %v3868 = vpop.f32.mrb[0].mxu0
      %3869 = vmatprep.mubr.f32.mxu0 %v3760
      %3870 = vmatmul.mubr.f32.gmra.mrb[0].mxu0 %v3759
      %v3871 = vpop.f32.mrb[0].mxu0
      %v3872 = vadd.f32 0.0, %v3871
      %v3873 = vpop.f32.mrb[0].mxu0
      %3874 = vmatprep.mubr.f32.mxu0 %v3762
      %3875 = vmatmul.mubr.f32.gmra.mrb[0].mxu0 %v3761
      %v3876 = vpop.f32.mrb[0].mxu0
      %v3877 = vadd.f32 0.0, %v3876
      %v3878 = vpop.f32.mrb[0].mxu0
      %3879 = vdwg.mxu0
      %vm3880 = vcmask 523264
      %3881 = vst.msk [vmem:[%s737] sm:$0xff] %vm3880, %v3862
      %3882 = vst.msk [vmem:[%s737 + $0x8] sm:$0xff] %vm3880, %v3867
      %3883 = vst.msk [vmem:[%s737 + $0x10] sm:$0xff] %vm3880, %v3872
      %3884 = vst.msk [vmem:[%s737 + $0x18] sm:$0xff] %vm3880, %v3877
      %p3885 = scmp.lt.s32.totalorder %s35, 1
      %s3886 = scalar_select %p3885, %s35, 1
      %s3887 = smul.addr %s3886, 4
      %s3888 = smul.addr %s3887, 8
      %s3889 = scalar_lea.vmem %s24, %s3888
      // Predicated region
      $region117: #{res_attn_down_block2d_pallas.1} parent=115 // pred_check
        %p3890 = pneg %p562
      $region118: #{res_attn_down_block2d_pallas.1} parent=115 // pred_check_branch
        %3892 = sbr.rel (%p3890) target = $region120
      $region119: #{res_attn_down_block2d_pallas.1} parent=115 // pred_region
        _
      $region120: #{res_attn_down_block2d_pallas.1} parent=115 // pred_fallthru
        _
    $region116: #{res_attn_down_block2d_pallas.1} parent=5 // pred_fallthru
      _
    %p3893 = scmp.le.s32.totalorder 2, %s30
    // Predicated region
    $region121: #{res_attn_down_block2d_pallas.1} parent=5 // pred_check
      %p3894 = pneg %p3893
    $region122: #{res_attn_down_block2d_pallas.1} parent=5 // pred_check_branch
      %3896 = sbr.rel (%p3894) target = $region124
    $region123: #{res_attn_down_block2d_pallas.1} parent=5 // pred_region
      %s3897 = ssub.s32 %s30, 2
      // Predicated region
      $region125: #{res_attn_down_block2d_pallas.1} parent=123 // pred_check
        %p3898 = pneg %p568
      $region126: #{res_attn_down_block2d_pallas.1} parent=123 // pred_check_branch
        %3900 = sbr.rel (%p3898) target = $region128
      $region127: #{res_attn_down_block2d_pallas.1} parent=123 // pred_region
        %p3901 = scmp.lt.s32.totalorder %s36, 1
        %s3902 = scalar_select %p3901, %s36, 1
        %s3903 = smul.addr %s3902, 4
        %s3904 = smul.addr %s3903, 8
        %s3905 = scalar_lea.vmem %s24, %s3904
      $region128: #{res_attn_down_block2d_pallas.1} parent=123 // pred_fallthru
        _
    $region124: #{res_attn_down_block2d_pallas.1} parent=5 // pred_fallthru
      _
  $region6: #{res_attn_down_block2d_pallas.1} parent=0 // loop_footer
    %s34 = sadd.s32 1, %s30
  $region7: #{res_attn_down_block2d_pallas.1} parent=0 // loop_footer_branch
    %29 = sbr.rel target = $region3
  $region8: #{res_attn_down_block2d_pallas.1} parent=0 // loop_exit
    _

</llo_original>
